<compile_context>
chip_gen: v7x
topology: tpu7x:2x2x1
jax: 0.10.0
libtpu: 0.0.40
codegen_flags: <defaults>
</compile_context>

<pallas_src>
import functools

import jax
import jax.numpy as jnp
import numpy as np
from jax import lax
from jax.experimental import pallas as pl
from jax.experimental.pallas import tpu as pltpu


def _activate(acc, activation):
    if activation == "relu":
        return jnp.maximum(acc, 0.0)
    if activation == "lrelu":
        return jnp.where(acc >= 0.0, acc, 0.2 * acc)
    if activation == "tanh":
        return jnp.tanh(acc)
    if activation == "none":
        return acc
    # TODO(synk): prelu/selu activations and the norm variants of Conv2dBlock
    # (bn/in/ln/group/adain/sn incl. SpectralNorm power iteration) are not
    # implemented here (module defaults use norm='none', activation='relu').
    raise ValueError(f"unsupported activation: {activation}")


def _conv2d_block_kernel(x_ref, w_ref, b_ref, o_ref, col_ref, *extra,
                         KH, KW, Wp, W_ker, stride, tile_rows, cin_pad, win,
                         whole_image, activation):
    """One (batch, row-tile) grid step.

    x_ref:   whole_image: (1, cin_pad, L_pad) VMEM block (auto-pipelined)
             else:        (N, cin_pad, L_pad) HBM ref (memory_space=ANY)
    w_ref:   (Cout, K_pad)   im2col-flattened weight (zero cols for pad chans)
    b_ref:   (Cout, 1)       f32 bias column
    o_ref:   (1, 1, Cout, P) P = tile_rows * W_ker (lane-dense output block)
    col_ref: (K_pad, P)      VMEM scratch holding the im2col operand
    extra:   () or (x_buf (cin_pad, win) VMEM, DMA semaphore)
    """
    if whole_image:
        # n_tiles == 1: the whole (padded) image is the auto-pipelined block.
        def read_tap(lane_off):
            return x_ref[0, :, pl.ds(lane_off, W_ker)]
    else:
        x_buf, sem = extra
        n = pl.program_id(0)
        t = pl.program_id(1)
        base = t * (tile_rows * stride * Wp)
        cp = pltpu.make_async_copy(x_ref.at[n, :, pl.ds(base, win)], x_buf, sem)
        cp.start()
        cp.wait()
        # TODO(synk): double-buffer this window DMA across row tiles to hide
        # its latency (needs care with megacore grid splitting).

        def read_tap(lane_off):
            return x_buf[:, pl.ds(lane_off, W_ker)]

    # im2col gather: all slice starts are static Python ints; destination
    # sublane starts are multiples of cin_pad (8/16-aligned full-tile stores).
    # Rows are decimated here for stride > 1 (read row r*stride + kh).
    for r in range(tile_rows):
        for kh in range(KH):
            row_off = (r * stride + kh) * Wp
            for kw in range(KW):
                tap = kh * KW + kw
                col_ref[pl.ds(tap * cin_pad, cin_pad),
                        pl.ds(r * W_ker, W_ker)] = read_tap(row_off + kw)

    # Single (Cout, K) @ (K, P) MXU contraction, f32 accumulation.
    acc = jnp.dot(w_ref[...], col_ref[...], preferred_element_type=jnp.float32)
    acc = acc + b_ref[...]                 # f32 bias, broadcast over lanes
    acc = _activate(acc, activation)

    o_ref[...] = acc[None, None].astype(o_ref.dtype)


def conv2d_block(x_nchw, weight, bias, *, stride=1, padding=0,
                 activation="relu", compute_dtype=jnp.bfloat16,
                 row_tile_target_lanes=1024,
                 vmem_budget_bytes=24 * 1024 * 1024):
    """Forward of Conv2dBlock(norm='none', pad_type='zero', convGroup=1).

    x_nchw: (N, Cin, H, W)   weight: (Cout, Cin, KH, KW)   bias: (Cout,)
    compute_dtype: dtype of the MXU operands (default bfloat16 -- bf16-native
        MXU on v5e/v6e/v7x, halves HBM / col-scratch bytes); accumulation,
        bias and activation stay float32.  Pass jnp.float32 for full precision.
    returns (N, Cout, Ho, Wo) in the input dtype.
    """
    N, Cin, H, W = x_nchw.shape
    Cout, Cin_w, KH, KW = weight.shape
    assert Cin_w == Cin, "only convGroup=1 supported"  # TODO(synk): grouped conv
    out_dtype = x_nchw.dtype
    cdt = jnp.dtype(out_dtype if compute_dtype is None else compute_dtype)
    cdt_size = cdt.itemsize
    out_size = jnp.dtype(out_dtype).itemsize

    Hp, Wp = H + 2 * padding, W + 2 * padding
    assert Hp >= KH and Wp >= KW
    Ho = (Hp - KH) // stride + 1
    Wo = (Wp - KW) // stride + 1

    # Per-tap channel padding -> sublane-aligned im2col stores.
    sub = max(8, 32 // cdt_size)           # 8 for f32, 16 for bf16
    cin_pad = -(-Cin // sub) * sub
    K_pad = KH * KW * cin_pad

    # Columns computed per output row: exactly Wo for stride 1, the dense
    # column grid for stride > 1 (decimated by a cheap wrapper slice).
    W_ker = Wo if stride == 1 else (Wp - KW + 1)

    # ---- cdiv row tiling targeting large, lane-dense tiles ----
    tile_rows = max(1, min(Ho, row_tile_target_lanes // max(1, W_ker)))
    tile_rows = min(tile_rows, max(1, 1024 // (KH * KW)))  # bound static unroll

    def _step_bytes(tr):
        p = tr * W_ker
        win_ = ((tr - 1) * stride + KH) * Wp
        b = K_pad * p * cdt_size                 # im2col scratch
        b += 2 * cin_pad * win_ * cdt_size       # input window / block
        b += 2 * Cout * K_pad * cdt_size         # weight (double-buffered)
        b += 2 * Cout * p * out_size             # output block (double-buffered)
        b += 2 * Cout * 4                        # bias
        return b

    while tile_rows > 1 and _step_bytes(tile_rows) > vmem_budget_bytes:
        tile_rows = max(1, tile_rows // 2)

    n_tiles = -(-Ho // tile_rows)                # cdiv: padded last row tile
    Ho_pad = n_tiles * tile_rows
    P = tile_rows * W_ker                        # output lanes per grid step
    win = ((tile_rows - 1) * stride + KH) * Wp   # input lanes per grid step
    whole_image = (n_tiles == 1)

    # ---- input prep: one fused cast+pad pass (spatial zero-pad, channel pad
    #      to cin_pad, row-tail pad), spatial flattened onto lanes.  No
    #      per-tile duplication in HBM. ----
    L = Hp * Wp
    L_needed = (n_tiles - 1) * tile_rows * stride * Wp + win
    L_pad = max(L, L_needed)
    x = x_nchw.astype(cdt)
    x = jnp.pad(x, ((0, 0), (0, cin_pad - Cin),
                    (padding, padding), (padding, padding)))
    x = x.reshape(N, cin_pad, L)
    if L_pad > L:
        x = jnp.pad(x, ((0, 0), (0, 0), (0, L_pad - L)))

    # im2col-flattened weight (Cout, K_pad) with zero columns for the padded
    # channels, and an f32 bias column.
    w_pad = jnp.pad(weight, ((0, 0), (0, cin_pad - Cin), (0, 0), (0, 0)))
    w_flat = jnp.transpose(w_pad, (0, 2, 3, 1)).reshape(Cout, K_pad).astype(cdt)
    b_col = bias.reshape(Cout, 1).astype(jnp.float32)

    kernel = functools.partial(
        _conv2d_block_kernel, KH=KH, KW=KW, Wp=Wp, W_ker=W_ker, stride=stride,
        tile_rows=tile_rows, cin_pad=cin_pad, win=win,
        whole_image=whole_image, activation=activation)

    if whole_image:
        # Constant-in-t index map: the image block is fetched once per batch.
        x_spec = pl.BlockSpec((1, cin_pad, L_pad), lambda n, t: (n, 0, 0))
        scratch = [pltpu.VMEM((K_pad, P), cdt)]
    else:
        # Input stays in HBM; each step DMAs only its overlapping window.
        x_spec = pl.BlockSpec(memory_space=pl.ANY)
        scratch = [pltpu.VMEM((K_pad, P), cdt),
                   pltpu.VMEM((cin_pad, win), cdt),
                   pltpu.SemaphoreType.DMA(())]

    vmem_limit = int(min(48 * 1024 * 1024,
                         max(32 * 1024 * 1024,
                             _step_bytes(tile_rows) + 16 * 1024 * 1024)))

    out_tiles = pl.pallas_call(
        kernel,
        out_shape=jax.ShapeDtypeStruct((N, n_tiles, Cout, P), out_dtype),
        grid=(N, n_tiles),
        in_specs=[
            x_spec,
            pl.BlockSpec((Cout, K_pad), lambda n, t: (0, 0)),
            pl.BlockSpec((Cout, 1), lambda n, t: (0, 0)),
        ],
        out_specs=pl.BlockSpec((1, 1, Cout, P), lambda n, t: (n, t, 0, 0)),
        scratch_shapes=scratch,
        compiler_params=pltpu.CompilerParams(
            dimension_semantics=("parallel", "parallel"),
            vmem_limit_bytes=vmem_limit),
    )(x, w_flat, b_col)

    # (N, n_tiles, Cout, P) -> (N, Cout, Ho_pad, W_ker).  For n_tiles == 1 the
    # transpose is degenerate and this is a pure metadata reshape (no HBM
    # pass); for multi-tile images XLA emits one transpose pass.
    out = jnp.transpose(out_tiles, (0, 2, 1, 3)).reshape(N, Cout, Ho_pad, W_ker)
    # Crop padded rows; decimate/crop columns for stride > 1 (no-op otherwise).
    out = out[:, :, :Ho, :(Wo - 1) * stride + 1:stride]
    return out


def _reference(x_nchw, weight, bias, *, stride, padding, activation):
    out = lax.conv_general_dilated(
        x_nchw, weight,
        window_strides=(stride, stride),
        padding=((padding, padding), (padding, padding)),
        dimension_numbers=("NCHW", "OIHW", "NCHW"),
        precision=lax.Precision.HIGHEST)
    out = out + bias.reshape(1, -1, 1, 1)
    if activation == "relu":
        out = jnp.maximum(out, 0.0)
    elif activation == "lrelu":
        out = jnp.where(out >= 0.0, out, 0.2 * out)
    elif activation == "tanh":
        out = jnp.tanh(out)
    return out


if __name__ == "__main__":
    # Conv2dBlock(input_dim=4, output_dim=8, kernel_size=3, stride=1,
    #             padding=1, norm='none', activation='relu', pad_type='zero')
    N, Cin, H, W = 2, 4, 16, 16
    Cout, KH, KW = 8, 3, 3

    key = jax.random.PRNGKey(0)
    kx, kwt, kb = jax.random.split(key, 3)
    x = jax.random.normal(kx, (N, Cin, H, W), jnp.float32)
    fan_in = Cin * KH * KW
    bound = 1.0 / np.sqrt(fan_in)
    weight = jax.random.uniform(kwt, (Cout, Cin, KH, KW), jnp.float32,
                                minval=-bound, maxval=bound)
    bias = jax.random.uniform(kb, (Cout,), jnp.float32,
                              minval=-bound, maxval=bound)

    # 1) Module defaults: stride=1, padding=1, relu; default bf16 MXU operands
    #    (f32 accumulation/epilogue) -> loose tolerance.
    out = jax.block_until_ready(
        conv2d_block(x, weight, bias, stride=1, padding=1, activation="relu"))
    ref = jax.block_until_ready(
        _reference(x, weight, bias, stride=1, padding=1, activation="relu"))
    assert out.shape == (N, Cout, H, W), out.shape
    np.testing.assert_allclose(np.asarray(out), np.asarray(ref),
                               rtol=6e-2, atol=6e-2)

    # 2) f32 operands (tolerance allows for MXU matmul precision).
    out_f32 = jax.block_until_ready(
        conv2d_block(x, weight, bias, stride=1, padding=1, activation="relu",
                     compute_dtype=jnp.float32))
    np.testing.assert_allclose(np.asarray(out_f32), np.asarray(ref),
                               rtol=1e-2, atol=1e-2)

    # 3) stride=2 path (rows decimated in-kernel, columns by wrapper slice).
    out_s2 = jax.block_until_ready(
        conv2d_block(x, weight, bias, stride=2, padding=1, activation="lrelu",
                     compute_dtype=jnp.float32))
    ref_s2 = jax.block_until_ready(
        _reference(x, weight, bias, stride=2, padding=1, activation="lrelu"))
    assert out_s2.shape == ref_s2.shape, (out_s2.shape, ref_s2.shape)
    np.testing.assert_allclose(np.asarray(out_s2), np.asarray(ref_s2),
                               rtol=1e-2, atol=1e-2)

    # 4) Multi-row-tile path (windowed manual DMA from HBM): taller image with
    #    a small forced tile target so n_tiles > 1.
    H2 = 32
    x2 = jax.random.normal(kx, (N, Cin, H2, W), jnp.float32)
    out_mt = jax.block_until_ready(
        conv2d_block(x2, weight, bias, stride=1, padding=1, activation="relu",
                     compute_dtype=jnp.float32, row_tile_target_lanes=128))
    ref_mt = jax.block_until_ready(
        _reference(x2, weight, bias, stride=1, padding=1, activation="relu"))
    assert out_mt.shape == ref_mt.shape, (out_mt.shape, ref_mt.shape)
    np.testing.assert_allclose(np.asarray(out_mt), np.asarray(ref_mt),
                               rtol=1e-2, atol=1e-2)

    print("KERNEL_OK")
</pallas_src>

<mosaic_0001>
module attributes {stable_mosaic.version = 11 : i64} {
  func.func @_conv2d_block_kernel(%arg0: i32, %arg1: i32, %arg2: memref<1x16x324xbf16, #tpu.memory_space<vmem>>, %arg3: memref<8x144xbf16, #tpu.memory_space<vmem>>, %arg4: memref<8x1xf32, #tpu.memory_space<vmem>>, %arg5: memref<1x1x8x256xf32, #tpu.memory_space<vmem>>, %arg6: memref<144x256xbf16, #tpu.memory_space<vmem>>) attributes {dimension_semantics = [#tpu.dimension_semantics<parallel>, #tpu.dimension_semantics<parallel>], iteration_bounds = array<i64: 2, 1>, scalar_prefetch = 0 : i64, scratch_operands = 1 : i64, tpu.core_type = #tpu.core_type<tc>, window_params = [{transform_indices = @transform_0, window_bounds = array<i64: 1, 16, 324>}, {pipeline_mode = #tpu.pipeline_mode<synchronous>, transform_indices = @transform_1, window_bounds = array<i64: 8, 144>}, {pipeline_mode = #tpu.pipeline_mode<synchronous>, transform_indices = @transform_2, window_bounds = array<i64: 8, 1>}, {transform_indices = @transform_3, window_bounds = array<i64: 1, 1, 8, 256>}]} {
    %c0 = arith.constant 0 : index
    %c0_0 = arith.constant 0 : index
    %c0_1 = arith.constant 0 : index
    %0 = vector.load %arg2[%c0, %c0_0, %c0_1] : memref<1x16x324xbf16, #tpu.memory_space<vmem>>, vector<1x16x16xbf16>
    %1 = vector.shape_cast %0 : vector<1x16x16xbf16> to vector<16x16xbf16>
    %c0_2 = arith.constant 0 : index
    %c0_3 = arith.constant 0 : index
    %2 = vector.load %arg6[%c0_2, %c0_3] : memref<144x256xbf16, #tpu.memory_space<vmem>>, vector<16x16xbf16>
    tpu.vector_store %arg6[%c0_2, %c0_3], %1 {strides = array<i32>} : memref<144x256xbf16, #tpu.memory_space<vmem>>, vector<16x16xbf16>,
    %c0_4 = arith.constant 0 : index
    %c0_5 = arith.constant 0 : index
    %c1 = arith.constant 1 : index
    %3 = vector.load %arg2[%c0_4, %c0_5, %c1] : memref<1x16x324xbf16, #tpu.memory_space<vmem>>, vector<1x16x16xbf16>
    %4 = vector.shape_cast %3 : vector<1x16x16xbf16> to vector<16x16xbf16>
    %c16 = arith.constant 16 : index
    %c0_6 = arith.constant 0 : index
    %5 = vector.load %arg6[%c16, %c0_6] : memref<144x256xbf16, #tpu.memory_space<vmem>>, vector<16x16xbf16>
    tpu.vector_store %arg6[%c16, %c0_6], %4 {strides = array<i32>} : memref<144x256xbf16, #tpu.memory_space<vmem>>, vector<16x16xbf16>,
    %c0_7 = arith.constant 0 : index
    %c0_8 = arith.constant 0 : index
    %c2 = arith.constant 2 : index
    %6 = vector.load %arg2[%c0_7, %c0_8, %c2] : memref<1x16x324xbf16, #tpu.memory_space<vmem>>, vector<1x16x16xbf16>
    %7 = vector.shape_cast %6 : vector<1x16x16xbf16> to vector<16x16xbf16>
    %c32 = arith.constant 32 : index
    %c0_9 = arith.constant 0 : index
    %8 = vector.load %arg6[%c32, %c0_9] : memref<144x256xbf16, #tpu.memory_space<vmem>>, vector<16x16xbf16>
    tpu.vector_store %arg6[%c32, %c0_9], %7 {strides = array<i32>} : memref<144x256xbf16, #tpu.memory_space<vmem>>, vector<16x16xbf16>,
    %c0_10 = arith.constant 0 : index
    %c0_11 = arith.constant 0 : index
    %c18 = arith.constant 18 : index
    %9 = vector.load %arg2[%c0_10, %c0_11, %c18] : memref<1x16x324xbf16, #tpu.memory_space<vmem>>, vector<1x16x16xbf16>
    %10 = vector.shape_cast %9 : vector<1x16x16xbf16> to vector<16x16xbf16>
    %c48 = arith.constant 48 : index
    %c0_12 = arith.constant 0 : index
    %11 = vector.load %arg6[%c48, %c0_12] : memref<144x256xbf16, #tpu.memory_space<vmem>>, vector<16x16xbf16>
    tpu.vector_store %arg6[%c48, %c0_12], %10 {strides = array<i32>} : memref<144x256xbf16, #tpu.memory_space<vmem>>, vector<16x16xbf16>,
    %c0_13 = arith.constant 0 : index
    %c0_14 = arith.constant 0 : index
    %c19 = arith.constant 19 : index
    %12 = vector.load %arg2[%c0_13, %c0_14, %c19] : memref<1x16x324xbf16, #tpu.memory_space<vmem>>, vector<1x16x16xbf16>
    %13 = vector.shape_cast %12 : vector<1x16x16xbf16> to vector<16x16xbf16>
    %c64 = arith.constant 64 : index
    %c0_15 = arith.constant 0 : index
    %14 = vector.load %arg6[%c64, %c0_15] : memref<144x256xbf16, #tpu.memory_space<vmem>>, vector<16x16xbf16>
    tpu.vector_store %arg6[%c64, %c0_15], %13 {strides = array<i32>} : memref<144x256xbf16, #tpu.memory_space<vmem>>, vector<16x16xbf16>,
    %c0_16 = arith.constant 0 : index
    %c0_17 = arith.constant 0 : index
    %c20 = arith.constant 20 : index
    %15 = vector.load %arg2[%c0_16, %c0_17, %c20] : memref<1x16x324xbf16, #tpu.memory_space<vmem>>, vector<1x16x16xbf16>
    %16 = vector.shape_cast %15 : vector<1x16x16xbf16> to vector<16x16xbf16>
    %c80 = arith.constant 80 : index
    %c0_18 = arith.constant 0 : index
    %17 = vector.load %arg6[%c80, %c0_18] : memref<144x256xbf16, #tpu.memory_space<vmem>>, vector<16x16xbf16>
    tpu.vector_store %arg6[%c80, %c0_18], %16 {strides = array<i32>} : memref<144x256xbf16, #tpu.memory_space<vmem>>, vector<16x16xbf16>,
    %c0_19 = arith.constant 0 : index
    %c0_20 = arith.constant 0 : index
    %c36 = arith.constant 36 : index
    %18 = vector.load %arg2[%c0_19, %c0_20, %c36] : memref<1x16x324xbf16, #tpu.memory_space<vmem>>, vector<1x16x16xbf16>
    %19 = vector.shape_cast %18 : vector<1x16x16xbf16> to vector<16x16xbf16>
    %c96 = arith.constant 96 : index
    %c0_21 = arith.constant 0 : index
    %20 = vector.load %arg6[%c96, %c0_21] : memref<144x256xbf16, #tpu.memory_space<vmem>>, vector<16x16xbf16>
    tpu.vector_store %arg6[%c96, %c0_21], %19 {strides = array<i32>} : memref<144x256xbf16, #tpu.memory_space<vmem>>, vector<16x16xbf16>,
    %c0_22 = arith.constant 0 : index
    %c0_23 = arith.constant 0 : index
    %c37 = arith.constant 37 : index
    %21 = vector.load %arg2[%c0_22, %c0_23, %c37] : memref<1x16x324xbf16, #tpu.memory_space<vmem>>, vector<1x16x16xbf16>
    %22 = vector.shape_cast %21 : vector<1x16x16xbf16> to vector<16x16xbf16>
    %c112 = arith.constant 112 : index
    %c0_24 = arith.constant 0 : index
    %23 = vector.load %arg6[%c112, %c0_24] : memref<144x256xbf16, #tpu.memory_space<vmem>>, vector<16x16xbf16>
    tpu.vector_store %arg6[%c112, %c0_24], %22 {strides = array<i32>} : memref<144x256xbf16, #tpu.memory_space<vmem>>, vector<16x16xbf16>,
    %c0_25 = arith.constant 0 : index
    %c0_26 = arith.constant 0 : index
    %c38 = arith.constant 38 : index
    %24 = vector.load %arg2[%c0_25, %c0_26, %c38] : memref<1x16x324xbf16, #tpu.memory_space<vmem>>, vector<1x16x16xbf16>
    %25 = vector.shape_cast %24 : vector<1x16x16xbf16> to vector<16x16xbf16>
    %c128 = arith.constant 128 : index
    %c0_27 = arith.constant 0 : index
    %26 = vector.load %arg6[%c128, %c0_27] : memref<144x256xbf16, #tpu.memory_space<vmem>>, vector<16x16xbf16>
    tpu.vector_store %arg6[%c128, %c0_27], %25 {strides = array<i32>} : memref<144x256xbf16, #tpu.memory_space<vmem>>, vector<16x16xbf16>,
    %c0_28 = arith.constant 0 : index
    %c0_29 = arith.constant 0 : index
    %c18_30 = arith.constant 18 : index
    %27 = vector.load %arg2[%c0_28, %c0_29, %c18_30] : memref<1x16x324xbf16, #tpu.memory_space<vmem>>, vector<1x16x16xbf16>
    %28 = vector.shape_cast %27 : vector<1x16x16xbf16> to vector<16x16xbf16>
    %c0_31 = arith.constant 0 : index
    %c16_32 = arith.constant 16 : index
    %29 = vector.load %arg6[%c0_31, %c16_32] : memref<144x256xbf16, #tpu.memory_space<vmem>>, vector<16x16xbf16>
    tpu.vector_store %arg6[%c0_31, %c16_32], %28 {strides = array<i32>} : memref<144x256xbf16, #tpu.memory_space<vmem>>, vector<16x16xbf16>,
    %c0_33 = arith.constant 0 : index
    %c0_34 = arith.constant 0 : index
    %c19_35 = arith.constant 19 : index
    %30 = vector.load %arg2[%c0_33, %c0_34, %c19_35] : memref<1x16x324xbf16, #tpu.memory_space<vmem>>, vector<1x16x16xbf16>
    %31 = vector.shape_cast %30 : vector<1x16x16xbf16> to vector<16x16xbf16>
    %c16_36 = arith.constant 16 : index
    %c16_37 = arith.constant 16 : index
    %32 = vector.load %arg6[%c16_36, %c16_37] : memref<144x256xbf16, #tpu.memory_space<vmem>>, vector<16x16xbf16>
    tpu.vector_store %arg6[%c16_36, %c16_37], %31 {strides = array<i32>} : memref<144x256xbf16, #tpu.memory_space<vmem>>, vector<16x16xbf16>,
    %c0_38 = arith.constant 0 : index
    %c0_39 = arith.constant 0 : index
    %c20_40 = arith.constant 20 : index
    %33 = vector.load %arg2[%c0_38, %c0_39, %c20_40] : memref<1x16x324xbf16, #tpu.memory_space<vmem>>, vector<1x16x16xbf16>
    %34 = vector.shape_cast %33 : vector<1x16x16xbf16> to vector<16x16xbf16>
    %c32_41 = arith.constant 32 : index
    %c16_42 = arith.constant 16 : index
    %35 = vector.load %arg6[%c32_41, %c16_42] : memref<144x256xbf16, #tpu.memory_space<vmem>>, vector<16x16xbf16>
    tpu.vector_store %arg6[%c32_41, %c16_42], %34 {strides = array<i32>} : memref<144x256xbf16, #tpu.memory_space<vmem>>, vector<16x16xbf16>,
    %c0_43 = arith.constant 0 : index
    %c0_44 = arith.constant 0 : index
    %c36_45 = arith.constant 36 : index
    %36 = vector.load %arg2[%c0_43, %c0_44, %c36_45] : memref<1x16x324xbf16, #tpu.memory_space<vmem>>, vector<1x16x16xbf16>
    %37 = vector.shape_cast %36 : vector<1x16x16xbf16> to vector<16x16xbf16>
    %c48_46 = arith.constant 48 : index
    %c16_47 = arith.constant 16 : index
    %38 = vector.load %arg6[%c48_46, %c16_47] : memref<144x256xbf16, #tpu.memory_space<vmem>>, vector<16x16xbf16>
    tpu.vector_store %arg6[%c48_46, %c16_47], %37 {strides = array<i32>} : memref<144x256xbf16, #tpu.memory_space<vmem>>, vector<16x16xbf16>,
    %c0_48 = arith.constant 0 : index
    %c0_49 = arith.constant 0 : index
    %c37_50 = arith.constant 37 : index
    %39 = vector.load %arg2[%c0_48, %c0_49, %c37_50] : memref<1x16x324xbf16, #tpu.memory_space<vmem>>, vector<1x16x16xbf16>
    %40 = vector.shape_cast %39 : vector<1x16x16xbf16> to vector<16x16xbf16>
    %c64_51 = arith.constant 64 : index
    %c16_52 = arith.constant 16 : index
    %41 = vector.load %arg6[%c64_51, %c16_52] : memref<144x256xbf16, #tpu.memory_space<vmem>>, vector<16x16xbf16>
    tpu.vector_store %arg6[%c64_51, %c16_52], %40 {strides = array<i32>} : memref<144x256xbf16, #tpu.memory_space<vmem>>, vector<16x16xbf16>,
    %c0_53 = arith.constant 0 : index
    %c0_54 = arith.constant 0 : index
    %c38_55 = arith.constant 38 : index
    %42 = vector.load %arg2[%c0_53, %c0_54, %c38_55] : memref<1x16x324xbf16, #tpu.memory_space<vmem>>, vector<1x16x16xbf16>
    %43 = vector.shape_cast %42 : vector<1x16x16xbf16> to vector<16x16xbf16>
    %c80_56 = arith.constant 80 : index
    %c16_57 = arith.constant 16 : index
    %44 = vector.load %arg6[%c80_56, %c16_57] : memref<144x256xbf16, #tpu.memory_space<vmem>>, vector<16x16xbf16>
    tpu.vector_store %arg6[%c80_56, %c16_57], %43 {strides = array<i32>} : memref<144x256xbf16, #tpu.memory_space<vmem>>, vector<16x16xbf16>,
    %c0_58 = arith.constant 0 : index
    %c0_59 = arith.constant 0 : index
    %c54 = arith.constant 54 : index
    %45 = vector.load %arg2[%c0_58, %c0_59, %c54] : memref<1x16x324xbf16, #tpu.memory_space<vmem>>, vector<1x16x16xbf16>
    %46 = vector.shape_cast %45 : vector<1x16x16xbf16> to vector<16x16xbf16>
    %c96_60 = arith.constant 96 : index
    %c16_61 = arith.constant 16 : index
    %47 = vector.load %arg6[%c96_60, %c16_61] : memref<144x256xbf16, #tpu.memory_space<vmem>>, vector<16x16xbf16>
    tpu.vector_store %arg6[%c96_60, %c16_61], %46 {strides = array<i32>} : memref<144x256xbf16, #tpu.memory_space<vmem>>, vector<16x16xbf16>,
    %c0_62 = arith.constant 0 : index
    %c0_63 = arith.constant 0 : index
    %c55 = arith.constant 55 : index
    %48 = vector.load %arg2[%c0_62, %c0_63, %c55] : memref<1x16x324xbf16, #tpu.memory_space<vmem>>, vector<1x16x16xbf16>
    %49 = vector.shape_cast %48 : vector<1x16x16xbf16> to vector<16x16xbf16>
    %c112_64 = arith.constant 112 : index
    %c16_65 = arith.constant 16 : index
    %50 = vector.load %arg6[%c112_64, %c16_65] : memref<144x256xbf16, #tpu.memory_space<vmem>>, vector<16x16xbf16>
    tpu.vector_store %arg6[%c112_64, %c16_65], %49 {strides = array<i32>} : memref<144x256xbf16, #tpu.memory_space<vmem>>, vector<16x16xbf16>,
    %c0_66 = arith.constant 0 : index
    %c0_67 = arith.constant 0 : index
    %c56 = arith.constant 56 : index
    %51 = vector.load %arg2[%c0_66, %c0_67, %c56] : memref<1x16x324xbf16, #tpu.memory_space<vmem>>, vector<1x16x16xbf16>
    %52 = vector.shape_cast %51 : vector<1x16x16xbf16> to vector<16x16xbf16>
    %c128_68 = arith.constant 128 : index
    %c16_69 = arith.constant 16 : index
    %53 = vector.load %arg6[%c128_68, %c16_69] : memref<144x256xbf16, #tpu.memory_space<vmem>>, vector<16x16xbf16>
    tpu.vector_store %arg6[%c128_68, %c16_69], %52 {strides = array<i32>} : memref<144x256xbf16, #tpu.memory_space<vmem>>, vector<16x16xbf16>,
    %c0_70 = arith.constant 0 : index
    %c0_71 = arith.constant 0 : index
    %c36_72 = arith.constant 36 : index
    %54 = vector.load %arg2[%c0_70, %c0_71, %c36_72] : memref<1x16x324xbf16, #tpu.memory_space<vmem>>, vector<1x16x16xbf16>
    %55 = vector.shape_cast %54 : vector<1x16x16xbf16> to vector<16x16xbf16>
    %c0_73 = arith.constant 0 : index
    %c32_74 = arith.constant 32 : index
    %56 = vector.load %arg6[%c0_73, %c32_74] : memref<144x256xbf16, #tpu.memory_space<vmem>>, vector<16x16xbf16>
    tpu.vector_store %arg6[%c0_73, %c32_74], %55 {strides = array<i32>} : memref<144x256xbf16, #tpu.memory_space<vmem>>, vector<16x16xbf16>,
    %c0_75 = arith.constant 0 : index
    %c0_76 = arith.constant 0 : index
    %c37_77 = arith.constant 37 : index
    %57 = vector.load %arg2[%c0_75, %c0_76, %c37_77] : memref<1x16x324xbf16, #tpu.memory_space<vmem>>, vector<1x16x16xbf16>
    %58 = vector.shape_cast %57 : vector<1x16x16xbf16> to vector<16x16xbf16>
    %c16_78 = arith.constant 16 : index
    %c32_79 = arith.constant 32 : index
    %59 = vector.load %arg6[%c16_78, %c32_79] : memref<144x256xbf16, #tpu.memory_space<vmem>>, vector<16x16xbf16>
    tpu.vector_store %arg6[%c16_78, %c32_79], %58 {strides = array<i32>} : memref<144x256xbf16, #tpu.memory_space<vmem>>, vector<16x16xbf16>,
    %c0_80 = arith.constant 0 : index
    %c0_81 = arith.constant 0 : index
    %c38_82 = arith.constant 38 : index
    %60 = vector.load %arg2[%c0_80, %c0_81, %c38_82] : memref<1x16x324xbf16, #tpu.memory_space<vmem>>, vector<1x16x16xbf16>
    %61 = vector.shape_cast %60 : vector<1x16x16xbf16> to vector<16x16xbf16>
    %c32_83 = arith.constant 32 : index
    %c32_84 = arith.constant 32 : index
    %62 = vector.load %arg6[%c32_83, %c32_84] : memref<144x256xbf16, #tpu.memory_space<vmem>>, vector<16x16xbf16>
    tpu.vector_store %arg6[%c32_83, %c32_84], %61 {strides = array<i32>} : memref<144x256xbf16, #tpu.memory_space<vmem>>, vector<16x16xbf16>,
    %c0_85 = arith.constant 0 : index
    %c0_86 = arith.constant 0 : index
    %c54_87 = arith.constant 54 : index
    %63 = vector.load %arg2[%c0_85, %c0_86, %c54_87] : memref<1x16x324xbf16, #tpu.memory_space<vmem>>, vector<1x16x16xbf16>
    %64 = vector.shape_cast %63 : vector<1x16x16xbf16> to vector<16x16xbf16>
    %c48_88 = arith.constant 48 : index
    %c32_89 = arith.constant 32 : index
    %65 = vector.load %arg6[%c48_88, %c32_89] : memref<144x256xbf16, #tpu.memory_space<vmem>>, vector<16x16xbf16>
    tpu.vector_store %arg6[%c48_88, %c32_89], %64 {strides = array<i32>} : memref<144x256xbf16, #tpu.memory_space<vmem>>, vector<16x16xbf16>,
    %c0_90 = arith.constant 0 : index
    %c0_91 = arith.constant 0 : index
    %c55_92 = arith.constant 55 : index
    %66 = vector.load %arg2[%c0_90, %c0_91, %c55_92] : memref<1x16x324xbf16, #tpu.memory_space<vmem>>, vector<1x16x16xbf16>
    %67 = vector.shape_cast %66 : vector<1x16x16xbf16> to vector<16x16xbf16>
    %c64_93 = arith.constant 64 : index
    %c32_94 = arith.constant 32 : index
    %68 = vector.load %arg6[%c64_93, %c32_94] : memref<144x256xbf16, #tpu.memory_space<vmem>>, vector<16x16xbf16>
    tpu.vector_store %arg6[%c64_93, %c32_94], %67 {strides = array<i32>} : memref<144x256xbf16, #tpu.memory_space<vmem>>, vector<16x16xbf16>,
    %c0_95 = arith.constant 0 : index
    %c0_96 = arith.constant 0 : index
    %c56_97 = arith.constant 56 : index
    %69 = vector.load %arg2[%c0_95, %c0_96, %c56_97] : memref<1x16x324xbf16, #tpu.memory_space<vmem>>, vector<1x16x16xbf16>
    %70 = vector.shape_cast %69 : vector<1x16x16xbf16> to vector<16x16xbf16>
    %c80_98 = arith.constant 80 : index
    %c32_99 = arith.constant 32 : index
    %71 = vector.load %arg6[%c80_98, %c32_99] : memref<144x256xbf16, #tpu.memory_space<vmem>>, vector<16x16xbf16>
    tpu.vector_store %arg6[%c80_98, %c32_99], %70 {strides = array<i32>} : memref<144x256xbf16, #tpu.memory_space<vmem>>, vector<16x16xbf16>,
    %c0_100 = arith.constant 0 : index
    %c0_101 = arith.constant 0 : index
    %c72 = arith.constant 72 : index
    %72 = vector.load %arg2[%c0_100, %c0_101, %c72] : memref<1x16x324xbf16, #tpu.memory_space<vmem>>, vector<1x16x16xbf16>
    %73 = vector.shape_cast %72 : vector<1x16x16xbf16> to vector<16x16xbf16>
    %c96_102 = arith.constant 96 : index
    %c32_103 = arith.constant 32 : index
    %74 = vector.load %arg6[%c96_102, %c32_103] : memref<144x256xbf16, #tpu.memory_space<vmem>>, vector<16x16xbf16>
    tpu.vector_store %arg6[%c96_102, %c32_103], %73 {strides = array<i32>} : memref<144x256xbf16, #tpu.memory_space<vmem>>, vector<16x16xbf16>,
    %c0_104 = arith.constant 0 : index
    %c0_105 = arith.constant 0 : index
    %c73 = arith.constant 73 : index
    %75 = vector.load %arg2[%c0_104, %c0_105, %c73] : memref<1x16x324xbf16, #tpu.memory_space<vmem>>, vector<1x16x16xbf16>
    %76 = vector.shape_cast %75 : vector<1x16x16xbf16> to vector<16x16xbf16>
    %c112_106 = arith.constant 112 : index
    %c32_107 = arith.constant 32 : index
    %77 = vector.load %arg6[%c112_106, %c32_107] : memref<144x256xbf16, #tpu.memory_space<vmem>>, vector<16x16xbf16>
    tpu.vector_store %arg6[%c112_106, %c32_107], %76 {strides = array<i32>} : memref<144x256xbf16, #tpu.memory_space<vmem>>, vector<16x16xbf16>,
    %c0_108 = arith.constant 0 : index
    %c0_109 = arith.constant 0 : index
    %c74 = arith.constant 74 : index
    %78 = vector.load %arg2[%c0_108, %c0_109, %c74] : memref<1x16x324xbf16, #tpu.memory_space<vmem>>, vector<1x16x16xbf16>
    %79 = vector.shape_cast %78 : vector<1x16x16xbf16> to vector<16x16xbf16>
    %c128_110 = arith.constant 128 : index
    %c32_111 = arith.constant 32 : index
    %80 = vector.load %arg6[%c128_110, %c32_111] : memref<144x256xbf16, #tpu.memory_space<vmem>>, vector<16x16xbf16>
    tpu.vector_store %arg6[%c128_110, %c32_111], %79 {strides = array<i32>} : memref<144x256xbf16, #tpu.memory_space<vmem>>, vector<16x16xbf16>,
    %c0_112 = arith.constant 0 : index
    %c0_113 = arith.constant 0 : index
    %c54_114 = arith.constant 54 : index
    %81 = vector.load %arg2[%c0_112, %c0_113, %c54_114] : memref<1x16x324xbf16, #tpu.memory_space<vmem>>, vector<1x16x16xbf16>
    %82 = vector.shape_cast %81 : vector<1x16x16xbf16> to vector<16x16xbf16>
    %c0_115 = arith.constant 0 : index
    %c48_116 = arith.constant 48 : index
    %83 = vector.load %arg6[%c0_115, %c48_116] : memref<144x256xbf16, #tpu.memory_space<vmem>>, vector<16x16xbf16>
    tpu.vector_store %arg6[%c0_115, %c48_116], %82 {strides = array<i32>} : memref<144x256xbf16, #tpu.memory_space<vmem>>, vector<16x16xbf16>,
    %c0_117 = arith.constant 0 : index
    %c0_118 = arith.constant 0 : index
    %c55_119 = arith.constant 55 : index
    %84 = vector.load %arg2[%c0_117, %c0_118, %c55_119] : memref<1x16x324xbf16, #tpu.memory_space<vmem>>, vector<1x16x16xbf16>
    %85 = vector.shape_cast %84 : vector<1x16x16xbf16> to vector<16x16xbf16>
    %c16_120 = arith.constant 16 : index
    %c48_121 = arith.constant 48 : index
    %86 = vector.load %arg6[%c16_120, %c48_121] : memref<144x256xbf16, #tpu.memory_space<vmem>>, vector<16x16xbf16>
    tpu.vector_store %arg6[%c16_120, %c48_121], %85 {strides = array<i32>} : memref<144x256xbf16, #tpu.memory_space<vmem>>, vector<16x16xbf16>,
    %c0_122 = arith.constant 0 : index
    %c0_123 = arith.constant 0 : index
    %c56_124 = arith.constant 56 : index
    %87 = vector.load %arg2[%c0_122, %c0_123, %c56_124] : memref<1x16x324xbf16, #tpu.memory_space<vmem>>, vector<1x16x16xbf16>
    %88 = vector.shape_cast %87 : vector<1x16x16xbf16> to vector<16x16xbf16>
    %c32_125 = arith.constant 32 : index
    %c48_126 = arith.constant 48 : index
    %89 = vector.load %arg6[%c32_125, %c48_126] : memref<144x256xbf16, #tpu.memory_space<vmem>>, vector<16x16xbf16>
    tpu.vector_store %arg6[%c32_125, %c48_126], %88 {strides = array<i32>} : memref<144x256xbf16, #tpu.memory_space<vmem>>, vector<16x16xbf16>,
    %c0_127 = arith.constant 0 : index
    %c0_128 = arith.constant 0 : index
    %c72_129 = arith.constant 72 : index
    %90 = vector.load %arg2[%c0_127, %c0_128, %c72_129] : memref<1x16x324xbf16, #tpu.memory_space<vmem>>, vector<1x16x16xbf16>
    %91 = vector.shape_cast %90 : vector<1x16x16xbf16> to vector<16x16xbf16>
    %c48_130 = arith.constant 48 : index
    %c48_131 = arith.constant 48 : index
    %92 = vector.load %arg6[%c48_130, %c48_131] : memref<144x256xbf16, #tpu.memory_space<vmem>>, vector<16x16xbf16>
    tpu.vector_store %arg6[%c48_130, %c48_131], %91 {strides = array<i32>} : memref<144x256xbf16, #tpu.memory_space<vmem>>, vector<16x16xbf16>,
    %c0_132 = arith.constant 0 : index
    %c0_133 = arith.constant 0 : index
    %c73_134 = arith.constant 73 : index
    %93 = vector.load %arg2[%c0_132, %c0_133, %c73_134] : memref<1x16x324xbf16, #tpu.memory_space<vmem>>, vector<1x16x16xbf16>
    %94 = vector.shape_cast %93 : vector<1x16x16xbf16> to vector<16x16xbf16>
    %c64_135 = arith.constant 64 : index
    %c48_136 = arith.constant 48 : index
    %95 = vector.load %arg6[%c64_135, %c48_136] : memref<144x256xbf16, #tpu.memory_space<vmem>>, vector<16x16xbf16>
    tpu.vector_store %arg6[%c64_135, %c48_136], %94 {strides = array<i32>} : memref<144x256xbf16, #tpu.memory_space<vmem>>, vector<16x16xbf16>,
    %c0_137 = arith.constant 0 : index
    %c0_138 = arith.constant 0 : index
    %c74_139 = arith.constant 74 : index
    %96 = vector.load %arg2[%c0_137, %c0_138, %c74_139] : memref<1x16x324xbf16, #tpu.memory_space<vmem>>, vector<1x16x16xbf16>
    %97 = vector.shape_cast %96 : vector<1x16x16xbf16> to vector<16x16xbf16>
    %c80_140 = arith.constant 80 : index
    %c48_141 = arith.constant 48 : index
    %98 = vector.load %arg6[%c80_140, %c48_141] : memref<144x256xbf16, #tpu.memory_space<vmem>>, vector<16x16xbf16>
    tpu.vector_store %arg6[%c80_140, %c48_141], %97 {strides = array<i32>} : memref<144x256xbf16, #tpu.memory_space<vmem>>, vector<16x16xbf16>,
    %c0_142 = arith.constant 0 : index
    %c0_143 = arith.constant 0 : index
    %c90 = arith.constant 90 : index
    %99 = vector.load %arg2[%c0_142, %c0_143, %c90] : memref<1x16x324xbf16, #tpu.memory_space<vmem>>, vector<1x16x16xbf16>
    %100 = vector.shape_cast %99 : vector<1x16x16xbf16> to vector<16x16xbf16>
    %c96_144 = arith.constant 96 : index
    %c48_145 = arith.constant 48 : index
    %101 = vector.load %arg6[%c96_144, %c48_145] : memref<144x256xbf16, #tpu.memory_space<vmem>>, vector<16x16xbf16>
    tpu.vector_store %arg6[%c96_144, %c48_145], %100 {strides = array<i32>} : memref<144x256xbf16, #tpu.memory_space<vmem>>, vector<16x16xbf16>,
    %c0_146 = arith.constant 0 : index
    %c0_147 = arith.constant 0 : index
    %c91 = arith.constant 91 : index
    %102 = vector.load %arg2[%c0_146, %c0_147, %c91] : memref<1x16x324xbf16, #tpu.memory_space<vmem>>, vector<1x16x16xbf16>
    %103 = vector.shape_cast %102 : vector<1x16x16xbf16> to vector<16x16xbf16>
    %c112_148 = arith.constant 112 : index
    %c48_149 = arith.constant 48 : index
    %104 = vector.load %arg6[%c112_148, %c48_149] : memref<144x256xbf16, #tpu.memory_space<vmem>>, vector<16x16xbf16>
    tpu.vector_store %arg6[%c112_148, %c48_149], %103 {strides = array<i32>} : memref<144x256xbf16, #tpu.memory_space<vmem>>, vector<16x16xbf16>,
    %c0_150 = arith.constant 0 : index
    %c0_151 = arith.constant 0 : index
    %c92 = arith.constant 92 : index
    %105 = vector.load %arg2[%c0_150, %c0_151, %c92] : memref<1x16x324xbf16, #tpu.memory_space<vmem>>, vector<1x16x16xbf16>
    %106 = vector.shape_cast %105 : vector<1x16x16xbf16> to vector<16x16xbf16>
    %c128_152 = arith.constant 128 : index
    %c48_153 = arith.constant 48 : index
    %107 = vector.load %arg6[%c128_152, %c48_153] : memref<144x256xbf16, #tpu.memory_space<vmem>>, vector<16x16xbf16>
    tpu.vector_store %arg6[%c128_152, %c48_153], %106 {strides = array<i32>} : memref<144x256xbf16, #tpu.memory_space<vmem>>, vector<16x16xbf16>,
    %c0_154 = arith.constant 0 : index
    %c0_155 = arith.constant 0 : index
    %c72_156 = arith.constant 72 : index
    %108 = vector.load %arg2[%c0_154, %c0_155, %c72_156] : memref<1x16x324xbf16, #tpu.memory_space<vmem>>, vector<1x16x16xbf16>
    %109 = vector.shape_cast %108 : vector<1x16x16xbf16> to vector<16x16xbf16>
    %c0_157 = arith.constant 0 : index
    %c64_158 = arith.constant 64 : index
    %110 = vector.load %arg6[%c0_157, %c64_158] : memref<144x256xbf16, #tpu.memory_space<vmem>>, vector<16x16xbf16>
    tpu.vector_store %arg6[%c0_157, %c64_158], %109 {strides = array<i32>} : memref<144x256xbf16, #tpu.memory_space<vmem>>, vector<16x16xbf16>,
    %c0_159 = arith.constant 0 : index
    %c0_160 = arith.constant 0 : index
    %c73_161 = arith.constant 73 : index
    %111 = vector.load %arg2[%c0_159, %c0_160, %c73_161] : memref<1x16x324xbf16, #tpu.memory_space<vmem>>, vector<1x16x16xbf16>
    %112 = vector.shape_cast %111 : vector<1x16x16xbf16> to vector<16x16xbf16>
    %c16_162 = arith.constant 16 : index
    %c64_163 = arith.constant 64 : index
    %113 = vector.load %arg6[%c16_162, %c64_163] : memref<144x256xbf16, #tpu.memory_space<vmem>>, vector<16x16xbf16>
    tpu.vector_store %arg6[%c16_162, %c64_163], %112 {strides = array<i32>} : memref<144x256xbf16, #tpu.memory_space<vmem>>, vector<16x16xbf16>,
    %c0_164 = arith.constant 0 : index
    %c0_165 = arith.constant 0 : index
    %c74_166 = arith.constant 74 : index
    %114 = vector.load %arg2[%c0_164, %c0_165, %c74_166] : memref<1x16x324xbf16, #tpu.memory_space<vmem>>, vector<1x16x16xbf16>
    %115 = vector.shape_cast %114 : vector<1x16x16xbf16> to vector<16x16xbf16>
    %c32_167 = arith.constant 32 : index
    %c64_168 = arith.constant 64 : index
    %116 = vector.load %arg6[%c32_167, %c64_168] : memref<144x256xbf16, #tpu.memory_space<vmem>>, vector<16x16xbf16>
    tpu.vector_store %arg6[%c32_167, %c64_168], %115 {strides = array<i32>} : memref<144x256xbf16, #tpu.memory_space<vmem>>, vector<16x16xbf16>,
    %c0_169 = arith.constant 0 : index
    %c0_170 = arith.constant 0 : index
    %c90_171 = arith.constant 90 : index
    %117 = vector.load %arg2[%c0_169, %c0_170, %c90_171] : memref<1x16x324xbf16, #tpu.memory_space<vmem>>, vector<1x16x16xbf16>
    %118 = vector.shape_cast %117 : vector<1x16x16xbf16> to vector<16x16xbf16>
    %c48_172 = arith.constant 48 : index
    %c64_173 = arith.constant 64 : index
    %119 = vector.load %arg6[%c48_172, %c64_173] : memref<144x256xbf16, #tpu.memory_space<vmem>>, vector<16x16xbf16>
    tpu.vector_store %arg6[%c48_172, %c64_173], %118 {strides = array<i32>} : memref<144x256xbf16, #tpu.memory_space<vmem>>, vector<16x16xbf16>,
    %c0_174 = arith.constant 0 : index
    %c0_175 = arith.constant 0 : index
    %c91_176 = arith.constant 91 : index
    %120 = vector.load %arg2[%c0_174, %c0_175, %c91_176] : memref<1x16x324xbf16, #tpu.memory_space<vmem>>, vector<1x16x16xbf16>
    %121 = vector.shape_cast %120 : vector<1x16x16xbf16> to vector<16x16xbf16>
    %c64_177 = arith.constant 64 : index
    %c64_178 = arith.constant 64 : index
    %122 = vector.load %arg6[%c64_177, %c64_178] : memref<144x256xbf16, #tpu.memory_space<vmem>>, vector<16x16xbf16>
    tpu.vector_store %arg6[%c64_177, %c64_178], %121 {strides = array<i32>} : memref<144x256xbf16, #tpu.memory_space<vmem>>, vector<16x16xbf16>,
    %c0_179 = arith.constant 0 : index
    %c0_180 = arith.constant 0 : index
    %c92_181 = arith.constant 92 : index
    %123 = vector.load %arg2[%c0_179, %c0_180, %c92_181] : memref<1x16x324xbf16, #tpu.memory_space<vmem>>, vector<1x16x16xbf16>
    %124 = vector.shape_cast %123 : vector<1x16x16xbf16> to vector<16x16xbf16>
    %c80_182 = arith.constant 80 : index
    %c64_183 = arith.constant 64 : index
    %125 = vector.load %arg6[%c80_182, %c64_183] : memref<144x256xbf16, #tpu.memory_space<vmem>>, vector<16x16xbf16>
    tpu.vector_store %arg6[%c80_182, %c64_183], %124 {strides = array<i32>} : memref<144x256xbf16, #tpu.memory_space<vmem>>, vector<16x16xbf16>,
    %c0_184 = arith.constant 0 : index
    %c0_185 = arith.constant 0 : index
    %c108 = arith.constant 108 : index
    %126 = vector.load %arg2[%c0_184, %c0_185, %c108] : memref<1x16x324xbf16, #tpu.memory_space<vmem>>, vector<1x16x16xbf16>
    %127 = vector.shape_cast %126 : vector<1x16x16xbf16> to vector<16x16xbf16>
    %c96_186 = arith.constant 96 : index
    %c64_187 = arith.constant 64 : index
    %128 = vector.load %arg6[%c96_186, %c64_187] : memref<144x256xbf16, #tpu.memory_space<vmem>>, vector<16x16xbf16>
    tpu.vector_store %arg6[%c96_186, %c64_187], %127 {strides = array<i32>} : memref<144x256xbf16, #tpu.memory_space<vmem>>, vector<16x16xbf16>,
    %c0_188 = arith.constant 0 : index
    %c0_189 = arith.constant 0 : index
    %c109 = arith.constant 109 : index
    %129 = vector.load %arg2[%c0_188, %c0_189, %c109] : memref<1x16x324xbf16, #tpu.memory_space<vmem>>, vector<1x16x16xbf16>
    %130 = vector.shape_cast %129 : vector<1x16x16xbf16> to vector<16x16xbf16>
    %c112_190 = arith.constant 112 : index
    %c64_191 = arith.constant 64 : index
    %131 = vector.load %arg6[%c112_190, %c64_191] : memref<144x256xbf16, #tpu.memory_space<vmem>>, vector<16x16xbf16>
    tpu.vector_store %arg6[%c112_190, %c64_191], %130 {strides = array<i32>} : memref<144x256xbf16, #tpu.memory_space<vmem>>, vector<16x16xbf16>,
    %c0_192 = arith.constant 0 : index
    %c0_193 = arith.constant 0 : index
    %c110 = arith.constant 110 : index
    %132 = vector.load %arg2[%c0_192, %c0_193, %c110] : memref<1x16x324xbf16, #tpu.memory_space<vmem>>, vector<1x16x16xbf16>
    %133 = vector.shape_cast %132 : vector<1x16x16xbf16> to vector<16x16xbf16>
    %c128_194 = arith.constant 128 : index
    %c64_195 = arith.constant 64 : index
    %134 = vector.load %arg6[%c128_194, %c64_195] : memref<144x256xbf16, #tpu.memory_space<vmem>>, vector<16x16xbf16>
    tpu.vector_store %arg6[%c128_194, %c64_195], %133 {strides = array<i32>} : memref<144x256xbf16, #tpu.memory_space<vmem>>, vector<16x16xbf16>,
    %c0_196 = arith.constant 0 : index
    %c0_197 = arith.constant 0 : index
    %c90_198 = arith.constant 90 : index
    %135 = vector.load %arg2[%c0_196, %c0_197, %c90_198] : memref<1x16x324xbf16, #tpu.memory_space<vmem>>, vector<1x16x16xbf16>
    %136 = vector.shape_cast %135 : vector<1x16x16xbf16> to vector<16x16xbf16>
    %c0_199 = arith.constant 0 : index
    %c80_200 = arith.constant 80 : index
    %137 = vector.load %arg6[%c0_199, %c80_200] : memref<144x256xbf16, #tpu.memory_space<vmem>>, vector<16x16xbf16>
    tpu.vector_store %arg6[%c0_199, %c80_200], %136 {strides = array<i32>} : memref<144x256xbf16, #tpu.memory_space<vmem>>, vector<16x16xbf16>,
    %c0_201 = arith.constant 0 : index
    %c0_202 = arith.constant 0 : index
    %c91_203 = arith.constant 91 : index
    %138 = vector.load %arg2[%c0_201, %c0_202, %c91_203] : memref<1x16x324xbf16, #tpu.memory_space<vmem>>, vector<1x16x16xbf16>
    %139 = vector.shape_cast %138 : vector<1x16x16xbf16> to vector<16x16xbf16>
    %c16_204 = arith.constant 16 : index
    %c80_205 = arith.constant 80 : index
    %140 = vector.load %arg6[%c16_204, %c80_205] : memref<144x256xbf16, #tpu.memory_space<vmem>>, vector<16x16xbf16>
    tpu.vector_store %arg6[%c16_204, %c80_205], %139 {strides = array<i32>} : memref<144x256xbf16, #tpu.memory_space<vmem>>, vector<16x16xbf16>,
    %c0_206 = arith.constant 0 : index
    %c0_207 = arith.constant 0 : index
    %c92_208 = arith.constant 92 : index
    %141 = vector.load %arg2[%c0_206, %c0_207, %c92_208] : memref<1x16x324xbf16, #tpu.memory_space<vmem>>, vector<1x16x16xbf16>
    %142 = vector.shape_cast %141 : vector<1x16x16xbf16> to vector<16x16xbf16>
    %c32_209 = arith.constant 32 : index
    %c80_210 = arith.constant 80 : index
    %143 = vector.load %arg6[%c32_209, %c80_210] : memref<144x256xbf16, #tpu.memory_space<vmem>>, vector<16x16xbf16>
    tpu.vector_store %arg6[%c32_209, %c80_210], %142 {strides = array<i32>} : memref<144x256xbf16, #tpu.memory_space<vmem>>, vector<16x16xbf16>,
    %c0_211 = arith.constant 0 : index
    %c0_212 = arith.constant 0 : index
    %c108_213 = arith.constant 108 : index
    %144 = vector.load %arg2[%c0_211, %c0_212, %c108_213] : memref<1x16x324xbf16, #tpu.memory_space<vmem>>, vector<1x16x16xbf16>
    %145 = vector.shape_cast %144 : vector<1x16x16xbf16> to vector<16x16xbf16>
    %c48_214 = arith.constant 48 : index
    %c80_215 = arith.constant 80 : index
    %146 = vector.load %arg6[%c48_214, %c80_215] : memref<144x256xbf16, #tpu.memory_space<vmem>>, vector<16x16xbf16>
    tpu.vector_store %arg6[%c48_214, %c80_215], %145 {strides = array<i32>} : memref<144x256xbf16, #tpu.memory_space<vmem>>, vector<16x16xbf16>,
    %c0_216 = arith.constant 0 : index
    %c0_217 = arith.constant 0 : index
    %c109_218 = arith.constant 109 : index
    %147 = vector.load %arg2[%c0_216, %c0_217, %c109_218] : memref<1x16x324xbf16, #tpu.memory_space<vmem>>, vector<1x16x16xbf16>
    %148 = vector.shape_cast %147 : vector<1x16x16xbf16> to vector<16x16xbf16>
    %c64_219 = arith.constant 64 : index
    %c80_220 = arith.constant 80 : index
    %149 = vector.load %arg6[%c64_219, %c80_220] : memref<144x256xbf16, #tpu.memory_space<vmem>>, vector<16x16xbf16>
    tpu.vector_store %arg6[%c64_219, %c80_220], %148 {strides = array<i32>} : memref<144x256xbf16, #tpu.memory_space<vmem>>, vector<16x16xbf16>,
    %c0_221 = arith.constant 0 : index
    %c0_222 = arith.constant 0 : index
    %c110_223 = arith.constant 110 : index
    %150 = vector.load %arg2[%c0_221, %c0_222, %c110_223] : memref<1x16x324xbf16, #tpu.memory_space<vmem>>, vector<1x16x16xbf16>
    %151 = vector.shape_cast %150 : vector<1x16x16xbf16> to vector<16x16xbf16>
    %c80_224 = arith.constant 80 : index
    %c80_225 = arith.constant 80 : index
    %152 = vector.load %arg6[%c80_224, %c80_225] : memref<144x256xbf16, #tpu.memory_space<vmem>>, vector<16x16xbf16>
    tpu.vector_store %arg6[%c80_224, %c80_225], %151 {strides = array<i32>} : memref<144x256xbf16, #tpu.memory_space<vmem>>, vector<16x16xbf16>,
    %c0_226 = arith.constant 0 : index
    %c0_227 = arith.constant 0 : index
    %c126 = arith.constant 126 : index
    %153 = vector.load %arg2[%c0_226, %c0_227, %c126] : memref<1x16x324xbf16, #tpu.memory_space<vmem>>, vector<1x16x16xbf16>
    %154 = vector.shape_cast %153 : vector<1x16x16xbf16> to vector<16x16xbf16>
    %c96_228 = arith.constant 96 : index
    %c80_229 = arith.constant 80 : index
    %155 = vector.load %arg6[%c96_228, %c80_229] : memref<144x256xbf16, #tpu.memory_space<vmem>>, vector<16x16xbf16>
    tpu.vector_store %arg6[%c96_228, %c80_229], %154 {strides = array<i32>} : memref<144x256xbf16, #tpu.memory_space<vmem>>, vector<16x16xbf16>,
    %c0_230 = arith.constant 0 : index
    %c0_231 = arith.constant 0 : index
    %c127 = arith.constant 127 : index
    %156 = vector.load %arg2[%c0_230, %c0_231, %c127] : memref<1x16x324xbf16, #tpu.memory_space<vmem>>, vector<1x16x16xbf16>
    %157 = vector.shape_cast %156 : vector<1x16x16xbf16> to vector<16x16xbf16>
    %c112_232 = arith.constant 112 : index
    %c80_233 = arith.constant 80 : index
    %158 = vector.load %arg6[%c112_232, %c80_233] : memref<144x256xbf16, #tpu.memory_space<vmem>>, vector<16x16xbf16>
    tpu.vector_store %arg6[%c112_232, %c80_233], %157 {strides = array<i32>} : memref<144x256xbf16, #tpu.memory_space<vmem>>, vector<16x16xbf16>,
    %c0_234 = arith.constant 0 : index
    %c0_235 = arith.constant 0 : index
    %c128_236 = arith.constant 128 : index
    %159 = vector.load %arg2[%c0_234, %c0_235, %c128_236] : memref<1x16x324xbf16, #tpu.memory_space<vmem>>, vector<1x16x16xbf16>
    %160 = vector.shape_cast %159 : vector<1x16x16xbf16> to vector<16x16xbf16>
    %c128_237 = arith.constant 128 : index
    %c80_238 = arith.constant 80 : index
    %161 = vector.load %arg6[%c128_237, %c80_238] : memref<144x256xbf16, #tpu.memory_space<vmem>>, vector<16x16xbf16>
    tpu.vector_store %arg6[%c128_237, %c80_238], %160 {strides = array<i32>} : memref<144x256xbf16, #tpu.memory_space<vmem>>, vector<16x16xbf16>,
    %c0_239 = arith.constant 0 : index
    %c0_240 = arith.constant 0 : index
    %c108_241 = arith.constant 108 : index
    %162 = vector.load %arg2[%c0_239, %c0_240, %c108_241] : memref<1x16x324xbf16, #tpu.memory_space<vmem>>, vector<1x16x16xbf16>
    %163 = vector.shape_cast %162 : vector<1x16x16xbf16> to vector<16x16xbf16>
    %c0_242 = arith.constant 0 : index
    %c96_243 = arith.constant 96 : index
    %164 = vector.load %arg6[%c0_242, %c96_243] : memref<144x256xbf16, #tpu.memory_space<vmem>>, vector<16x16xbf16>
    tpu.vector_store %arg6[%c0_242, %c96_243], %163 {strides = array<i32>} : memref<144x256xbf16, #tpu.memory_space<vmem>>, vector<16x16xbf16>,
    %c0_244 = arith.constant 0 : index
    %c0_245 = arith.constant 0 : index
    %c109_246 = arith.constant 109 : index
    %165 = vector.load %arg2[%c0_244, %c0_245, %c109_246] : memref<1x16x324xbf16, #tpu.memory_space<vmem>>, vector<1x16x16xbf16>
    %166 = vector.shape_cast %165 : vector<1x16x16xbf16> to vector<16x16xbf16>
    %c16_247 = arith.constant 16 : index
    %c96_248 = arith.constant 96 : index
    %167 = vector.load %arg6[%c16_247, %c96_248] : memref<144x256xbf16, #tpu.memory_space<vmem>>, vector<16x16xbf16>
    tpu.vector_store %arg6[%c16_247, %c96_248], %166 {strides = array<i32>} : memref<144x256xbf16, #tpu.memory_space<vmem>>, vector<16x16xbf16>,
    %c0_249 = arith.constant 0 : index
    %c0_250 = arith.constant 0 : index
    %c110_251 = arith.constant 110 : index
    %168 = vector.load %arg2[%c0_249, %c0_250, %c110_251] : memref<1x16x324xbf16, #tpu.memory_space<vmem>>, vector<1x16x16xbf16>
    %169 = vector.shape_cast %168 : vector<1x16x16xbf16> to vector<16x16xbf16>
    %c32_252 = arith.constant 32 : index
    %c96_253 = arith.constant 96 : index
    %170 = vector.load %arg6[%c32_252, %c96_253] : memref<144x256xbf16, #tpu.memory_space<vmem>>, vector<16x16xbf16>
    tpu.vector_store %arg6[%c32_252, %c96_253], %169 {strides = array<i32>} : memref<144x256xbf16, #tpu.memory_space<vmem>>, vector<16x16xbf16>,
    %c0_254 = arith.constant 0 : index
    %c0_255 = arith.constant 0 : index
    %c126_256 = arith.constant 126 : index
    %171 = vector.load %arg2[%c0_254, %c0_255, %c126_256] : memref<1x16x324xbf16, #tpu.memory_space<vmem>>, vector<1x16x16xbf16>
    %172 = vector.shape_cast %171 : vector<1x16x16xbf16> to vector<16x16xbf16>
    %c48_257 = arith.constant 48 : index
    %c96_258 = arith.constant 96 : index
    %173 = vector.load %arg6[%c48_257, %c96_258] : memref<144x256xbf16, #tpu.memory_space<vmem>>, vector<16x16xbf16>
    tpu.vector_store %arg6[%c48_257, %c96_258], %172 {strides = array<i32>} : memref<144x256xbf16, #tpu.memory_space<vmem>>, vector<16x16xbf16>,
    %c0_259 = arith.constant 0 : index
    %c0_260 = arith.constant 0 : index
    %c127_261 = arith.constant 127 : index
    %174 = vector.load %arg2[%c0_259, %c0_260, %c127_261] : memref<1x16x324xbf16, #tpu.memory_space<vmem>>, vector<1x16x16xbf16>
    %175 = vector.shape_cast %174 : vector<1x16x16xbf16> to vector<16x16xbf16>
    %c64_262 = arith.constant 64 : index
    %c96_263 = arith.constant 96 : index
    %176 = vector.load %arg6[%c64_262, %c96_263] : memref<144x256xbf16, #tpu.memory_space<vmem>>, vector<16x16xbf16>
    tpu.vector_store %arg6[%c64_262, %c96_263], %175 {strides = array<i32>} : memref<144x256xbf16, #tpu.memory_space<vmem>>, vector<16x16xbf16>,
    %c0_264 = arith.constant 0 : index
    %c0_265 = arith.constant 0 : index
    %c128_266 = arith.constant 128 : index
    %177 = vector.load %arg2[%c0_264, %c0_265, %c128_266] : memref<1x16x324xbf16, #tpu.memory_space<vmem>>, vector<1x16x16xbf16>
    %178 = vector.shape_cast %177 : vector<1x16x16xbf16> to vector<16x16xbf16>
    %c80_267 = arith.constant 80 : index
    %c96_268 = arith.constant 96 : index
    %179 = vector.load %arg6[%c80_267, %c96_268] : memref<144x256xbf16, #tpu.memory_space<vmem>>, vector<16x16xbf16>
    tpu.vector_store %arg6[%c80_267, %c96_268], %178 {strides = array<i32>} : memref<144x256xbf16, #tpu.memory_space<vmem>>, vector<16x16xbf16>,
    %c0_269 = arith.constant 0 : index
    %c0_270 = arith.constant 0 : index
    %c144 = arith.constant 144 : index
    %180 = vector.load %arg2[%c0_269, %c0_270, %c144] : memref<1x16x324xbf16, #tpu.memory_space<vmem>>, vector<1x16x16xbf16>
    %181 = vector.shape_cast %180 : vector<1x16x16xbf16> to vector<16x16xbf16>
    %c96_271 = arith.constant 96 : index
    %c96_272 = arith.constant 96 : index
    %182 = vector.load %arg6[%c96_271, %c96_272] : memref<144x256xbf16, #tpu.memory_space<vmem>>, vector<16x16xbf16>
    tpu.vector_store %arg6[%c96_271, %c96_272], %181 {strides = array<i32>} : memref<144x256xbf16, #tpu.memory_space<vmem>>, vector<16x16xbf16>,
    %c0_273 = arith.constant 0 : index
    %c0_274 = arith.constant 0 : index
    %c145 = arith.constant 145 : index
    %183 = vector.load %arg2[%c0_273, %c0_274, %c145] : memref<1x16x324xbf16, #tpu.memory_space<vmem>>, vector<1x16x16xbf16>
    %184 = vector.shape_cast %183 : vector<1x16x16xbf16> to vector<16x16xbf16>
    %c112_275 = arith.constant 112 : index
    %c96_276 = arith.constant 96 : index
    %185 = vector.load %arg6[%c112_275, %c96_276] : memref<144x256xbf16, #tpu.memory_space<vmem>>, vector<16x16xbf16>
    tpu.vector_store %arg6[%c112_275, %c96_276], %184 {strides = array<i32>} : memref<144x256xbf16, #tpu.memory_space<vmem>>, vector<16x16xbf16>,
    %c0_277 = arith.constant 0 : index
    %c0_278 = arith.constant 0 : index
    %c146 = arith.constant 146 : index
    %186 = vector.load %arg2[%c0_277, %c0_278, %c146] : memref<1x16x324xbf16, #tpu.memory_space<vmem>>, vector<1x16x16xbf16>
    %187 = vector.shape_cast %186 : vector<1x16x16xbf16> to vector<16x16xbf16>
    %c128_279 = arith.constant 128 : index
    %c96_280 = arith.constant 96 : index
    %188 = vector.load %arg6[%c128_279, %c96_280] : memref<144x256xbf16, #tpu.memory_space<vmem>>, vector<16x16xbf16>
    tpu.vector_store %arg6[%c128_279, %c96_280], %187 {strides = array<i32>} : memref<144x256xbf16, #tpu.memory_space<vmem>>, vector<16x16xbf16>,
    %c0_281 = arith.constant 0 : index
    %c0_282 = arith.constant 0 : index
    %c126_283 = arith.constant 126 : index
    %189 = vector.load %arg2[%c0_281, %c0_282, %c126_283] : memref<1x16x324xbf16, #tpu.memory_space<vmem>>, vector<1x16x16xbf16>
    %190 = vector.shape_cast %189 : vector<1x16x16xbf16> to vector<16x16xbf16>
    %c0_284 = arith.constant 0 : index
    %c112_285 = arith.constant 112 : index
    %191 = vector.load %arg6[%c0_284, %c112_285] : memref<144x256xbf16, #tpu.memory_space<vmem>>, vector<16x16xbf16>
    tpu.vector_store %arg6[%c0_284, %c112_285], %190 {strides = array<i32>} : memref<144x256xbf16, #tpu.memory_space<vmem>>, vector<16x16xbf16>,
    %c0_286 = arith.constant 0 : index
    %c0_287 = arith.constant 0 : index
    %c127_288 = arith.constant 127 : index
    %192 = vector.load %arg2[%c0_286, %c0_287, %c127_288] : memref<1x16x324xbf16, #tpu.memory_space<vmem>>, vector<1x16x16xbf16>
    %193 = vector.shape_cast %192 : vector<1x16x16xbf16> to vector<16x16xbf16>
    %c16_289 = arith.constant 16 : index
    %c112_290 = arith.constant 112 : index
    %194 = vector.load %arg6[%c16_289, %c112_290] : memref<144x256xbf16, #tpu.memory_space<vmem>>, vector<16x16xbf16>
    tpu.vector_store %arg6[%c16_289, %c112_290], %193 {strides = array<i32>} : memref<144x256xbf16, #tpu.memory_space<vmem>>, vector<16x16xbf16>,
    %c0_291 = arith.constant 0 : index
    %c0_292 = arith.constant 0 : index
    %c128_293 = arith.constant 128 : index
    %195 = vector.load %arg2[%c0_291, %c0_292, %c128_293] : memref<1x16x324xbf16, #tpu.memory_space<vmem>>, vector<1x16x16xbf16>
    %196 = vector.shape_cast %195 : vector<1x16x16xbf16> to vector<16x16xbf16>
    %c32_294 = arith.constant 32 : index
    %c112_295 = arith.constant 112 : index
    %197 = vector.load %arg6[%c32_294, %c112_295] : memref<144x256xbf16, #tpu.memory_space<vmem>>, vector<16x16xbf16>
    tpu.vector_store %arg6[%c32_294, %c112_295], %196 {strides = array<i32>} : memref<144x256xbf16, #tpu.memory_space<vmem>>, vector<16x16xbf16>,
    %c0_296 = arith.constant 0 : index
    %c0_297 = arith.constant 0 : index
    %c144_298 = arith.constant 144 : index
    %198 = vector.load %arg2[%c0_296, %c0_297, %c144_298] : memref<1x16x324xbf16, #tpu.memory_space<vmem>>, vector<1x16x16xbf16>
    %199 = vector.shape_cast %198 : vector<1x16x16xbf16> to vector<16x16xbf16>
    %c48_299 = arith.constant 48 : index
    %c112_300 = arith.constant 112 : index
    %200 = vector.load %arg6[%c48_299, %c112_300] : memref<144x256xbf16, #tpu.memory_space<vmem>>, vector<16x16xbf16>
    tpu.vector_store %arg6[%c48_299, %c112_300], %199 {strides = array<i32>} : memref<144x256xbf16, #tpu.memory_space<vmem>>, vector<16x16xbf16>,
    %c0_301 = arith.constant 0 : index
    %c0_302 = arith.constant 0 : index
    %c145_303 = arith.constant 145 : index
    %201 = vector.load %arg2[%c0_301, %c0_302, %c145_303] : memref<1x16x324xbf16, #tpu.memory_space<vmem>>, vector<1x16x16xbf16>
    %202 = vector.shape_cast %201 : vector<1x16x16xbf16> to vector<16x16xbf16>
    %c64_304 = arith.constant 64 : index
    %c112_305 = arith.constant 112 : index
    %203 = vector.load %arg6[%c64_304, %c112_305] : memref<144x256xbf16, #tpu.memory_space<vmem>>, vector<16x16xbf16>
    tpu.vector_store %arg6[%c64_304, %c112_305], %202 {strides = array<i32>} : memref<144x256xbf16, #tpu.memory_space<vmem>>, vector<16x16xbf16>,
    %c0_306 = arith.constant 0 : index
    %c0_307 = arith.constant 0 : index
    %c146_308 = arith.constant 146 : index
    %204 = vector.load %arg2[%c0_306, %c0_307, %c146_308] : memref<1x16x324xbf16, #tpu.memory_space<vmem>>, vector<1x16x16xbf16>
    %205 = vector.shape_cast %204 : vector<1x16x16xbf16> to vector<16x16xbf16>
    %c80_309 = arith.constant 80 : index
    %c112_310 = arith.constant 112 : index
    %206 = vector.load %arg6[%c80_309, %c112_310] : memref<144x256xbf16, #tpu.memory_space<vmem>>, vector<16x16xbf16>
    tpu.vector_store %arg6[%c80_309, %c112_310], %205 {strides = array<i32>} : memref<144x256xbf16, #tpu.memory_space<vmem>>, vector<16x16xbf16>,
    %c0_311 = arith.constant 0 : index
    %c0_312 = arith.constant 0 : index
    %c162 = arith.constant 162 : index
    %207 = vector.load %arg2[%c0_311, %c0_312, %c162] : memref<1x16x324xbf16, #tpu.memory_space<vmem>>, vector<1x16x16xbf16>
    %208 = vector.shape_cast %207 : vector<1x16x16xbf16> to vector<16x16xbf16>
    %c96_313 = arith.constant 96 : index
    %c112_314 = arith.constant 112 : index
    %209 = vector.load %arg6[%c96_313, %c112_314] : memref<144x256xbf16, #tpu.memory_space<vmem>>, vector<16x16xbf16>
    tpu.vector_store %arg6[%c96_313, %c112_314], %208 {strides = array<i32>} : memref<144x256xbf16, #tpu.memory_space<vmem>>, vector<16x16xbf16>,
    %c0_315 = arith.constant 0 : index
    %c0_316 = arith.constant 0 : index
    %c163 = arith.constant 163 : index
    %210 = vector.load %arg2[%c0_315, %c0_316, %c163] : memref<1x16x324xbf16, #tpu.memory_space<vmem>>, vector<1x16x16xbf16>
    %211 = vector.shape_cast %210 : vector<1x16x16xbf16> to vector<16x16xbf16>
    %c112_317 = arith.constant 112 : index
    %c112_318 = arith.constant 112 : index
    %212 = vector.load %arg6[%c112_317, %c112_318] : memref<144x256xbf16, #tpu.memory_space<vmem>>, vector<16x16xbf16>
    tpu.vector_store %arg6[%c112_317, %c112_318], %211 {strides = array<i32>} : memref<144x256xbf16, #tpu.memory_space<vmem>>, vector<16x16xbf16>,
    %c0_319 = arith.constant 0 : index
    %c0_320 = arith.constant 0 : index
    %c164 = arith.constant 164 : index
    %213 = vector.load %arg2[%c0_319, %c0_320, %c164] : memref<1x16x324xbf16, #tpu.memory_space<vmem>>, vector<1x16x16xbf16>
    %214 = vector.shape_cast %213 : vector<1x16x16xbf16> to vector<16x16xbf16>
    %c128_321 = arith.constant 128 : index
    %c112_322 = arith.constant 112 : index
    %215 = vector.load %arg6[%c128_321, %c112_322] : memref<144x256xbf16, #tpu.memory_space<vmem>>, vector<16x16xbf16>
    tpu.vector_store %arg6[%c128_321, %c112_322], %214 {strides = array<i32>} : memref<144x256xbf16, #tpu.memory_space<vmem>>, vector<16x16xbf16>,
    %c0_323 = arith.constant 0 : index
    %c0_324 = arith.constant 0 : index
    %c144_325 = arith.constant 144 : index
    %216 = vector.load %arg2[%c0_323, %c0_324, %c144_325] : memref<1x16x324xbf16, #tpu.memory_space<vmem>>, vector<1x16x16xbf16>
    %217 = vector.shape_cast %216 : vector<1x16x16xbf16> to vector<16x16xbf16>
    %c0_326 = arith.constant 0 : index
    %c128_327 = arith.constant 128 : index
    %218 = vector.load %arg6[%c0_326, %c128_327] : memref<144x256xbf16, #tpu.memory_space<vmem>>, vector<16x16xbf16>
    tpu.vector_store %arg6[%c0_326, %c128_327], %217 {strides = array<i32>} : memref<144x256xbf16, #tpu.memory_space<vmem>>, vector<16x16xbf16>,
    %c0_328 = arith.constant 0 : index
    %c0_329 = arith.constant 0 : index
    %c145_330 = arith.constant 145 : index
    %219 = vector.load %arg2[%c0_328, %c0_329, %c145_330] : memref<1x16x324xbf16, #tpu.memory_space<vmem>>, vector<1x16x16xbf16>
    %220 = vector.shape_cast %219 : vector<1x16x16xbf16> to vector<16x16xbf16>
    %c16_331 = arith.constant 16 : index
    %c128_332 = arith.constant 128 : index
    %221 = vector.load %arg6[%c16_331, %c128_332] : memref<144x256xbf16, #tpu.memory_space<vmem>>, vector<16x16xbf16>
    tpu.vector_store %arg6[%c16_331, %c128_332], %220 {strides = array<i32>} : memref<144x256xbf16, #tpu.memory_space<vmem>>, vector<16x16xbf16>,
    %c0_333 = arith.constant 0 : index
    %c0_334 = arith.constant 0 : index
    %c146_335 = arith.constant 146 : index
    %222 = vector.load %arg2[%c0_333, %c0_334, %c146_335] : memref<1x16x324xbf16, #tpu.memory_space<vmem>>, vector<1x16x16xbf16>
    %223 = vector.shape_cast %222 : vector<1x16x16xbf16> to vector<16x16xbf16>
    %c32_336 = arith.constant 32 : index
    %c128_337 = arith.constant 128 : index
    %224 = vector.load %arg6[%c32_336, %c128_337] : memref<144x256xbf16, #tpu.memory_space<vmem>>, vector<16x16xbf16>
    tpu.vector_store %arg6[%c32_336, %c128_337], %223 {strides = array<i32>} : memref<144x256xbf16, #tpu.memory_space<vmem>>, vector<16x16xbf16>,
    %c0_338 = arith.constant 0 : index
    %c0_339 = arith.constant 0 : index
    %c162_340 = arith.constant 162 : index
    %225 = vector.load %arg2[%c0_338, %c0_339, %c162_340] : memref<1x16x324xbf16, #tpu.memory_space<vmem>>, vector<1x16x16xbf16>
    %226 = vector.shape_cast %225 : vector<1x16x16xbf16> to vector<16x16xbf16>
    %c48_341 = arith.constant 48 : index
    %c128_342 = arith.constant 128 : index
    %227 = vector.load %arg6[%c48_341, %c128_342] : memref<144x256xbf16, #tpu.memory_space<vmem>>, vector<16x16xbf16>
    tpu.vector_store %arg6[%c48_341, %c128_342], %226 {strides = array<i32>} : memref<144x256xbf16, #tpu.memory_space<vmem>>, vector<16x16xbf16>,
    %c0_343 = arith.constant 0 : index
    %c0_344 = arith.constant 0 : index
    %c163_345 = arith.constant 163 : index
    %228 = vector.load %arg2[%c0_343, %c0_344, %c163_345] : memref<1x16x324xbf16, #tpu.memory_space<vmem>>, vector<1x16x16xbf16>
    %229 = vector.shape_cast %228 : vector<1x16x16xbf16> to vector<16x16xbf16>
    %c64_346 = arith.constant 64 : index
    %c128_347 = arith.constant 128 : index
    %230 = vector.load %arg6[%c64_346, %c128_347] : memref<144x256xbf16, #tpu.memory_space<vmem>>, vector<16x16xbf16>
    tpu.vector_store %arg6[%c64_346, %c128_347], %229 {strides = array<i32>} : memref<144x256xbf16, #tpu.memory_space<vmem>>, vector<16x16xbf16>,
    %c0_348 = arith.constant 0 : index
    %c0_349 = arith.constant 0 : index
    %c164_350 = arith.constant 164 : index
    %231 = vector.load %arg2[%c0_348, %c0_349, %c164_350] : memref<1x16x324xbf16, #tpu.memory_space<vmem>>, vector<1x16x16xbf16>
    %232 = vector.shape_cast %231 : vector<1x16x16xbf16> to vector<16x16xbf16>
    %c80_351 = arith.constant 80 : index
    %c128_352 = arith.constant 128 : index
    %233 = vector.load %arg6[%c80_351, %c128_352] : memref<144x256xbf16, #tpu.memory_space<vmem>>, vector<16x16xbf16>
    tpu.vector_store %arg6[%c80_351, %c128_352], %232 {strides = array<i32>} : memref<144x256xbf16, #tpu.memory_space<vmem>>, vector<16x16xbf16>,
    %c0_353 = arith.constant 0 : index
    %c0_354 = arith.constant 0 : index
    %c180 = arith.constant 180 : index
    %234 = vector.load %arg2[%c0_353, %c0_354, %c180] : memref<1x16x324xbf16, #tpu.memory_space<vmem>>, vector<1x16x16xbf16>
    %235 = vector.shape_cast %234 : vector<1x16x16xbf16> to vector<16x16xbf16>
    %c96_355 = arith.constant 96 : index
    %c128_356 = arith.constant 128 : index
    %236 = vector.load %arg6[%c96_355, %c128_356] : memref<144x256xbf16, #tpu.memory_space<vmem>>, vector<16x16xbf16>
    tpu.vector_store %arg6[%c96_355, %c128_356], %235 {strides = array<i32>} : memref<144x256xbf16, #tpu.memory_space<vmem>>, vector<16x16xbf16>,
    %c0_357 = arith.constant 0 : index
    %c0_358 = arith.constant 0 : index
    %c181 = arith.constant 181 : index
    %237 = vector.load %arg2[%c0_357, %c0_358, %c181] : memref<1x16x324xbf16, #tpu.memory_space<vmem>>, vector<1x16x16xbf16>
    %238 = vector.shape_cast %237 : vector<1x16x16xbf16> to vector<16x16xbf16>
    %c112_359 = arith.constant 112 : index
    %c128_360 = arith.constant 128 : index
    %239 = vector.load %arg6[%c112_359, %c128_360] : memref<144x256xbf16, #tpu.memory_space<vmem>>, vector<16x16xbf16>
    tpu.vector_store %arg6[%c112_359, %c128_360], %238 {strides = array<i32>} : memref<144x256xbf16, #tpu.memory_space<vmem>>, vector<16x16xbf16>,
    %c0_361 = arith.constant 0 : index
    %c0_362 = arith.constant 0 : index
    %c182 = arith.constant 182 : index
    %240 = vector.load %arg2[%c0_361, %c0_362, %c182] : memref<1x16x324xbf16, #tpu.memory_space<vmem>>, vector<1x16x16xbf16>
    %241 = vector.shape_cast %240 : vector<1x16x16xbf16> to vector<16x16xbf16>
    %c128_363 = arith.constant 128 : index
    %c128_364 = arith.constant 128 : index
    %242 = vector.load %arg6[%c128_363, %c128_364] : memref<144x256xbf16, #tpu.memory_space<vmem>>, vector<16x16xbf16>
    tpu.vector_store %arg6[%c128_363, %c128_364], %241 {strides = array<i32>} : memref<144x256xbf16, #tpu.memory_space<vmem>>, vector<16x16xbf16>,
    %c0_365 = arith.constant 0 : index
    %c0_366 = arith.constant 0 : index
    %c162_367 = arith.constant 162 : index
    %243 = vector.load %arg2[%c0_365, %c0_366, %c162_367] : memref<1x16x324xbf16, #tpu.memory_space<vmem>>, vector<1x16x16xbf16>
    %244 = vector.shape_cast %243 : vector<1x16x16xbf16> to vector<16x16xbf16>
    %c0_368 = arith.constant 0 : index
    %c144_369 = arith.constant 144 : index
    %245 = vector.load %arg6[%c0_368, %c144_369] : memref<144x256xbf16, #tpu.memory_space<vmem>>, vector<16x16xbf16>
    tpu.vector_store %arg6[%c0_368, %c144_369], %244 {strides = array<i32>} : memref<144x256xbf16, #tpu.memory_space<vmem>>, vector<16x16xbf16>,
    %c0_370 = arith.constant 0 : index
    %c0_371 = arith.constant 0 : index
    %c163_372 = arith.constant 163 : index
    %246 = vector.load %arg2[%c0_370, %c0_371, %c163_372] : memref<1x16x324xbf16, #tpu.memory_space<vmem>>, vector<1x16x16xbf16>
    %247 = vector.shape_cast %246 : vector<1x16x16xbf16> to vector<16x16xbf16>
    %c16_373 = arith.constant 16 : index
    %c144_374 = arith.constant 144 : index
    %248 = vector.load %arg6[%c16_373, %c144_374] : memref<144x256xbf16, #tpu.memory_space<vmem>>, vector<16x16xbf16>
    tpu.vector_store %arg6[%c16_373, %c144_374], %247 {strides = array<i32>} : memref<144x256xbf16, #tpu.memory_space<vmem>>, vector<16x16xbf16>,
    %c0_375 = arith.constant 0 : index
    %c0_376 = arith.constant 0 : index
    %c164_377 = arith.constant 164 : index
    %249 = vector.load %arg2[%c0_375, %c0_376, %c164_377] : memref<1x16x324xbf16, #tpu.memory_space<vmem>>, vector<1x16x16xbf16>
    %250 = vector.shape_cast %249 : vector<1x16x16xbf16> to vector<16x16xbf16>
    %c32_378 = arith.constant 32 : index
    %c144_379 = arith.constant 144 : index
    %251 = vector.load %arg6[%c32_378, %c144_379] : memref<144x256xbf16, #tpu.memory_space<vmem>>, vector<16x16xbf16>
    tpu.vector_store %arg6[%c32_378, %c144_379], %250 {strides = array<i32>} : memref<144x256xbf16, #tpu.memory_space<vmem>>, vector<16x16xbf16>,
    %c0_380 = arith.constant 0 : index
    %c0_381 = arith.constant 0 : index
    %c180_382 = arith.constant 180 : index
    %252 = vector.load %arg2[%c0_380, %c0_381, %c180_382] : memref<1x16x324xbf16, #tpu.memory_space<vmem>>, vector<1x16x16xbf16>
    %253 = vector.shape_cast %252 : vector<1x16x16xbf16> to vector<16x16xbf16>
    %c48_383 = arith.constant 48 : index
    %c144_384 = arith.constant 144 : index
    %254 = vector.load %arg6[%c48_383, %c144_384] : memref<144x256xbf16, #tpu.memory_space<vmem>>, vector<16x16xbf16>
    tpu.vector_store %arg6[%c48_383, %c144_384], %253 {strides = array<i32>} : memref<144x256xbf16, #tpu.memory_space<vmem>>, vector<16x16xbf16>,
    %c0_385 = arith.constant 0 : index
    %c0_386 = arith.constant 0 : index
    %c181_387 = arith.constant 181 : index
    %255 = vector.load %arg2[%c0_385, %c0_386, %c181_387] : memref<1x16x324xbf16, #tpu.memory_space<vmem>>, vector<1x16x16xbf16>
    %256 = vector.shape_cast %255 : vector<1x16x16xbf16> to vector<16x16xbf16>
    %c64_388 = arith.constant 64 : index
    %c144_389 = arith.constant 144 : index
    %257 = vector.load %arg6[%c64_388, %c144_389] : memref<144x256xbf16, #tpu.memory_space<vmem>>, vector<16x16xbf16>
    tpu.vector_store %arg6[%c64_388, %c144_389], %256 {strides = array<i32>} : memref<144x256xbf16, #tpu.memory_space<vmem>>, vector<16x16xbf16>,
    %c0_390 = arith.constant 0 : index
    %c0_391 = arith.constant 0 : index
    %c182_392 = arith.constant 182 : index
    %258 = vector.load %arg2[%c0_390, %c0_391, %c182_392] : memref<1x16x324xbf16, #tpu.memory_space<vmem>>, vector<1x16x16xbf16>
    %259 = vector.shape_cast %258 : vector<1x16x16xbf16> to vector<16x16xbf16>
    %c80_393 = arith.constant 80 : index
    %c144_394 = arith.constant 144 : index
    %260 = vector.load %arg6[%c80_393, %c144_394] : memref<144x256xbf16, #tpu.memory_space<vmem>>, vector<16x16xbf16>
    tpu.vector_store %arg6[%c80_393, %c144_394], %259 {strides = array<i32>} : memref<144x256xbf16, #tpu.memory_space<vmem>>, vector<16x16xbf16>,
    %c0_395 = arith.constant 0 : index
    %c0_396 = arith.constant 0 : index
    %c198 = arith.constant 198 : index
    %261 = vector.load %arg2[%c0_395, %c0_396, %c198] : memref<1x16x324xbf16, #tpu.memory_space<vmem>>, vector<1x16x16xbf16>
    %262 = vector.shape_cast %261 : vector<1x16x16xbf16> to vector<16x16xbf16>
    %c96_397 = arith.constant 96 : index
    %c144_398 = arith.constant 144 : index
    %263 = vector.load %arg6[%c96_397, %c144_398] : memref<144x256xbf16, #tpu.memory_space<vmem>>, vector<16x16xbf16>
    tpu.vector_store %arg6[%c96_397, %c144_398], %262 {strides = array<i32>} : memref<144x256xbf16, #tpu.memory_space<vmem>>, vector<16x16xbf16>,
    %c0_399 = arith.constant 0 : index
    %c0_400 = arith.constant 0 : index
    %c199 = arith.constant 199 : index
    %264 = vector.load %arg2[%c0_399, %c0_400, %c199] : memref<1x16x324xbf16, #tpu.memory_space<vmem>>, vector<1x16x16xbf16>
    %265 = vector.shape_cast %264 : vector<1x16x16xbf16> to vector<16x16xbf16>
    %c112_401 = arith.constant 112 : index
    %c144_402 = arith.constant 144 : index
    %266 = vector.load %arg6[%c112_401, %c144_402] : memref<144x256xbf16, #tpu.memory_space<vmem>>, vector<16x16xbf16>
    tpu.vector_store %arg6[%c112_401, %c144_402], %265 {strides = array<i32>} : memref<144x256xbf16, #tpu.memory_space<vmem>>, vector<16x16xbf16>,
    %c0_403 = arith.constant 0 : index
    %c0_404 = arith.constant 0 : index
    %c200 = arith.constant 200 : index
    %267 = vector.load %arg2[%c0_403, %c0_404, %c200] : memref<1x16x324xbf16, #tpu.memory_space<vmem>>, vector<1x16x16xbf16>
    %268 = vector.shape_cast %267 : vector<1x16x16xbf16> to vector<16x16xbf16>
    %c128_405 = arith.constant 128 : index
    %c144_406 = arith.constant 144 : index
    %269 = vector.load %arg6[%c128_405, %c144_406] : memref<144x256xbf16, #tpu.memory_space<vmem>>, vector<16x16xbf16>
    tpu.vector_store %arg6[%c128_405, %c144_406], %268 {strides = array<i32>} : memref<144x256xbf16, #tpu.memory_space<vmem>>, vector<16x16xbf16>,
    %c0_407 = arith.constant 0 : index
    %c0_408 = arith.constant 0 : index
    %c180_409 = arith.constant 180 : index
    %270 = vector.load %arg2[%c0_407, %c0_408, %c180_409] : memref<1x16x324xbf16, #tpu.memory_space<vmem>>, vector<1x16x16xbf16>
    %271 = vector.shape_cast %270 : vector<1x16x16xbf16> to vector<16x16xbf16>
    %c0_410 = arith.constant 0 : index
    %c160 = arith.constant 160 : index
    %272 = vector.load %arg6[%c0_410, %c160] : memref<144x256xbf16, #tpu.memory_space<vmem>>, vector<16x16xbf16>
    tpu.vector_store %arg6[%c0_410, %c160], %271 {strides = array<i32>} : memref<144x256xbf16, #tpu.memory_space<vmem>>, vector<16x16xbf16>,
    %c0_411 = arith.constant 0 : index
    %c0_412 = arith.constant 0 : index
    %c181_413 = arith.constant 181 : index
    %273 = vector.load %arg2[%c0_411, %c0_412, %c181_413] : memref<1x16x324xbf16, #tpu.memory_space<vmem>>, vector<1x16x16xbf16>
    %274 = vector.shape_cast %273 : vector<1x16x16xbf16> to vector<16x16xbf16>
    %c16_414 = arith.constant 16 : index
    %c160_415 = arith.constant 160 : index
    %275 = vector.load %arg6[%c16_414, %c160_415] : memref<144x256xbf16, #tpu.memory_space<vmem>>, vector<16x16xbf16>
    tpu.vector_store %arg6[%c16_414, %c160_415], %274 {strides = array<i32>} : memref<144x256xbf16, #tpu.memory_space<vmem>>, vector<16x16xbf16>,
    %c0_416 = arith.constant 0 : index
    %c0_417 = arith.constant 0 : index
    %c182_418 = arith.constant 182 : index
    %276 = vector.load %arg2[%c0_416, %c0_417, %c182_418] : memref<1x16x324xbf16, #tpu.memory_space<vmem>>, vector<1x16x16xbf16>
    %277 = vector.shape_cast %276 : vector<1x16x16xbf16> to vector<16x16xbf16>
    %c32_419 = arith.constant 32 : index
    %c160_420 = arith.constant 160 : index
    %278 = vector.load %arg6[%c32_419, %c160_420] : memref<144x256xbf16, #tpu.memory_space<vmem>>, vector<16x16xbf16>
    tpu.vector_store %arg6[%c32_419, %c160_420], %277 {strides = array<i32>} : memref<144x256xbf16, #tpu.memory_space<vmem>>, vector<16x16xbf16>,
    %c0_421 = arith.constant 0 : index
    %c0_422 = arith.constant 0 : index
    %c198_423 = arith.constant 198 : index
    %279 = vector.load %arg2[%c0_421, %c0_422, %c198_423] : memref<1x16x324xbf16, #tpu.memory_space<vmem>>, vector<1x16x16xbf16>
    %280 = vector.shape_cast %279 : vector<1x16x16xbf16> to vector<16x16xbf16>
    %c48_424 = arith.constant 48 : index
    %c160_425 = arith.constant 160 : index
    %281 = vector.load %arg6[%c48_424, %c160_425] : memref<144x256xbf16, #tpu.memory_space<vmem>>, vector<16x16xbf16>
    tpu.vector_store %arg6[%c48_424, %c160_425], %280 {strides = array<i32>} : memref<144x256xbf16, #tpu.memory_space<vmem>>, vector<16x16xbf16>,
    %c0_426 = arith.constant 0 : index
    %c0_427 = arith.constant 0 : index
    %c199_428 = arith.constant 199 : index
    %282 = vector.load %arg2[%c0_426, %c0_427, %c199_428] : memref<1x16x324xbf16, #tpu.memory_space<vmem>>, vector<1x16x16xbf16>
    %283 = vector.shape_cast %282 : vector<1x16x16xbf16> to vector<16x16xbf16>
    %c64_429 = arith.constant 64 : index
    %c160_430 = arith.constant 160 : index
    %284 = vector.load %arg6[%c64_429, %c160_430] : memref<144x256xbf16, #tpu.memory_space<vmem>>, vector<16x16xbf16>
    tpu.vector_store %arg6[%c64_429, %c160_430], %283 {strides = array<i32>} : memref<144x256xbf16, #tpu.memory_space<vmem>>, vector<16x16xbf16>,
    %c0_431 = arith.constant 0 : index
    %c0_432 = arith.constant 0 : index
    %c200_433 = arith.constant 200 : index
    %285 = vector.load %arg2[%c0_431, %c0_432, %c200_433] : memref<1x16x324xbf16, #tpu.memory_space<vmem>>, vector<1x16x16xbf16>
    %286 = vector.shape_cast %285 : vector<1x16x16xbf16> to vector<16x16xbf16>
    %c80_434 = arith.constant 80 : index
    %c160_435 = arith.constant 160 : index
    %287 = vector.load %arg6[%c80_434, %c160_435] : memref<144x256xbf16, #tpu.memory_space<vmem>>, vector<16x16xbf16>
    tpu.vector_store %arg6[%c80_434, %c160_435], %286 {strides = array<i32>} : memref<144x256xbf16, #tpu.memory_space<vmem>>, vector<16x16xbf16>,
    %c0_436 = arith.constant 0 : index
    %c0_437 = arith.constant 0 : index
    %c216 = arith.constant 216 : index
    %288 = vector.load %arg2[%c0_436, %c0_437, %c216] : memref<1x16x324xbf16, #tpu.memory_space<vmem>>, vector<1x16x16xbf16>
    %289 = vector.shape_cast %288 : vector<1x16x16xbf16> to vector<16x16xbf16>
    %c96_438 = arith.constant 96 : index
    %c160_439 = arith.constant 160 : index
    %290 = vector.load %arg6[%c96_438, %c160_439] : memref<144x256xbf16, #tpu.memory_space<vmem>>, vector<16x16xbf16>
    tpu.vector_store %arg6[%c96_438, %c160_439], %289 {strides = array<i32>} : memref<144x256xbf16, #tpu.memory_space<vmem>>, vector<16x16xbf16>,
    %c0_440 = arith.constant 0 : index
    %c0_441 = arith.constant 0 : index
    %c217 = arith.constant 217 : index
    %291 = vector.load %arg2[%c0_440, %c0_441, %c217] : memref<1x16x324xbf16, #tpu.memory_space<vmem>>, vector<1x16x16xbf16>
    %292 = vector.shape_cast %291 : vector<1x16x16xbf16> to vector<16x16xbf16>
    %c112_442 = arith.constant 112 : index
    %c160_443 = arith.constant 160 : index
    %293 = vector.load %arg6[%c112_442, %c160_443] : memref<144x256xbf16, #tpu.memory_space<vmem>>, vector<16x16xbf16>
    tpu.vector_store %arg6[%c112_442, %c160_443], %292 {strides = array<i32>} : memref<144x256xbf16, #tpu.memory_space<vmem>>, vector<16x16xbf16>,
    %c0_444 = arith.constant 0 : index
    %c0_445 = arith.constant 0 : index
    %c218 = arith.constant 218 : index
    %294 = vector.load %arg2[%c0_444, %c0_445, %c218] : memref<1x16x324xbf16, #tpu.memory_space<vmem>>, vector<1x16x16xbf16>
    %295 = vector.shape_cast %294 : vector<1x16x16xbf16> to vector<16x16xbf16>
    %c128_446 = arith.constant 128 : index
    %c160_447 = arith.constant 160 : index
    %296 = vector.load %arg6[%c128_446, %c160_447] : memref<144x256xbf16, #tpu.memory_space<vmem>>, vector<16x16xbf16>
    tpu.vector_store %arg6[%c128_446, %c160_447], %295 {strides = array<i32>} : memref<144x256xbf16, #tpu.memory_space<vmem>>, vector<16x16xbf16>,
    %c0_448 = arith.constant 0 : index
    %c0_449 = arith.constant 0 : index
    %c198_450 = arith.constant 198 : index
    %297 = vector.load %arg2[%c0_448, %c0_449, %c198_450] : memref<1x16x324xbf16, #tpu.memory_space<vmem>>, vector<1x16x16xbf16>
    %298 = vector.shape_cast %297 : vector<1x16x16xbf16> to vector<16x16xbf16>
    %c0_451 = arith.constant 0 : index
    %c176 = arith.constant 176 : index
    %299 = vector.load %arg6[%c0_451, %c176] : memref<144x256xbf16, #tpu.memory_space<vmem>>, vector<16x16xbf16>
    tpu.vector_store %arg6[%c0_451, %c176], %298 {strides = array<i32>} : memref<144x256xbf16, #tpu.memory_space<vmem>>, vector<16x16xbf16>,
    %c0_452 = arith.constant 0 : index
    %c0_453 = arith.constant 0 : index
    %c199_454 = arith.constant 199 : index
    %300 = vector.load %arg2[%c0_452, %c0_453, %c199_454] : memref<1x16x324xbf16, #tpu.memory_space<vmem>>, vector<1x16x16xbf16>
    %301 = vector.shape_cast %300 : vector<1x16x16xbf16> to vector<16x16xbf16>
    %c16_455 = arith.constant 16 : index
    %c176_456 = arith.constant 176 : index
    %302 = vector.load %arg6[%c16_455, %c176_456] : memref<144x256xbf16, #tpu.memory_space<vmem>>, vector<16x16xbf16>
    tpu.vector_store %arg6[%c16_455, %c176_456], %301 {strides = array<i32>} : memref<144x256xbf16, #tpu.memory_space<vmem>>, vector<16x16xbf16>,
    %c0_457 = arith.constant 0 : index
    %c0_458 = arith.constant 0 : index
    %c200_459 = arith.constant 200 : index
    %303 = vector.load %arg2[%c0_457, %c0_458, %c200_459] : memref<1x16x324xbf16, #tpu.memory_space<vmem>>, vector<1x16x16xbf16>
    %304 = vector.shape_cast %303 : vector<1x16x16xbf16> to vector<16x16xbf16>
    %c32_460 = arith.constant 32 : index
    %c176_461 = arith.constant 176 : index
    %305 = vector.load %arg6[%c32_460, %c176_461] : memref<144x256xbf16, #tpu.memory_space<vmem>>, vector<16x16xbf16>
    tpu.vector_store %arg6[%c32_460, %c176_461], %304 {strides = array<i32>} : memref<144x256xbf16, #tpu.memory_space<vmem>>, vector<16x16xbf16>,
    %c0_462 = arith.constant 0 : index
    %c0_463 = arith.constant 0 : index
    %c216_464 = arith.constant 216 : index
    %306 = vector.load %arg2[%c0_462, %c0_463, %c216_464] : memref<1x16x324xbf16, #tpu.memory_space<vmem>>, vector<1x16x16xbf16>
    %307 = vector.shape_cast %306 : vector<1x16x16xbf16> to vector<16x16xbf16>
    %c48_465 = arith.constant 48 : index
    %c176_466 = arith.constant 176 : index
    %308 = vector.load %arg6[%c48_465, %c176_466] : memref<144x256xbf16, #tpu.memory_space<vmem>>, vector<16x16xbf16>
    tpu.vector_store %arg6[%c48_465, %c176_466], %307 {strides = array<i32>} : memref<144x256xbf16, #tpu.memory_space<vmem>>, vector<16x16xbf16>,
    %c0_467 = arith.constant 0 : index
    %c0_468 = arith.constant 0 : index
    %c217_469 = arith.constant 217 : index
    %309 = vector.load %arg2[%c0_467, %c0_468, %c217_469] : memref<1x16x324xbf16, #tpu.memory_space<vmem>>, vector<1x16x16xbf16>
    %310 = vector.shape_cast %309 : vector<1x16x16xbf16> to vector<16x16xbf16>
    %c64_470 = arith.constant 64 : index
    %c176_471 = arith.constant 176 : index
    %311 = vector.load %arg6[%c64_470, %c176_471] : memref<144x256xbf16, #tpu.memory_space<vmem>>, vector<16x16xbf16>
    tpu.vector_store %arg6[%c64_470, %c176_471], %310 {strides = array<i32>} : memref<144x256xbf16, #tpu.memory_space<vmem>>, vector<16x16xbf16>,
    %c0_472 = arith.constant 0 : index
    %c0_473 = arith.constant 0 : index
    %c218_474 = arith.constant 218 : index
    %312 = vector.load %arg2[%c0_472, %c0_473, %c218_474] : memref<1x16x324xbf16, #tpu.memory_space<vmem>>, vector<1x16x16xbf16>
    %313 = vector.shape_cast %312 : vector<1x16x16xbf16> to vector<16x16xbf16>
    %c80_475 = arith.constant 80 : index
    %c176_476 = arith.constant 176 : index
    %314 = vector.load %arg6[%c80_475, %c176_476] : memref<144x256xbf16, #tpu.memory_space<vmem>>, vector<16x16xbf16>
    tpu.vector_store %arg6[%c80_475, %c176_476], %313 {strides = array<i32>} : memref<144x256xbf16, #tpu.memory_space<vmem>>, vector<16x16xbf16>,
    %c0_477 = arith.constant 0 : index
    %c0_478 = arith.constant 0 : index
    %c234 = arith.constant 234 : index
    %315 = vector.load %arg2[%c0_477, %c0_478, %c234] : memref<1x16x324xbf16, #tpu.memory_space<vmem>>, vector<1x16x16xbf16>
    %316 = vector.shape_cast %315 : vector<1x16x16xbf16> to vector<16x16xbf16>
    %c96_479 = arith.constant 96 : index
    %c176_480 = arith.constant 176 : index
    %317 = vector.load %arg6[%c96_479, %c176_480] : memref<144x256xbf16, #tpu.memory_space<vmem>>, vector<16x16xbf16>
    tpu.vector_store %arg6[%c96_479, %c176_480], %316 {strides = array<i32>} : memref<144x256xbf16, #tpu.memory_space<vmem>>, vector<16x16xbf16>,
    %c0_481 = arith.constant 0 : index
    %c0_482 = arith.constant 0 : index
    %c235 = arith.constant 235 : index
    %318 = vector.load %arg2[%c0_481, %c0_482, %c235] : memref<1x16x324xbf16, #tpu.memory_space<vmem>>, vector<1x16x16xbf16>
    %319 = vector.shape_cast %318 : vector<1x16x16xbf16> to vector<16x16xbf16>
    %c112_483 = arith.constant 112 : index
    %c176_484 = arith.constant 176 : index
    %320 = vector.load %arg6[%c112_483, %c176_484] : memref<144x256xbf16, #tpu.memory_space<vmem>>, vector<16x16xbf16>
    tpu.vector_store %arg6[%c112_483, %c176_484], %319 {strides = array<i32>} : memref<144x256xbf16, #tpu.memory_space<vmem>>, vector<16x16xbf16>,
    %c0_485 = arith.constant 0 : index
    %c0_486 = arith.constant 0 : index
    %c236 = arith.constant 236 : index
    %321 = vector.load %arg2[%c0_485, %c0_486, %c236] : memref<1x16x324xbf16, #tpu.memory_space<vmem>>, vector<1x16x16xbf16>
    %322 = vector.shape_cast %321 : vector<1x16x16xbf16> to vector<16x16xbf16>
    %c128_487 = arith.constant 128 : index
    %c176_488 = arith.constant 176 : index
    %323 = vector.load %arg6[%c128_487, %c176_488] : memref<144x256xbf16, #tpu.memory_space<vmem>>, vector<16x16xbf16>
    tpu.vector_store %arg6[%c128_487, %c176_488], %322 {strides = array<i32>} : memref<144x256xbf16, #tpu.memory_space<vmem>>, vector<16x16xbf16>,
    %c0_489 = arith.constant 0 : index
    %c0_490 = arith.constant 0 : index
    %c216_491 = arith.constant 216 : index
    %324 = vector.load %arg2[%c0_489, %c0_490, %c216_491] : memref<1x16x324xbf16, #tpu.memory_space<vmem>>, vector<1x16x16xbf16>
    %325 = vector.shape_cast %324 : vector<1x16x16xbf16> to vector<16x16xbf16>
    %c0_492 = arith.constant 0 : index
    %c192 = arith.constant 192 : index
    %326 = vector.load %arg6[%c0_492, %c192] : memref<144x256xbf16, #tpu.memory_space<vmem>>, vector<16x16xbf16>
    tpu.vector_store %arg6[%c0_492, %c192], %325 {strides = array<i32>} : memref<144x256xbf16, #tpu.memory_space<vmem>>, vector<16x16xbf16>,
    %c0_493 = arith.constant 0 : index
    %c0_494 = arith.constant 0 : index
    %c217_495 = arith.constant 217 : index
    %327 = vector.load %arg2[%c0_493, %c0_494, %c217_495] : memref<1x16x324xbf16, #tpu.memory_space<vmem>>, vector<1x16x16xbf16>
    %328 = vector.shape_cast %327 : vector<1x16x16xbf16> to vector<16x16xbf16>
    %c16_496 = arith.constant 16 : index
    %c192_497 = arith.constant 192 : index
    %329 = vector.load %arg6[%c16_496, %c192_497] : memref<144x256xbf16, #tpu.memory_space<vmem>>, vector<16x16xbf16>
    tpu.vector_store %arg6[%c16_496, %c192_497], %328 {strides = array<i32>} : memref<144x256xbf16, #tpu.memory_space<vmem>>, vector<16x16xbf16>,
    %c0_498 = arith.constant 0 : index
    %c0_499 = arith.constant 0 : index
    %c218_500 = arith.constant 218 : index
    %330 = vector.load %arg2[%c0_498, %c0_499, %c218_500] : memref<1x16x324xbf16, #tpu.memory_space<vmem>>, vector<1x16x16xbf16>
    %331 = vector.shape_cast %330 : vector<1x16x16xbf16> to vector<16x16xbf16>
    %c32_501 = arith.constant 32 : index
    %c192_502 = arith.constant 192 : index
    %332 = vector.load %arg6[%c32_501, %c192_502] : memref<144x256xbf16, #tpu.memory_space<vmem>>, vector<16x16xbf16>
    tpu.vector_store %arg6[%c32_501, %c192_502], %331 {strides = array<i32>} : memref<144x256xbf16, #tpu.memory_space<vmem>>, vector<16x16xbf16>,
    %c0_503 = arith.constant 0 : index
    %c0_504 = arith.constant 0 : index
    %c234_505 = arith.constant 234 : index
    %333 = vector.load %arg2[%c0_503, %c0_504, %c234_505] : memref<1x16x324xbf16, #tpu.memory_space<vmem>>, vector<1x16x16xbf16>
    %334 = vector.shape_cast %333 : vector<1x16x16xbf16> to vector<16x16xbf16>
    %c48_506 = arith.constant 48 : index
    %c192_507 = arith.constant 192 : index
    %335 = vector.load %arg6[%c48_506, %c192_507] : memref<144x256xbf16, #tpu.memory_space<vmem>>, vector<16x16xbf16>
    tpu.vector_store %arg6[%c48_506, %c192_507], %334 {strides = array<i32>} : memref<144x256xbf16, #tpu.memory_space<vmem>>, vector<16x16xbf16>,
    %c0_508 = arith.constant 0 : index
    %c0_509 = arith.constant 0 : index
    %c235_510 = arith.constant 235 : index
    %336 = vector.load %arg2[%c0_508, %c0_509, %c235_510] : memref<1x16x324xbf16, #tpu.memory_space<vmem>>, vector<1x16x16xbf16>
    %337 = vector.shape_cast %336 : vector<1x16x16xbf16> to vector<16x16xbf16>
    %c64_511 = arith.constant 64 : index
    %c192_512 = arith.constant 192 : index
    %338 = vector.load %arg6[%c64_511, %c192_512] : memref<144x256xbf16, #tpu.memory_space<vmem>>, vector<16x16xbf16>
    tpu.vector_store %arg6[%c64_511, %c192_512], %337 {strides = array<i32>} : memref<144x256xbf16, #tpu.memory_space<vmem>>, vector<16x16xbf16>,
    %c0_513 = arith.constant 0 : index
    %c0_514 = arith.constant 0 : index
    %c236_515 = arith.constant 236 : index
    %339 = vector.load %arg2[%c0_513, %c0_514, %c236_515] : memref<1x16x324xbf16, #tpu.memory_space<vmem>>, vector<1x16x16xbf16>
    %340 = vector.shape_cast %339 : vector<1x16x16xbf16> to vector<16x16xbf16>
    %c80_516 = arith.constant 80 : index
    %c192_517 = arith.constant 192 : index
    %341 = vector.load %arg6[%c80_516, %c192_517] : memref<144x256xbf16, #tpu.memory_space<vmem>>, vector<16x16xbf16>
    tpu.vector_store %arg6[%c80_516, %c192_517], %340 {strides = array<i32>} : memref<144x256xbf16, #tpu.memory_space<vmem>>, vector<16x16xbf16>,
    %c0_518 = arith.constant 0 : index
    %c0_519 = arith.constant 0 : index
    %c252 = arith.constant 252 : index
    %342 = vector.load %arg2[%c0_518, %c0_519, %c252] : memref<1x16x324xbf16, #tpu.memory_space<vmem>>, vector<1x16x16xbf16>
    %343 = vector.shape_cast %342 : vector<1x16x16xbf16> to vector<16x16xbf16>
    %c96_520 = arith.constant 96 : index
    %c192_521 = arith.constant 192 : index
    %344 = vector.load %arg6[%c96_520, %c192_521] : memref<144x256xbf16, #tpu.memory_space<vmem>>, vector<16x16xbf16>
    tpu.vector_store %arg6[%c96_520, %c192_521], %343 {strides = array<i32>} : memref<144x256xbf16, #tpu.memory_space<vmem>>, vector<16x16xbf16>,
    %c0_522 = arith.constant 0 : index
    %c0_523 = arith.constant 0 : index
    %c253 = arith.constant 253 : index
    %345 = vector.load %arg2[%c0_522, %c0_523, %c253] : memref<1x16x324xbf16, #tpu.memory_space<vmem>>, vector<1x16x16xbf16>
    %346 = vector.shape_cast %345 : vector<1x16x16xbf16> to vector<16x16xbf16>
    %c112_524 = arith.constant 112 : index
    %c192_525 = arith.constant 192 : index
    %347 = vector.load %arg6[%c112_524, %c192_525] : memref<144x256xbf16, #tpu.memory_space<vmem>>, vector<16x16xbf16>
    tpu.vector_store %arg6[%c112_524, %c192_525], %346 {strides = array<i32>} : memref<144x256xbf16, #tpu.memory_space<vmem>>, vector<16x16xbf16>,
    %c0_526 = arith.constant 0 : index
    %c0_527 = arith.constant 0 : index
    %c254 = arith.constant 254 : index
    %348 = vector.load %arg2[%c0_526, %c0_527, %c254] : memref<1x16x324xbf16, #tpu.memory_space<vmem>>, vector<1x16x16xbf16>
    %349 = vector.shape_cast %348 : vector<1x16x16xbf16> to vector<16x16xbf16>
    %c128_528 = arith.constant 128 : index
    %c192_529 = arith.constant 192 : index
    %350 = vector.load %arg6[%c128_528, %c192_529] : memref<144x256xbf16, #tpu.memory_space<vmem>>, vector<16x16xbf16>
    tpu.vector_store %arg6[%c128_528, %c192_529], %349 {strides = array<i32>} : memref<144x256xbf16, #tpu.memory_space<vmem>>, vector<16x16xbf16>,
    %c0_530 = arith.constant 0 : index
    %c0_531 = arith.constant 0 : index
    %c234_532 = arith.constant 234 : index
    %351 = vector.load %arg2[%c0_530, %c0_531, %c234_532] : memref<1x16x324xbf16, #tpu.memory_space<vmem>>, vector<1x16x16xbf16>
    %352 = vector.shape_cast %351 : vector<1x16x16xbf16> to vector<16x16xbf16>
    %c0_533 = arith.constant 0 : index
    %c208 = arith.constant 208 : index
    %353 = vector.load %arg6[%c0_533, %c208] : memref<144x256xbf16, #tpu.memory_space<vmem>>, vector<16x16xbf16>
    tpu.vector_store %arg6[%c0_533, %c208], %352 {strides = array<i32>} : memref<144x256xbf16, #tpu.memory_space<vmem>>, vector<16x16xbf16>,
    %c0_534 = arith.constant 0 : index
    %c0_535 = arith.constant 0 : index
    %c235_536 = arith.constant 235 : index
    %354 = vector.load %arg2[%c0_534, %c0_535, %c235_536] : memref<1x16x324xbf16, #tpu.memory_space<vmem>>, vector<1x16x16xbf16>
    %355 = vector.shape_cast %354 : vector<1x16x16xbf16> to vector<16x16xbf16>
    %c16_537 = arith.constant 16 : index
    %c208_538 = arith.constant 208 : index
    %356 = vector.load %arg6[%c16_537, %c208_538] : memref<144x256xbf16, #tpu.memory_space<vmem>>, vector<16x16xbf16>
    tpu.vector_store %arg6[%c16_537, %c208_538], %355 {strides = array<i32>} : memref<144x256xbf16, #tpu.memory_space<vmem>>, vector<16x16xbf16>,
    %c0_539 = arith.constant 0 : index
    %c0_540 = arith.constant 0 : index
    %c236_541 = arith.constant 236 : index
    %357 = vector.load %arg2[%c0_539, %c0_540, %c236_541] : memref<1x16x324xbf16, #tpu.memory_space<vmem>>, vector<1x16x16xbf16>
    %358 = vector.shape_cast %357 : vector<1x16x16xbf16> to vector<16x16xbf16>
    %c32_542 = arith.constant 32 : index
    %c208_543 = arith.constant 208 : index
    %359 = vector.load %arg6[%c32_542, %c208_543] : memref<144x256xbf16, #tpu.memory_space<vmem>>, vector<16x16xbf16>
    tpu.vector_store %arg6[%c32_542, %c208_543], %358 {strides = array<i32>} : memref<144x256xbf16, #tpu.memory_space<vmem>>, vector<16x16xbf16>,
    %c0_544 = arith.constant 0 : index
    %c0_545 = arith.constant 0 : index
    %c252_546 = arith.constant 252 : index
    %360 = vector.load %arg2[%c0_544, %c0_545, %c252_546] : memref<1x16x324xbf16, #tpu.memory_space<vmem>>, vector<1x16x16xbf16>
    %361 = vector.shape_cast %360 : vector<1x16x16xbf16> to vector<16x16xbf16>
    %c48_547 = arith.constant 48 : index
    %c208_548 = arith.constant 208 : index
    %362 = vector.load %arg6[%c48_547, %c208_548] : memref<144x256xbf16, #tpu.memory_space<vmem>>, vector<16x16xbf16>
    tpu.vector_store %arg6[%c48_547, %c208_548], %361 {strides = array<i32>} : memref<144x256xbf16, #tpu.memory_space<vmem>>, vector<16x16xbf16>,
    %c0_549 = arith.constant 0 : index
    %c0_550 = arith.constant 0 : index
    %c253_551 = arith.constant 253 : index
    %363 = vector.load %arg2[%c0_549, %c0_550, %c253_551] : memref<1x16x324xbf16, #tpu.memory_space<vmem>>, vector<1x16x16xbf16>
    %364 = vector.shape_cast %363 : vector<1x16x16xbf16> to vector<16x16xbf16>
    %c64_552 = arith.constant 64 : index
    %c208_553 = arith.constant 208 : index
    %365 = vector.load %arg6[%c64_552, %c208_553] : memref<144x256xbf16, #tpu.memory_space<vmem>>, vector<16x16xbf16>
    tpu.vector_store %arg6[%c64_552, %c208_553], %364 {strides = array<i32>} : memref<144x256xbf16, #tpu.memory_space<vmem>>, vector<16x16xbf16>,
    %c0_554 = arith.constant 0 : index
    %c0_555 = arith.constant 0 : index
    %c254_556 = arith.constant 254 : index
    %366 = vector.load %arg2[%c0_554, %c0_555, %c254_556] : memref<1x16x324xbf16, #tpu.memory_space<vmem>>, vector<1x16x16xbf16>
    %367 = vector.shape_cast %366 : vector<1x16x16xbf16> to vector<16x16xbf16>
    %c80_557 = arith.constant 80 : index
    %c208_558 = arith.constant 208 : index
    %368 = vector.load %arg6[%c80_557, %c208_558] : memref<144x256xbf16, #tpu.memory_space<vmem>>, vector<16x16xbf16>
    tpu.vector_store %arg6[%c80_557, %c208_558], %367 {strides = array<i32>} : memref<144x256xbf16, #tpu.memory_space<vmem>>, vector<16x16xbf16>,
    %c0_559 = arith.constant 0 : index
    %c0_560 = arith.constant 0 : index
    %c270 = arith.constant 270 : index
    %369 = vector.load %arg2[%c0_559, %c0_560, %c270] : memref<1x16x324xbf16, #tpu.memory_space<vmem>>, vector<1x16x16xbf16>
    %370 = vector.shape_cast %369 : vector<1x16x16xbf16> to vector<16x16xbf16>
    %c96_561 = arith.constant 96 : index
    %c208_562 = arith.constant 208 : index
    %371 = vector.load %arg6[%c96_561, %c208_562] : memref<144x256xbf16, #tpu.memory_space<vmem>>, vector<16x16xbf16>
    tpu.vector_store %arg6[%c96_561, %c208_562], %370 {strides = array<i32>} : memref<144x256xbf16, #tpu.memory_space<vmem>>, vector<16x16xbf16>,
    %c0_563 = arith.constant 0 : index
    %c0_564 = arith.constant 0 : index
    %c271 = arith.constant 271 : index
    %372 = vector.load %arg2[%c0_563, %c0_564, %c271] : memref<1x16x324xbf16, #tpu.memory_space<vmem>>, vector<1x16x16xbf16>
    %373 = vector.shape_cast %372 : vector<1x16x16xbf16> to vector<16x16xbf16>
    %c112_565 = arith.constant 112 : index
    %c208_566 = arith.constant 208 : index
    %374 = vector.load %arg6[%c112_565, %c208_566] : memref<144x256xbf16, #tpu.memory_space<vmem>>, vector<16x16xbf16>
    tpu.vector_store %arg6[%c112_565, %c208_566], %373 {strides = array<i32>} : memref<144x256xbf16, #tpu.memory_space<vmem>>, vector<16x16xbf16>,
    %c0_567 = arith.constant 0 : index
    %c0_568 = arith.constant 0 : index
    %c272 = arith.constant 272 : index
    %375 = vector.load %arg2[%c0_567, %c0_568, %c272] : memref<1x16x324xbf16, #tpu.memory_space<vmem>>, vector<1x16x16xbf16>
    %376 = vector.shape_cast %375 : vector<1x16x16xbf16> to vector<16x16xbf16>
    %c128_569 = arith.constant 128 : index
    %c208_570 = arith.constant 208 : index
    %377 = vector.load %arg6[%c128_569, %c208_570] : memref<144x256xbf16, #tpu.memory_space<vmem>>, vector<16x16xbf16>
    tpu.vector_store %arg6[%c128_569, %c208_570], %376 {strides = array<i32>} : memref<144x256xbf16, #tpu.memory_space<vmem>>, vector<16x16xbf16>,
    %c0_571 = arith.constant 0 : index
    %c0_572 = arith.constant 0 : index
    %c252_573 = arith.constant 252 : index
    %378 = vector.load %arg2[%c0_571, %c0_572, %c252_573] : memref<1x16x324xbf16, #tpu.memory_space<vmem>>, vector<1x16x16xbf16>
    %379 = vector.shape_cast %378 : vector<1x16x16xbf16> to vector<16x16xbf16>
    %c0_574 = arith.constant 0 : index
    %c224 = arith.constant 224 : index
    %380 = vector.load %arg6[%c0_574, %c224] : memref<144x256xbf16, #tpu.memory_space<vmem>>, vector<16x16xbf16>
    tpu.vector_store %arg6[%c0_574, %c224], %379 {strides = array<i32>} : memref<144x256xbf16, #tpu.memory_space<vmem>>, vector<16x16xbf16>,
    %c0_575 = arith.constant 0 : index
    %c0_576 = arith.constant 0 : index
    %c253_577 = arith.constant 253 : index
    %381 = vector.load %arg2[%c0_575, %c0_576, %c253_577] : memref<1x16x324xbf16, #tpu.memory_space<vmem>>, vector<1x16x16xbf16>
    %382 = vector.shape_cast %381 : vector<1x16x16xbf16> to vector<16x16xbf16>
    %c16_578 = arith.constant 16 : index
    %c224_579 = arith.constant 224 : index
    %383 = vector.load %arg6[%c16_578, %c224_579] : memref<144x256xbf16, #tpu.memory_space<vmem>>, vector<16x16xbf16>
    tpu.vector_store %arg6[%c16_578, %c224_579], %382 {strides = array<i32>} : memref<144x256xbf16, #tpu.memory_space<vmem>>, vector<16x16xbf16>,
    %c0_580 = arith.constant 0 : index
    %c0_581 = arith.constant 0 : index
    %c254_582 = arith.constant 254 : index
    %384 = vector.load %arg2[%c0_580, %c0_581, %c254_582] : memref<1x16x324xbf16, #tpu.memory_space<vmem>>, vector<1x16x16xbf16>
    %385 = vector.shape_cast %384 : vector<1x16x16xbf16> to vector<16x16xbf16>
    %c32_583 = arith.constant 32 : index
    %c224_584 = arith.constant 224 : index
    %386 = vector.load %arg6[%c32_583, %c224_584] : memref<144x256xbf16, #tpu.memory_space<vmem>>, vector<16x16xbf16>
    tpu.vector_store %arg6[%c32_583, %c224_584], %385 {strides = array<i32>} : memref<144x256xbf16, #tpu.memory_space<vmem>>, vector<16x16xbf16>,
    %c0_585 = arith.constant 0 : index
    %c0_586 = arith.constant 0 : index
    %c270_587 = arith.constant 270 : index
    %387 = vector.load %arg2[%c0_585, %c0_586, %c270_587] : memref<1x16x324xbf16, #tpu.memory_space<vmem>>, vector<1x16x16xbf16>
    %388 = vector.shape_cast %387 : vector<1x16x16xbf16> to vector<16x16xbf16>
    %c48_588 = arith.constant 48 : index
    %c224_589 = arith.constant 224 : index
    %389 = vector.load %arg6[%c48_588, %c224_589] : memref<144x256xbf16, #tpu.memory_space<vmem>>, vector<16x16xbf16>
    tpu.vector_store %arg6[%c48_588, %c224_589], %388 {strides = array<i32>} : memref<144x256xbf16, #tpu.memory_space<vmem>>, vector<16x16xbf16>,
    %c0_590 = arith.constant 0 : index
    %c0_591 = arith.constant 0 : index
    %c271_592 = arith.constant 271 : index
    %390 = vector.load %arg2[%c0_590, %c0_591, %c271_592] : memref<1x16x324xbf16, #tpu.memory_space<vmem>>, vector<1x16x16xbf16>
    %391 = vector.shape_cast %390 : vector<1x16x16xbf16> to vector<16x16xbf16>
    %c64_593 = arith.constant 64 : index
    %c224_594 = arith.constant 224 : index
    %392 = vector.load %arg6[%c64_593, %c224_594] : memref<144x256xbf16, #tpu.memory_space<vmem>>, vector<16x16xbf16>
    tpu.vector_store %arg6[%c64_593, %c224_594], %391 {strides = array<i32>} : memref<144x256xbf16, #tpu.memory_space<vmem>>, vector<16x16xbf16>,
    %c0_595 = arith.constant 0 : index
    %c0_596 = arith.constant 0 : index
    %c272_597 = arith.constant 272 : index
    %393 = vector.load %arg2[%c0_595, %c0_596, %c272_597] : memref<1x16x324xbf16, #tpu.memory_space<vmem>>, vector<1x16x16xbf16>
    %394 = vector.shape_cast %393 : vector<1x16x16xbf16> to vector<16x16xbf16>
    %c80_598 = arith.constant 80 : index
    %c224_599 = arith.constant 224 : index
    %395 = vector.load %arg6[%c80_598, %c224_599] : memref<144x256xbf16, #tpu.memory_space<vmem>>, vector<16x16xbf16>
    tpu.vector_store %arg6[%c80_598, %c224_599], %394 {strides = array<i32>} : memref<144x256xbf16, #tpu.memory_space<vmem>>, vector<16x16xbf16>,
    %c0_600 = arith.constant 0 : index
    %c0_601 = arith.constant 0 : index
    %c288 = arith.constant 288 : index
    %396 = vector.load %arg2[%c0_600, %c0_601, %c288] : memref<1x16x324xbf16, #tpu.memory_space<vmem>>, vector<1x16x16xbf16>
    %397 = vector.shape_cast %396 : vector<1x16x16xbf16> to vector<16x16xbf16>
    %c96_602 = arith.constant 96 : index
    %c224_603 = arith.constant 224 : index
    %398 = vector.load %arg6[%c96_602, %c224_603] : memref<144x256xbf16, #tpu.memory_space<vmem>>, vector<16x16xbf16>
    tpu.vector_store %arg6[%c96_602, %c224_603], %397 {strides = array<i32>} : memref<144x256xbf16, #tpu.memory_space<vmem>>, vector<16x16xbf16>,
    %c0_604 = arith.constant 0 : index
    %c0_605 = arith.constant 0 : index
    %c289 = arith.constant 289 : index
    %399 = vector.load %arg2[%c0_604, %c0_605, %c289] : memref<1x16x324xbf16, #tpu.memory_space<vmem>>, vector<1x16x16xbf16>
    %400 = vector.shape_cast %399 : vector<1x16x16xbf16> to vector<16x16xbf16>
    %c112_606 = arith.constant 112 : index
    %c224_607 = arith.constant 224 : index
    %401 = vector.load %arg6[%c112_606, %c224_607] : memref<144x256xbf16, #tpu.memory_space<vmem>>, vector<16x16xbf16>
    tpu.vector_store %arg6[%c112_606, %c224_607], %400 {strides = array<i32>} : memref<144x256xbf16, #tpu.memory_space<vmem>>, vector<16x16xbf16>,
    %c0_608 = arith.constant 0 : index
    %c0_609 = arith.constant 0 : index
    %c290 = arith.constant 290 : index
    %402 = vector.load %arg2[%c0_608, %c0_609, %c290] : memref<1x16x324xbf16, #tpu.memory_space<vmem>>, vector<1x16x16xbf16>
    %403 = vector.shape_cast %402 : vector<1x16x16xbf16> to vector<16x16xbf16>
    %c128_610 = arith.constant 128 : index
    %c224_611 = arith.constant 224 : index
    %404 = vector.load %arg6[%c128_610, %c224_611] : memref<144x256xbf16, #tpu.memory_space<vmem>>, vector<16x16xbf16>
    tpu.vector_store %arg6[%c128_610, %c224_611], %403 {strides = array<i32>} : memref<144x256xbf16, #tpu.memory_space<vmem>>, vector<16x16xbf16>,
    %c0_612 = arith.constant 0 : index
    %c0_613 = arith.constant 0 : index
    %c270_614 = arith.constant 270 : index
    %405 = vector.load %arg2[%c0_612, %c0_613, %c270_614] : memref<1x16x324xbf16, #tpu.memory_space<vmem>>, vector<1x16x16xbf16>
    %406 = vector.shape_cast %405 : vector<1x16x16xbf16> to vector<16x16xbf16>
    %c0_615 = arith.constant 0 : index
    %c240 = arith.constant 240 : index
    %407 = vector.load %arg6[%c0_615, %c240] : memref<144x256xbf16, #tpu.memory_space<vmem>>, vector<16x16xbf16>
    tpu.vector_store %arg6[%c0_615, %c240], %406 {strides = array<i32>} : memref<144x256xbf16, #tpu.memory_space<vmem>>, vector<16x16xbf16>,
    %c0_616 = arith.constant 0 : index
    %c0_617 = arith.constant 0 : index
    %c271_618 = arith.constant 271 : index
    %408 = vector.load %arg2[%c0_616, %c0_617, %c271_618] : memref<1x16x324xbf16, #tpu.memory_space<vmem>>, vector<1x16x16xbf16>
    %409 = vector.shape_cast %408 : vector<1x16x16xbf16> to vector<16x16xbf16>
    %c16_619 = arith.constant 16 : index
    %c240_620 = arith.constant 240 : index
    %410 = vector.load %arg6[%c16_619, %c240_620] : memref<144x256xbf16, #tpu.memory_space<vmem>>, vector<16x16xbf16>
    tpu.vector_store %arg6[%c16_619, %c240_620], %409 {strides = array<i32>} : memref<144x256xbf16, #tpu.memory_space<vmem>>, vector<16x16xbf16>,
    %c0_621 = arith.constant 0 : index
    %c0_622 = arith.constant 0 : index
    %c272_623 = arith.constant 272 : index
    %411 = vector.load %arg2[%c0_621, %c0_622, %c272_623] : memref<1x16x324xbf16, #tpu.memory_space<vmem>>, vector<1x16x16xbf16>
    %412 = vector.shape_cast %411 : vector<1x16x16xbf16> to vector<16x16xbf16>
    %c32_624 = arith.constant 32 : index
    %c240_625 = arith.constant 240 : index
    %413 = vector.load %arg6[%c32_624, %c240_625] : memref<144x256xbf16, #tpu.memory_space<vmem>>, vector<16x16xbf16>
    tpu.vector_store %arg6[%c32_624, %c240_625], %412 {strides = array<i32>} : memref<144x256xbf16, #tpu.memory_space<vmem>>, vector<16x16xbf16>,
    %c0_626 = arith.constant 0 : index
    %c0_627 = arith.constant 0 : index
    %c288_628 = arith.constant 288 : index
    %414 = vector.load %arg2[%c0_626, %c0_627, %c288_628] : memref<1x16x324xbf16, #tpu.memory_space<vmem>>, vector<1x16x16xbf16>
    %415 = vector.shape_cast %414 : vector<1x16x16xbf16> to vector<16x16xbf16>
    %c48_629 = arith.constant 48 : index
    %c240_630 = arith.constant 240 : index
    %416 = vector.load %arg6[%c48_629, %c240_630] : memref<144x256xbf16, #tpu.memory_space<vmem>>, vector<16x16xbf16>
    tpu.vector_store %arg6[%c48_629, %c240_630], %415 {strides = array<i32>} : memref<144x256xbf16, #tpu.memory_space<vmem>>, vector<16x16xbf16>,
    %c0_631 = arith.constant 0 : index
    %c0_632 = arith.constant 0 : index
    %c289_633 = arith.constant 289 : index
    %417 = vector.load %arg2[%c0_631, %c0_632, %c289_633] : memref<1x16x324xbf16, #tpu.memory_space<vmem>>, vector<1x16x16xbf16>
    %418 = vector.shape_cast %417 : vector<1x16x16xbf16> to vector<16x16xbf16>
    %c64_634 = arith.constant 64 : index
    %c240_635 = arith.constant 240 : index
    %419 = vector.load %arg6[%c64_634, %c240_635] : memref<144x256xbf16, #tpu.memory_space<vmem>>, vector<16x16xbf16>
    tpu.vector_store %arg6[%c64_634, %c240_635], %418 {strides = array<i32>} : memref<144x256xbf16, #tpu.memory_space<vmem>>, vector<16x16xbf16>,
    %c0_636 = arith.constant 0 : index
    %c0_637 = arith.constant 0 : index
    %c290_638 = arith.constant 290 : index
    %420 = vector.load %arg2[%c0_636, %c0_637, %c290_638] : memref<1x16x324xbf16, #tpu.memory_space<vmem>>, vector<1x16x16xbf16>
    %421 = vector.shape_cast %420 : vector<1x16x16xbf16> to vector<16x16xbf16>
    %c80_639 = arith.constant 80 : index
    %c240_640 = arith.constant 240 : index
    %422 = vector.load %arg6[%c80_639, %c240_640] : memref<144x256xbf16, #tpu.memory_space<vmem>>, vector<16x16xbf16>
    tpu.vector_store %arg6[%c80_639, %c240_640], %421 {strides = array<i32>} : memref<144x256xbf16, #tpu.memory_space<vmem>>, vector<16x16xbf16>,
    %c0_641 = arith.constant 0 : index
    %c0_642 = arith.constant 0 : index
    %c306 = arith.constant 306 : index
    %423 = vector.load %arg2[%c0_641, %c0_642, %c306] : memref<1x16x324xbf16, #tpu.memory_space<vmem>>, vector<1x16x16xbf16>
    %424 = vector.shape_cast %423 : vector<1x16x16xbf16> to vector<16x16xbf16>
    %c96_643 = arith.constant 96 : index
    %c240_644 = arith.constant 240 : index
    %425 = vector.load %arg6[%c96_643, %c240_644] : memref<144x256xbf16, #tpu.memory_space<vmem>>, vector<16x16xbf16>
    tpu.vector_store %arg6[%c96_643, %c240_644], %424 {strides = array<i32>} : memref<144x256xbf16, #tpu.memory_space<vmem>>, vector<16x16xbf16>,
    %c0_645 = arith.constant 0 : index
    %c0_646 = arith.constant 0 : index
    %c307 = arith.constant 307 : index
    %426 = vector.load %arg2[%c0_645, %c0_646, %c307] : memref<1x16x324xbf16, #tpu.memory_space<vmem>>, vector<1x16x16xbf16>
    %427 = vector.shape_cast %426 : vector<1x16x16xbf16> to vector<16x16xbf16>
    %c112_647 = arith.constant 112 : index
    %c240_648 = arith.constant 240 : index
    %428 = vector.load %arg6[%c112_647, %c240_648] : memref<144x256xbf16, #tpu.memory_space<vmem>>, vector<16x16xbf16>
    tpu.vector_store %arg6[%c112_647, %c240_648], %427 {strides = array<i32>} : memref<144x256xbf16, #tpu.memory_space<vmem>>, vector<16x16xbf16>,
    %c0_649 = arith.constant 0 : index
    %c0_650 = arith.constant 0 : index
    %c308 = arith.constant 308 : index
    %429 = vector.load %arg2[%c0_649, %c0_650, %c308] : memref<1x16x324xbf16, #tpu.memory_space<vmem>>, vector<1x16x16xbf16>
    %430 = vector.shape_cast %429 : vector<1x16x16xbf16> to vector<16x16xbf16>
    %c128_651 = arith.constant 128 : index
    %c240_652 = arith.constant 240 : index
    %431 = vector.load %arg6[%c128_651, %c240_652] : memref<144x256xbf16, #tpu.memory_space<vmem>>, vector<16x16xbf16>
    tpu.vector_store %arg6[%c128_651, %c240_652], %430 {strides = array<i32>} : memref<144x256xbf16, #tpu.memory_space<vmem>>, vector<16x16xbf16>,
    %c0_653 = arith.constant 0 : index
    %c0_654 = arith.constant 0 : index
    %432 = vector.load %arg3[%c0_653, %c0_654] : memref<8x144xbf16, #tpu.memory_space<vmem>>, vector<8x144xbf16>
    %c0_655 = arith.constant 0 : index
    %c0_656 = arith.constant 0 : index
    %433 = vector.load %arg6[%c0_655, %c0_656] : memref<144x256xbf16, #tpu.memory_space<vmem>>, vector<144x256xbf16>
    %cst = arith.constant dense<0.000000e+00> : vector<8x256xf32>
    %434 = tpu.matmul %432, %433, %cst {dimension_numbers = #tpu.dot_dimension_numbers<[1], [0], [0], [1], [0, 0, 1, 1], [], []>} : vector<8x144xbf16>, vector<144x256xbf16>, vector<8x256xf32> -> vector<8x256xf32>
    %c0_657 = arith.constant 0 : index
    %c0_658 = arith.constant 0 : index
    %435 = vector.load %arg4[%c0_657, %c0_658] : memref<8x1xf32, #tpu.memory_space<vmem>>, vector<8x1xf32>
    %436 = vector.broadcast %435 : vector<8x1xf32> to vector<8x256xf32>
    %437 = arith.addf %434, %436 : vector<8x256xf32>
    %cst_659 = arith.constant 0.000000e+00 : f32
    %438 = vector.broadcast %cst_659 : f32 to vector<8x256xf32>
    %439 = arith.maximumf %437, %438 : vector<8x256xf32>
    %440 = vector.shape_cast %439 : vector<8x256xf32> to vector<1x1x8x256xf32>
    %c0_660 = arith.constant 0 : index
    %c0_661 = arith.constant 0 : index
    %c0_662 = arith.constant 0 : index
    %c0_663 = arith.constant 0 : index
    %441 = vector.load %arg5[%c0_660, %c0_661, %c0_662, %c0_663] : memref<1x1x8x256xf32, #tpu.memory_space<vmem>>, vector<1x1x8x256xf32>
    tpu.vector_store %arg5[%c0_660, %c0_661, %c0_662, %c0_663], %440 {strides = array<i32>} : memref<1x1x8x256xf32, #tpu.memory_space<vmem>>, vector<1x1x8x256xf32>,
    return
  }
  func.func @transform_0(%arg0: i32, %arg1: i32) -> (i32, i32, i32) {
    %c0_i32 = arith.constant 0 : i32
    %c0_i32_0 = arith.constant 0 : i32
    %c0_i32_1 = arith.constant 0 : i32
    return %arg0, %c0_i32, %c0_i32_0 : i32, i32, i32
  }
  func.func @transform_1(%arg0: i32, %arg1: i32) -> (i32, i32) {
    %c0_i32 = arith.constant 0 : i32
    %c0_i32_0 = arith.constant 0 : i32
    %c0_i32_1 = arith.constant 0 : i32
    return %c0_i32, %c0_i32_0 : i32, i32
  }
  func.func @transform_2(%arg0: i32, %arg1: i32) -> (i32, i32) {
    %c0_i32 = arith.constant 0 : i32
    %c0_i32_0 = arith.constant 0 : i32
    %c0_i32_1 = arith.constant 0 : i32
    return %c0_i32, %c0_i32_0 : i32, i32
  }
  func.func @transform_3(%arg0: i32, %arg1: i32) -> (i32, i32, i32, i32) {
    %c0_i32 = arith.constant 0 : i32
    %c0_i32_0 = arith.constant 0 : i32
    %c0_i32_1 = arith.constant 0 : i32
    return %arg0, %arg1, %c0_i32, %c0_i32_0 : i32, i32, i32, i32
  }
}

</mosaic_0001>

<llo_original>
// kernel: tpu_custom_call.1
$region0: #{tpu_custom_call.1}
  #allocation0 [shape = 'u32[]', space=smem, size = 0x4, offset = 0x4, fixed_abs, tag = 'smem constant byte address 0x4 - core index']
  #allocation1 [shape = 'u32[144,128]{1,0:T(1,128)}', space=vmem, size = 0x12000, scoped, tag = 'internal scratch']
  #allocation2 [shape = 'bf16[144,256]{1,0:T(16,128)(2,1)}', space=vmem, size = 0x12000, scoped, tag = 'scratch operand']
  %s0 = inlined_call_operand.hbm [shape: bf16[2,16,324], index: 0, kind: input, shape index: {}]
  %s1 = inlined_call_operand.vmem [shape: bf16[8,144], index: 1, kind: input, shape index: {}]
  %s2 = inlined_call_operand.vmem [shape: f32[8,1], index: 2, kind: input, shape index: {}]
  %s3 = inlined_call_operand.hbm [shape: f32[2,1,8,256], index: 3, kind: output, shape index: {}]
  %s4 = sld [smem:[#allocation0]]
  $region49: #{tpu_custom_call.1} parent=0
    _
  %s6 = ssub.s32 1, %s4
  %s7 = scalar_select 0, %s6, %s4
  $region1: #{tpu_custom_call.1} parent=0
    #allocation3 [shape = 'u8[24576]{0}', space=vmem, size = 0x6000, scoped, tag = 'input window, operand 0']
    #allocation4 [shape = 's32[2]{0}', space=sflag, size = 0x8, scoped, tag = 'scoped memory for tpu_custom_call.1']
    #allocation5 [shape = 's32[2]{0}', space=sflag, size = 0x8, scoped, tag = 'scoped memory for tpu_custom_call.1']
    #allocation6 [shape = 'u8[16384]{0}', space=vmem, size = 0x4000, scoped, tag = 'output window, operand 0']
    %8 = vsyncpa [#allocation4], 0
    %s9 = scalar_lea.sflag [#allocation4], 1
    %10 = vsyncpa %s9, 0
    %11 = vsyncpa [#allocation5], 0
    %s12 = scalar_lea.sflag [#allocation5], 1
    %13 = vsyncpa %s12, 0
    loop: start=0, step=1, limit=4
    $region2: #{tpu_custom_call.1} parent=1 // loop_pre_header
      _
    $region3: #{tpu_custom_call.1} parent=1 // loop_header
      %s15 = sphi 0, %s19
      %p16 = scmp.ge.s32.totalorder %s15, 4
      %s22 = sphi 0, %s34
      %s23 = sphi 0, %s30
      %s24 = sphi 0, %s22
      %s25 = sphi 0, %s23
      %s26 = sphi 0, %s24
      %s27 = sphi 0, %s25
      %s37 = sphi 0, %s39
      %s40 = sphi 0, %s37
      %s41 = sphi 0, %s40
      %s57 = sphi 0, %s41
      %s61 = sphi 0, %s61
      %s63 = sphi 0, %s61
      %s64 = sphi 0, %s63
      %s78 = sphi 0, %s64
      %s82 = sphi 0, %s82
      %s84 = sphi 0, %s82
      %s85 = sphi 0, %s84
      %s99 = sphi 0, %s85
      %s107 = sphi 0, %s109
      %s110 = sphi 0, %s107
      %s111 = sphi 0, %s110
      %s127 = sphi 0, %s111
    $region4: #{tpu_custom_call.1} parent=1 // loop_header_branch
      %18 = sbr.rel (%p16) target = $region8
    $region5: #{tpu_custom_call.1} parent=1 // loop_body
      %s20 = ssub.s32 %s15, 1
      %s21 = ssub.s32 %s15, 2
      %s28 = sadd.s32 1, %s23
      %p29 = scmp.ge.s32.totalorder %s28, 1
      %s30 = scalar_select %p29, 0, %s28
      %s31 = sadd.s32 1, %s22
      %s32 = scalar_select %p29, %s31, %s22
      %p33 = scmp.ge.s32.totalorder %s32, 2
      %s34 = scalar_select %p33, 0, %s32
      %s35 = ssub.s32 %s22, %s34
      %p36 = scmp.eq.s32.totalorder %s35, 0
      %s38 = sadd.s32 %s37, 1
      %s39 = scalar_select %p36, %s37, %s38
      %p42 = pneg %p36
      %p43 = scmp.eq.s32.totalorder %s15, 1
      %p44 = por %p42, %p43
      %p45 = scmp.ne.s32.totalorder %s37, %s40
      %p46 = scmp.eq.s32.totalorder %s15, 0
      %p47 = por %p45, %p46
      %p48 = scmp.ne.s32.totalorder %s37, %s40
      %p49 = scmp.eq.s32.totalorder %s20, 1
      %p50 = por %p48, %p49
      %p51 = scmp.ne.s32.totalorder %s40, %s41
      %p52 = scmp.eq.s32.totalorder %s20, 0
      %p53 = por %p51, %p52
      %p54 = scmp.ne.s32.totalorder %s40, %s41
      %p55 = scmp.eq.s32.totalorder %s21, 1
      %p56 = por %p54, %p55
      %p58 = scmp.ne.s32.totalorder %s41, %s57
      %p59 = scmp.eq.s32.totalorder %s21, 0
      %p60 = por %p58, %p59
      %s62 = sadd.s32 %s61, 1
      %p65 = scmp.eq.s32.totalorder %s15, 1
      %p66 = scmp.ne.s32.totalorder %s61, %s63
      %p67 = scmp.eq.s32.totalorder %s15, 0
      %p68 = por %p66, %p67
      %p69 = scmp.ne.s32.totalorder %s61, %s63
      %p70 = scmp.eq.s32.totalorder %s20, 1
      %p71 = por %p69, %p70
      %p72 = scmp.ne.s32.totalorder %s63, %s64
      %p73 = scmp.eq.s32.totalorder %s20, 0
      %p74 = por %p72, %p73
      %p75 = scmp.ne.s32.totalorder %s63, %s64
      %p76 = scmp.eq.s32.totalorder %s21, 1
      %p77 = por %p75, %p76
      %p79 = scmp.ne.s32.totalorder %s64, %s78
      %p80 = scmp.eq.s32.totalorder %s21, 0
      %p81 = por %p79, %p80
      %s83 = sadd.s32 %s82, 1
      %p86 = scmp.eq.s32.totalorder %s15, 1
      %p87 = scmp.ne.s32.totalorder %s82, %s84
      %p88 = scmp.eq.s32.totalorder %s15, 0
      %p89 = por %p87, %p88
      %p90 = scmp.ne.s32.totalorder %s82, %s84
      %p91 = scmp.eq.s32.totalorder %s20, 1
      %p92 = por %p90, %p91
      %p93 = scmp.ne.s32.totalorder %s84, %s85
      %p94 = scmp.eq.s32.totalorder %s20, 0
      %p95 = por %p93, %p94
      %p96 = scmp.ne.s32.totalorder %s84, %s85
      %p97 = scmp.eq.s32.totalorder %s21, 1
      %p98 = por %p96, %p97
      %p100 = scmp.ne.s32.totalorder %s85, %s99
      %p101 = scmp.eq.s32.totalorder %s21, 0
      %p102 = por %p100, %p101
      %s103 = ssub.s32 %s22, %s34
      %s104 = ssub.s32 %s23, %s30
      %s105 = sor.u32 %s103, %s104
      %p106 = scmp.eq.s32.totalorder %s105, 0
      %s108 = sadd.s32 %s107, 1
      %s109 = scalar_select %p106, %s107, %s108
      %p112 = pneg %p106
      %p113 = scmp.eq.s32.totalorder %s15, 1
      %p114 = por %p112, %p113
      %p115 = scmp.ne.s32.totalorder %s107, %s110
      %p116 = scmp.eq.s32.totalorder %s15, 0
      %p117 = por %p115, %p116
      %p118 = scmp.ne.s32.totalorder %s107, %s110
      %p119 = scmp.eq.s32.totalorder %s20, 1
      %p120 = por %p118, %p119
      %p121 = scmp.ne.s32.totalorder %s110, %s111
      %p122 = scmp.eq.s32.totalorder %s20, 0
      %p123 = por %p121, %p122
      %p124 = scmp.ne.s32.totalorder %s110, %s111
      %p125 = scmp.eq.s32.totalorder %s21, 1
      %p126 = por %p124, %p125
      %p128 = scmp.ne.s32.totalorder %s111, %s127
      %p129 = scmp.eq.s32.totalorder %s21, 0
      %p130 = por %p128, %p129
      %p131 = scmp.le.s32.totalorder 1, %s15
      %p132 = scmp.lt.s32.totalorder %s15, 3
      %p133 = pnand %p131, %p132
      %p134 = pneg %p133
      // Predicated region
      $region9: #{tpu_custom_call.1} parent=5 // pred_check
        _
      $region10: #{tpu_custom_call.1} parent=5 // pred_check_branch
        %136 = sbr.rel (%p133) target = $region12
      $region11: #{tpu_custom_call.1} parent=5 // pred_region
        %s137 = ssub.s32 %s15, 1
        // Predicated region
        $region13: #{tpu_custom_call.1} parent=11 // pred_check
          %p138 = pneg %p74
        $region14: #{tpu_custom_call.1} parent=11 // pred_check_branch
          %140 = sbr.rel (%p138) target = $region16
        $region15: #{tpu_custom_call.1} parent=11 // pred_region
          _
        $region16: #{tpu_custom_call.1} parent=11 // pred_fallthru
          _
        // Predicated region
        $region17: #{tpu_custom_call.1} parent=11 // pred_check
          %p141 = pneg %p95
        $region18: #{tpu_custom_call.1} parent=11 // pred_check_branch
          %143 = sbr.rel (%p141) target = $region20
        $region19: #{tpu_custom_call.1} parent=11 // pred_region
          _
        $region20: #{tpu_custom_call.1} parent=11 // pred_fallthru
          _
      $region12: #{tpu_custom_call.1} parent=5 // pred_fallthru
        _
      %p144 = scmp.lt.s32.totalorder %s15, 2
      // Predicated region
      $region21: #{tpu_custom_call.1} parent=5 // pred_check
        %p145 = pneg %p144
      $region22: #{tpu_custom_call.1} parent=5 // pred_check_branch
        %147 = sbr.rel (%p145) target = $region24
      $region23: #{tpu_custom_call.1} parent=5 // pred_region
        // Predicated region
        $region25: #{tpu_custom_call.1} parent=23 // pred_check
          %p148 = pneg %p47
        $region26: #{tpu_custom_call.1} parent=23 // pred_check_branch
          %150 = sbr.rel (%p148) target = $region28
        $region27: #{tpu_custom_call.1} parent=23 // pred_region
          %s151 = sand.u32 %s37, 1
          %s152 = scalar_lea.sflag [#allocation4], %s151
          %s153 = sand.u32 %s37, 1
          %s154 = smul.addr %s153, 24
          %s155 = scalar_lea.vmem [#allocation3], %s154
          %s157 = ssub.s32 384, 384
          %158 = vsyncadd %s152, %s157
          %s159 = smul.addr %s22, 6
          %s160 = smul.addr %s159, 64
          %s161 = scalar_lea.hbm %s0, %s160
          %s162 = sshll.u32 %s155, 4
          %s163 = int_to_ptr.vmem [resolvable:$true] %s162
          %168 = dma.hbm_to_vmem [thread:$0]  %s161, 384, %s163, %s152, 192, 192, 12
        $region28: #{tpu_custom_call.1} parent=23 // pred_fallthru
          _
      $region24: #{tpu_custom_call.1} parent=5 // pred_fallthru
        _
      %p169 = scmp.le.s32.totalorder 1, %s15
      %p170 = scmp.lt.s32.totalorder %s15, 3
      %p171 = pnand %p169, %p170
      %p172 = pneg %p171
      // Predicated region
      $region29: #{tpu_custom_call.1} parent=5 // pred_check
        _
      $region30: #{tpu_custom_call.1} parent=5 // pred_check_branch
        %174 = sbr.rel (%p171) target = $region32
      $region31: #{tpu_custom_call.1} parent=5 // pred_region
        %s175 = ssub.s32 %s15, 1
        %s176 = sand.u32 %s40, 1
        %s177 = scalar_lea.sflag [#allocation4], %s176
        %s178 = sand.u32 %s40, 1
        %s179 = smul.addr %s178, 24
        %s180 = scalar_lea.vmem [#allocation3], %s179
        // Predicated region
        $region33: #{tpu_custom_call.1} parent=31 // pred_check
          %p181 = pneg %p53
        $region34: #{tpu_custom_call.1} parent=31 // pred_check_branch
          %183 = sbr.rel (%p181) target = $region36
        $region35: #{tpu_custom_call.1} parent=31 // pred_region
          %184 = dma.done %s177, 384
        $region36: #{tpu_custom_call.1} parent=31 // pred_fallthru
          _
        %s185 = sand.u32 %s40, 1
        %s186 = scalar_lea.sflag [#allocation4], %s185
        %s187 = sand.u32 %s40, 1
        %s188 = smul.addr %s187, 24
        %s189 = scalar_lea.vmem [#allocation3], %s188
        %p190 = pneg %p53
        %p191 = pneg %p50
        %p192 = pneg %p74
        %p193 = pneg %p71
        %p194 = pneg %p95
        %p195 = pneg %p92
        %p196 = pneg %p123
        %p197 = pneg %p120
        %s198 = sand.u32 %s110, 1
        %s199 = scalar_lea.sflag [#allocation5], %s198
        %s200 = sand.u32 %s110, 1
        %s201 = smul.addr %s200, 16
        %s202 = scalar_lea.vmem [#allocation6], %s201
        %v204 = vld [vmem:[%s180] sm:$0xf]
        %v205 = vld [vmem:[%s180 + $0xc] sm:$0xf]
        %v208 = vunpack.c.l.b16 %v204
        %v209 = vunpack.c.l.b16 %v205
        %v210 = vpack.c.b16 %v209, %v208
        %vm212 = vcmask 130048
        %213 = vst.msk [vmem:[#allocation2] sm:$0xff] %vm212, %v210
        %v214 = vld [vmem:[%s180] sm:$0xf]
        %v215 = vld [vmem:[%s180 + $0xc] sm:$0xf]
        %v218 = vunpack.c.l.b16 %v214
        %v219 = vunpack.c.l.b16 %v215
        %v220 = vpack.c.b16 %v219, %v218
        %221 = vrot.lane.b32.xlu0 %v220, 127
        %v222 = vpop.permute.xlu0 %221
        %224 = vst.msk [vmem:[#allocation2 + $0x10] sm:$0xff] %vm212, %v222
        %v225 = vld [vmem:[%s180] sm:$0xf]
        %v226 = vld [vmem:[%s180 + $0xc] sm:$0xf]
        %v229 = vunpack.c.l.b16 %v225
        %v230 = vunpack.c.l.b16 %v226
        %v231 = vpack.c.b16 %v230, %v229
        %232 = vrot.lane.b32.xlu0 %v231, 126
        %v233 = vpop.permute.xlu0 %232
        %235 = vst.msk [vmem:[#allocation2 + $0x20] sm:$0xff] %vm212, %v233
        %v236 = vld [vmem:[%s180] sm:$0xf]
        %v237 = vld [vmem:[%s180 + $0xc] sm:$0xf]
        %v240 = vunpack.c.l.b16 %v236
        %v241 = vunpack.c.l.b16 %v237
        %v242 = vpack.c.b16 %v241, %v240
        %243 = vrot.lane.b32.xlu0 %v242, 110
        %v244 = vpop.permute.xlu0 %243
        %246 = vst.msk [vmem:[#allocation2 + $0x30] sm:$0xff] %vm212, %v244
        %v247 = vld [vmem:[%s180] sm:$0xf]
        %v248 = vld [vmem:[%s180 + $0xc] sm:$0xf]
        %v251 = vunpack.c.l.b16 %v247
        %v252 = vunpack.c.l.b16 %v248
        %v253 = vpack.c.b16 %v252, %v251
        %254 = vrot.lane.b32.xlu0 %v253, 109
        %v255 = vpop.permute.xlu0 %254
        %257 = vst.msk [vmem:[#allocation2 + $0x40] sm:$0xff] %vm212, %v255
        %v258 = vld [vmem:[%s180] sm:$0xf]
        %v259 = vld [vmem:[%s180 + $0xc] sm:$0xf]
        %v262 = vunpack.c.l.b16 %v258
        %v263 = vunpack.c.l.b16 %v259
        %v264 = vpack.c.b16 %v263, %v262
        %265 = vrot.lane.b32.xlu0 %v264, 108
        %v266 = vpop.permute.xlu0 %265
        %268 = vst.msk [vmem:[#allocation2 + $0x50] sm:$0xff] %vm212, %v266
        %v269 = vld [vmem:[%s180] sm:$0xf]
        %v270 = vld [vmem:[%s180 + $0xc] sm:$0xf]
        %v273 = vunpack.c.l.b16 %v269
        %v274 = vunpack.c.l.b16 %v270
        %v275 = vpack.c.b16 %v274, %v273
        %276 = vrot.lane.b32.xlu0 %v275, 92
        %v277 = vpop.permute.xlu0 %276
        %279 = vst.msk [vmem:[#allocation2 + $0x60] sm:$0xff] %vm212, %v277
        %v280 = vld [vmem:[%s180] sm:$0xf]
        %v281 = vld [vmem:[%s180 + $0xc] sm:$0xf]
        %v284 = vunpack.c.l.b16 %v280
        %v285 = vunpack.c.l.b16 %v281
        %v286 = vpack.c.b16 %v285, %v284
        %287 = vrot.lane.b32.xlu0 %v286, 91
        %v288 = vpop.permute.xlu0 %287
        %290 = vst.msk [vmem:[#allocation2 + $0x70] sm:$0xff] %vm212, %v288
        %v291 = vld [vmem:[%s180] sm:$0xf]
        %v292 = vld [vmem:[%s180 + $0xc] sm:$0xf]
        %v295 = vunpack.c.l.b16 %v291
        %v296 = vunpack.c.l.b16 %v292
        %v297 = vpack.c.b16 %v296, %v295
        %298 = vrot.lane.b32.xlu0 %v297, 90
        %v299 = vpop.permute.xlu0 %298
        %301 = vst.msk [vmem:[#allocation2 + $0x80] sm:$0xff] %vm212, %v299
        %v302 = vld [vmem:[%s180] sm:$0xf]
        %v303 = vld [vmem:[%s180 + $0xc] sm:$0xf]
        %v306 = vunpack.c.l.b16 %v302
        %v307 = vunpack.c.l.b16 %v303
        %v308 = vpack.c.b16 %v307, %v306
        %309 = vrot.lane.b32.xlu0 %v308, 126
        %v310 = vpop.permute.xlu0 %309
        %vm312 = vcmask 261248
        %313 = vst.msk [vmem:[#allocation2] sm:$0xff] %vm312, %v310
        %v314 = vld [vmem:[%s180] sm:$0xf]
        %v315 = vld [vmem:[%s180 + $0xc] sm:$0xf]
        %v318 = vunpack.c.l.b16 %v314
        %v319 = vunpack.c.l.b16 %v315
        %v320 = vpack.c.b16 %v319, %v318
        %321 = vrot.lane.b32.xlu0 %v320, 125
        %v322 = vpop.permute.xlu0 %321
        %324 = vst.msk [vmem:[#allocation2 + $0x10] sm:$0xff] %vm312, %v322
        %v325 = vld [vmem:[%s180] sm:$0xf]
        %v326 = vld [vmem:[%s180 + $0xc] sm:$0xf]
        %v329 = vunpack.c.l.b16 %v325
        %v330 = vunpack.c.l.b16 %v326
        %v331 = vpack.c.b16 %v330, %v329
        %332 = vrot.lane.b32.xlu0 %v331, 124
        %v333 = vpop.permute.xlu0 %332
        %335 = vst.msk [vmem:[#allocation2 + $0x20] sm:$0xff] %vm312, %v333
        %v336 = vld [vmem:[%s180] sm:$0xf]
        %v337 = vld [vmem:[%s180 + $0xc] sm:$0xf]
        %v340 = vunpack.c.l.b16 %v336
        %v341 = vunpack.c.l.b16 %v337
        %v342 = vpack.c.b16 %v341, %v340
        %343 = vrot.lane.b32.xlu0 %v342, 108
        %v344 = vpop.permute.xlu0 %343
        %346 = vst.msk [vmem:[#allocation2 + $0x30] sm:$0xff] %vm312, %v344
        %v347 = vld [vmem:[%s180] sm:$0xf]
        %v348 = vld [vmem:[%s180 + $0xc] sm:$0xf]
        %v351 = vunpack.c.l.b16 %v347
        %v352 = vunpack.c.l.b16 %v348
        %v353 = vpack.c.b16 %v352, %v351
        %354 = vrot.lane.b32.xlu0 %v353, 107
        %v355 = vpop.permute.xlu0 %354
        %357 = vst.msk [vmem:[#allocation2 + $0x40] sm:$0xff] %vm312, %v355
        %v358 = vld [vmem:[%s180] sm:$0xf]
        %v359 = vld [vmem:[%s180 + $0xc] sm:$0xf]
        %v362 = vunpack.c.l.b16 %v358
        %v363 = vunpack.c.l.b16 %v359
        %v364 = vpack.c.b16 %v363, %v362
        %365 = vrot.lane.b32.xlu0 %v364, 106
        %v366 = vpop.permute.xlu0 %365
        %368 = vst.msk [vmem:[#allocation2 + $0x50] sm:$0xff] %vm312, %v366
        %v369 = vld [vmem:[%s180] sm:$0xf]
        %v370 = vld [vmem:[%s180 + $0xc] sm:$0xf]
        %v373 = vunpack.c.l.b16 %v369
        %v374 = vunpack.c.l.b16 %v370
        %v375 = vpack.c.b16 %v374, %v373
        %376 = vrot.lane.b32.xlu0 %v375, 90
        %v377 = vpop.permute.xlu0 %376
        %379 = vst.msk [vmem:[#allocation2 + $0x60] sm:$0xff] %vm312, %v377
        %v380 = vld [vmem:[%s180] sm:$0xf]
        %v381 = vld [vmem:[%s180 + $0xc] sm:$0xf]
        %v384 = vunpack.c.l.b16 %v380
        %v385 = vunpack.c.l.b16 %v381
        %v386 = vpack.c.b16 %v385, %v384
        %387 = vrot.lane.b32.xlu0 %v386, 89
        %v388 = vpop.permute.xlu0 %387
        %390 = vst.msk [vmem:[#allocation2 + $0x70] sm:$0xff] %vm312, %v388
        %v391 = vld [vmem:[%s180] sm:$0xf]
        %v392 = vld [vmem:[%s180 + $0xc] sm:$0xf]
        %v395 = vunpack.c.l.b16 %v391
        %v396 = vunpack.c.l.b16 %v392
        %v397 = vpack.c.b16 %v396, %v395
        %398 = vrot.lane.b32.xlu0 %v397, 88
        %v399 = vpop.permute.xlu0 %398
        %401 = vst.msk [vmem:[#allocation2 + $0x80] sm:$0xff] %vm312, %v399
        %v402 = vld [vmem:[%s180] sm:$0xf]
        %v403 = vld [vmem:[%s180 + $0xc] sm:$0xf]
        %v406 = vunpack.c.l.b16 %v402
        %v407 = vunpack.c.l.b16 %v403
        %v408 = vpack.c.b16 %v407, %v406
        %409 = vrot.lane.b32.xlu0 %v408, 124
        %v410 = vpop.permute.xlu0 %409
        %vm412 = vcmask 392448
        %413 = vst.msk [vmem:[#allocation2] sm:$0xff] %vm412, %v410
        %v414 = vld [vmem:[%s180] sm:$0xf]
        %v415 = vld [vmem:[%s180 + $0xc] sm:$0xf]
        %v418 = vunpack.c.l.b16 %v414
        %v419 = vunpack.c.l.b16 %v415
        %v420 = vpack.c.b16 %v419, %v418
        %421 = vrot.lane.b32.xlu0 %v420, 123
        %v422 = vpop.permute.xlu0 %421
        %424 = vst.msk [vmem:[#allocation2 + $0x10] sm:$0xff] %vm412, %v422
        %v425 = vld [vmem:[%s180] sm:$0xf]
        %v426 = vld [vmem:[%s180 + $0xc] sm:$0xf]
        %v429 = vunpack.c.l.b16 %v425
        %v430 = vunpack.c.l.b16 %v426
        %v431 = vpack.c.b16 %v430, %v429
        %432 = vrot.lane.b32.xlu0 %v431, 122
        %v433 = vpop.permute.xlu0 %432
        %435 = vst.msk [vmem:[#allocation2 + $0x20] sm:$0xff] %vm412, %v433
        %v436 = vld [vmem:[%s180] sm:$0xf]
        %v437 = vld [vmem:[%s180 + $0xc] sm:$0xf]
        %v440 = vunpack.c.l.b16 %v436
        %v441 = vunpack.c.l.b16 %v437
        %v442 = vpack.c.b16 %v441, %v440
        %443 = vrot.lane.b32.xlu0 %v442, 106
        %v444 = vpop.permute.xlu0 %443
        %446 = vst.msk [vmem:[#allocation2 + $0x30] sm:$0xff] %vm412, %v444
        %v447 = vld [vmem:[%s180] sm:$0xf]
        %v448 = vld [vmem:[%s180 + $0xc] sm:$0xf]
        %v451 = vunpack.c.l.b16 %v447
        %v452 = vunpack.c.l.b16 %v448
        %v453 = vpack.c.b16 %v452, %v451
        %454 = vrot.lane.b32.xlu0 %v453, 105
        %v455 = vpop.permute.xlu0 %454
        %457 = vst.msk [vmem:[#allocation2 + $0x40] sm:$0xff] %vm412, %v455
        %v458 = vld [vmem:[%s180] sm:$0xf]
        %v459 = vld [vmem:[%s180 + $0xc] sm:$0xf]
        %v462 = vunpack.c.l.b16 %v458
        %v463 = vunpack.c.l.b16 %v459
        %v464 = vpack.c.b16 %v463, %v462
        %465 = vrot.lane.b32.xlu0 %v464, 104
        %v466 = vpop.permute.xlu0 %465
        %468 = vst.msk [vmem:[#allocation2 + $0x50] sm:$0xff] %vm412, %v466
        %v469 = vld [vmem:[%s180] sm:$0xf]
        %v470 = vld [vmem:[%s180 + $0xc] sm:$0xf]
        %v473 = vunpack.c.l.b16 %v469
        %v474 = vunpack.c.l.b16 %v470
        %v475 = vpack.c.b16 %v474, %v473
        %476 = vrot.lane.b32.xlu0 %v475, 88
        %v477 = vpop.permute.xlu0 %476
        %479 = vst.msk [vmem:[#allocation2 + $0x60] sm:$0xff] %vm412, %v477
        %v480 = vld [vmem:[%s180] sm:$0xf]
        %v481 = vld [vmem:[%s180 + $0xc] sm:$0xf]
        %v484 = vunpack.c.l.b16 %v480
        %v485 = vunpack.c.l.b16 %v481
        %v486 = vpack.c.b16 %v485, %v484
        %487 = vrot.lane.b32.xlu0 %v486, 87
        %v488 = vpop.permute.xlu0 %487
        %490 = vst.msk [vmem:[#allocation2 + $0x70] sm:$0xff] %vm412, %v488
        %v491 = vld [vmem:[%s180] sm:$0xf]
        %v492 = vld [vmem:[%s180 + $0xc] sm:$0xf]
        %v495 = vunpack.c.l.b16 %v491
        %v496 = vunpack.c.l.b16 %v492
        %v497 = vpack.c.b16 %v496, %v495
        %498 = vrot.lane.b32.xlu0 %v497, 86
        %v499 = vpop.permute.xlu0 %498
        %501 = vst.msk [vmem:[#allocation2 + $0x80] sm:$0xff] %vm412, %v499
        %v502 = vld [vmem:[%s180] sm:$0xf]
        %v503 = vld [vmem:[%s180 + $0xc] sm:$0xf]
        %v506 = vunpack.c.l.b16 %v502
        %v507 = vunpack.c.l.b16 %v503
        %v508 = vpack.c.b16 %v507, %v506
        %509 = vrot.lane.b32.xlu0 %v508, 122
        %v510 = vpop.permute.xlu0 %509
        %vm512 = vcmask 523648
        %513 = vst.msk [vmem:[#allocation2] sm:$0xff] %vm512, %v510
        %v514 = vld [vmem:[%s180] sm:$0xf]
        %v515 = vld [vmem:[%s180 + $0xc] sm:$0xf]
        %v518 = vunpack.c.l.b16 %v514
        %v519 = vunpack.c.l.b16 %v515
        %v520 = vpack.c.b16 %v519, %v518
        %521 = vrot.lane.b32.xlu0 %v520, 121
        %v522 = vpop.permute.xlu0 %521
        %524 = vst.msk [vmem:[#allocation2 + $0x10] sm:$0xff] %vm512, %v522
        %v525 = vld [vmem:[%s180] sm:$0xf]
        %v526 = vld [vmem:[%s180 + $0xc] sm:$0xf]
        %v529 = vunpack.c.l.b16 %v525
        %v530 = vunpack.c.l.b16 %v526
        %v531 = vpack.c.b16 %v530, %v529
        %532 = vrot.lane.b32.xlu0 %v531, 120
        %v533 = vpop.permute.xlu0 %532
        %535 = vst.msk [vmem:[#allocation2 + $0x20] sm:$0xff] %vm512, %v533
        %v536 = vld [vmem:[%s180] sm:$0xf]
        %v537 = vld [vmem:[%s180 + $0xc] sm:$0xf]
        %v540 = vunpack.c.l.b16 %v536
        %v541 = vunpack.c.l.b16 %v537
        %v542 = vpack.c.b16 %v541, %v540
        %543 = vrot.lane.b32.xlu0 %v542, 104
        %v544 = vpop.permute.xlu0 %543
        %546 = vst.msk [vmem:[#allocation2 + $0x30] sm:$0xff] %vm512, %v544
        %v547 = vld [vmem:[%s180] sm:$0xf]
        %v548 = vld [vmem:[%s180 + $0xc] sm:$0xf]
        %v551 = vunpack.c.l.b16 %v547
        %v552 = vunpack.c.l.b16 %v548
        %v553 = vpack.c.b16 %v552, %v551
        %554 = vrot.lane.b32.xlu0 %v553, 103
        %v555 = vpop.permute.xlu0 %554
        %557 = vst.msk [vmem:[#allocation2 + $0x40] sm:$0xff] %vm512, %v555
        %v558 = vld [vmem:[%s180] sm:$0xf]
        %v559 = vld [vmem:[%s180 + $0xc] sm:$0xf]
        %v562 = vunpack.c.l.b16 %v558
        %v563 = vunpack.c.l.b16 %v559
        %v564 = vpack.c.b16 %v563, %v562
        %565 = vrot.lane.b32.xlu0 %v564, 102
        %v566 = vpop.permute.xlu0 %565
        %568 = vst.msk [vmem:[#allocation2 + $0x50] sm:$0xff] %vm512, %v566
        %v569 = vld [vmem:[%s180] sm:$0xf]
        %v570 = vld [vmem:[%s180 + $0xc] sm:$0xf]
        %v573 = vunpack.c.l.b16 %v569
        %v574 = vunpack.c.l.b16 %v570
        %v575 = vpack.c.b16 %v574, %v573
        %576 = vrot.lane.b32.xlu0 %v575, 86
        %v577 = vpop.permute.xlu0 %576
        %579 = vst.msk [vmem:[#allocation2 + $0x60] sm:$0xff] %vm512, %v577
        %v580 = vld [vmem:[%s180] sm:$0xf]
        %v581 = vld [vmem:[%s180 + $0xc] sm:$0xf]
        %v584 = vunpack.c.l.b16 %v580
        %v585 = vunpack.c.l.b16 %v581
        %v586 = vpack.c.b16 %v585, %v584
        %587 = vrot.lane.b32.xlu0 %v586, 85
        %v588 = vpop.permute.xlu0 %587
        %590 = vst.msk [vmem:[#allocation2 + $0x70] sm:$0xff] %vm512, %v588
        %v591 = vld [vmem:[%s180] sm:$0xf]
        %v592 = vld [vmem:[%s180 + $0xc] sm:$0xf]
        %v595 = vunpack.c.l.b16 %v591
        %v596 = vunpack.c.l.b16 %v592
        %v597 = vpack.c.b16 %v596, %v595
        %598 = vrot.lane.b32.xlu0 %v597, 84
        %v599 = vpop.permute.xlu0 %598
        %601 = vst.msk [vmem:[#allocation2 + $0x80] sm:$0xff] %vm512, %v599
        %v602 = vld [vmem:[%s180] sm:$0xf]
        %v603 = vld [vmem:[%s180 + $0xc] sm:$0xf]
        %v606 = vunpack.c.l.b16 %v602
        %v607 = vunpack.c.l.b16 %v603
        %v608 = vpack.c.b16 %v607, %v606
        %609 = vrot.lane.b32.xlu0 %v608, 120
        %v610 = vpop.permute.xlu0 %609
        %vm612 = vcmask 654848
        %613 = vst.msk [vmem:[#allocation2] sm:$0xff] %vm612, %v610
        %v614 = vld [vmem:[%s180] sm:$0xf]
        %v615 = vld [vmem:[%s180 + $0xc] sm:$0xf]
        %v618 = vunpack.c.l.b16 %v614
        %v619 = vunpack.c.l.b16 %v615
        %v620 = vpack.c.b16 %v619, %v618
        %621 = vrot.lane.b32.xlu0 %v620, 119
        %v622 = vpop.permute.xlu0 %621
        %624 = vst.msk [vmem:[#allocation2 + $0x10] sm:$0xff] %vm612, %v622
        %v625 = vld [vmem:[%s180] sm:$0xf]
        %v626 = vld [vmem:[%s180 + $0xc] sm:$0xf]
        %v629 = vunpack.c.l.b16 %v625
        %v630 = vunpack.c.l.b16 %v626
        %v631 = vpack.c.b16 %v630, %v629
        %632 = vrot.lane.b32.xlu0 %v631, 118
        %v633 = vpop.permute.xlu0 %632
        %635 = vst.msk [vmem:[#allocation2 + $0x20] sm:$0xff] %vm612, %v633
        %v636 = vld [vmem:[%s180] sm:$0xf]
        %v637 = vld [vmem:[%s180 + $0xc] sm:$0xf]
        %v640 = vunpack.c.l.b16 %v636
        %v641 = vunpack.c.l.b16 %v637
        %v642 = vpack.c.b16 %v641, %v640
        %643 = vrot.lane.b32.xlu0 %v642, 102
        %v644 = vpop.permute.xlu0 %643
        %646 = vst.msk [vmem:[#allocation2 + $0x30] sm:$0xff] %vm612, %v644
        %v647 = vld [vmem:[%s180] sm:$0xf]
        %v648 = vld [vmem:[%s180 + $0xc] sm:$0xf]
        %v651 = vunpack.c.l.b16 %v647
        %v652 = vunpack.c.l.b16 %v648
        %v653 = vpack.c.b16 %v652, %v651
        %654 = vrot.lane.b32.xlu0 %v653, 101
        %v655 = vpop.permute.xlu0 %654
        %657 = vst.msk [vmem:[#allocation2 + $0x40] sm:$0xff] %vm612, %v655
        %v658 = vld [vmem:[%s180] sm:$0xf]
        %v659 = vld [vmem:[%s180 + $0xc] sm:$0xf]
        %v662 = vunpack.c.l.b16 %v658
        %v663 = vunpack.c.l.b16 %v659
        %v664 = vpack.c.b16 %v663, %v662
        %665 = vrot.lane.b32.xlu0 %v664, 100
        %v666 = vpop.permute.xlu0 %665
        %668 = vst.msk [vmem:[#allocation2 + $0x50] sm:$0xff] %vm612, %v666
        %v669 = vld [vmem:[%s180] sm:$0xf]
        %v670 = vld [vmem:[%s180 + $0xc] sm:$0xf]
        %v673 = vunpack.c.l.b16 %v669
        %v674 = vunpack.c.l.b16 %v670
        %v675 = vpack.c.b16 %v674, %v673
        %676 = vrot.lane.b32.xlu0 %v675, 84
        %v677 = vpop.permute.xlu0 %676
        %679 = vst.msk [vmem:[#allocation2 + $0x60] sm:$0xff] %vm612, %v677
        %v680 = vld [vmem:[%s180] sm:$0xf]
        %v681 = vld [vmem:[%s180 + $0xc] sm:$0xf]
        %v684 = vunpack.c.l.b16 %v680
        %v685 = vunpack.c.l.b16 %v681
        %v686 = vpack.c.b16 %v685, %v684
        %687 = vrot.lane.b32.xlu0 %v686, 83
        %v688 = vpop.permute.xlu0 %687
        %690 = vst.msk [vmem:[#allocation2 + $0x70] sm:$0xff] %vm612, %v688
        %v691 = vld [vmem:[%s180] sm:$0xf]
        %v692 = vld [vmem:[%s180 + $0xc] sm:$0xf]
        %v695 = vunpack.c.l.b16 %v691
        %v696 = vunpack.c.l.b16 %v692
        %v697 = vpack.c.b16 %v696, %v695
        %698 = vrot.lane.b32.xlu0 %v697, 82
        %v699 = vpop.permute.xlu0 %698
        %701 = vst.msk [vmem:[#allocation2 + $0x80] sm:$0xff] %vm612, %v699
        %v702 = vld [vmem:[%s180] sm:$0xf]
        %v703 = vld [vmem:[%s180 + $0xc] sm:$0xf]
        %v706 = vunpack.c.l.b16 %v702
        %v707 = vunpack.c.l.b16 %v703
        %v708 = vpack.c.b16 %v707, %v706
        %709 = vrot.lane.b32.xlu0 %v708, 118
        %v710 = vpop.permute.xlu0 %709
        %vm712 = vcmask 786048
        %713 = vst.msk [vmem:[#allocation2] sm:$0xff] %vm712, %v710
        %v714 = vld [vmem:[%s180] sm:$0xf]
        %v715 = vld [vmem:[%s180 + $0xc] sm:$0xf]
        %v718 = vunpack.c.l.b16 %v714
        %v719 = vunpack.c.l.b16 %v715
        %v720 = vpack.c.b16 %v719, %v718
        %721 = vrot.lane.b32.xlu0 %v720, 117
        %v722 = vpop.permute.xlu0 %721
        %724 = vst.msk [vmem:[#allocation2 + $0x10] sm:$0xff] %vm712, %v722
        %v725 = vld [vmem:[%s180] sm:$0xf]
        %v726 = vld [vmem:[%s180 + $0xc] sm:$0xf]
        %v729 = vunpack.c.l.b16 %v725
        %v730 = vunpack.c.l.b16 %v726
        %v731 = vpack.c.b16 %v730, %v729
        %732 = vrot.lane.b32.xlu0 %v731, 116
        %v733 = vpop.permute.xlu0 %732
        %735 = vst.msk [vmem:[#allocation2 + $0x20] sm:$0xff] %vm712, %v733
        %v736 = vld [vmem:[%s180] sm:$0xf]
        %v737 = vld [vmem:[%s180 + $0xc] sm:$0xf]
        %v740 = vunpack.c.l.b16 %v736
        %v741 = vunpack.c.l.b16 %v737
        %v742 = vpack.c.b16 %v741, %v740
        %743 = vrot.lane.b32.xlu0 %v742, 100
        %v744 = vpop.permute.xlu0 %743
        %746 = vst.msk [vmem:[#allocation2 + $0x30] sm:$0xff] %vm712, %v744
        %v747 = vld [vmem:[%s180] sm:$0xf]
        %v748 = vld [vmem:[%s180 + $0xc] sm:$0xf]
        %v751 = vunpack.c.l.b16 %v747
        %v752 = vunpack.c.l.b16 %v748
        %v753 = vpack.c.b16 %v752, %v751
        %754 = vrot.lane.b32.xlu0 %v753, 99
        %v755 = vpop.permute.xlu0 %754
        %757 = vst.msk [vmem:[#allocation2 + $0x40] sm:$0xff] %vm712, %v755
        %v758 = vld [vmem:[%s180] sm:$0xf]
        %v759 = vld [vmem:[%s180 + $0xc] sm:$0xf]
        %v762 = vunpack.c.l.b16 %v758
        %v763 = vunpack.c.l.b16 %v759
        %v764 = vpack.c.b16 %v763, %v762
        %765 = vrot.lane.b32.xlu0 %v764, 98
        %v766 = vpop.permute.xlu0 %765
        %768 = vst.msk [vmem:[#allocation2 + $0x50] sm:$0xff] %vm712, %v766
        %v769 = vld [vmem:[%s180] sm:$0xff]
        %v770 = vld [vmem:[%s180 + $0xc] sm:$0xff]
        %v773 = vunpack.c.l.b16 %v769
        %v774 = vunpack.c.h.b16 %v769
        %v775 = vunpack.c.l.b16 %v770
        %v776 = vunpack.c.h.b16 %v770
        %v777 = vpack.c.b16 %v775, %v773
        %v778 = vpack.c.b16 %v776, %v774
        %779 = vrot.lane.b32.xlu0 %v777, 82
        %v780 = vpop.permute.xlu0 %779
        %781 = vrot.lane.b32.xlu0 %v778, 82
        %v782 = vpop.permute.xlu0 %781
        %vm783 = vcmask 670720
        %v784 = vsel %vm783, %v780, %v782
        %786 = vst.msk [vmem:[#allocation2 + $0x60] sm:$0xff] %vm712, %v784
        %v787 = vld [vmem:[%s180] sm:$0xff]
        %v788 = vld [vmem:[%s180 + $0xc] sm:$0xff]
        %v791 = vunpack.c.l.b16 %v787
        %v792 = vunpack.c.h.b16 %v787
        %v793 = vunpack.c.l.b16 %v788
        %v794 = vunpack.c.h.b16 %v788
        %v795 = vpack.c.b16 %v793, %v791
        %v796 = vpack.c.b16 %v794, %v792
        %797 = vrot.lane.b32.xlu0 %v795, 81
        %v798 = vpop.permute.xlu0 %797
        %799 = vrot.lane.b32.xlu0 %v796, 81
        %v800 = vpop.permute.xlu0 %799
        %vm801 = vcmask 662528
        %v802 = vsel %vm801, %v798, %v800
        %804 = vst.msk [vmem:[#allocation2 + $0x70] sm:$0xff] %vm712, %v802
        %v805 = vld [vmem:[%s180 + $0x4] sm:$0xf]
        %v806 = vld [vmem:[%s180 + $0x10] sm:$0xf]
        %v809 = vunpack.c.l.b16 %v805
        %v810 = vunpack.c.l.b16 %v806
        %v811 = vpack.c.b16 %v810, %v809
        %812 = vrot.lane.b32.xlu0 %v811, 80
        %v813 = vpop.permute.xlu0 %812
        %815 = vst.msk [vmem:[#allocation2 + $0x80] sm:$0xff] %vm712, %v813
        %v816 = vld [vmem:[%s180] sm:$0xf]
        %v817 = vld [vmem:[%s180 + $0xc] sm:$0xf]
        %v820 = vunpack.c.l.b16 %v816
        %v821 = vunpack.c.l.b16 %v817
        %v822 = vpack.c.b16 %v821, %v820
        %823 = vrot.lane.b32.xlu0 %v822, 116
        %v824 = vpop.permute.xlu0 %823
        %vm826 = vcmask 917248
        %827 = vst.msk [vmem:[#allocation2] sm:$0xff] %vm826, %v824
        %v828 = vld [vmem:[%s180] sm:$0xf]
        %v829 = vld [vmem:[%s180 + $0xc] sm:$0xf]
        %v832 = vunpack.c.l.b16 %v828
        %v833 = vunpack.c.l.b16 %v829
        %v834 = vpack.c.b16 %v833, %v832
        %835 = vrot.lane.b32.xlu0 %v834, 115
        %v836 = vpop.permute.xlu0 %835
        %838 = vst.msk [vmem:[#allocation2 + $0x10] sm:$0xff] %vm826, %v836
        %v839 = vld [vmem:[%s180] sm:$0xf]
        %v840 = vld [vmem:[%s180 + $0xc] sm:$0xf]
        %v843 = vunpack.c.l.b16 %v839
        %v844 = vunpack.c.l.b16 %v840
        %v845 = vpack.c.b16 %v844, %v843
        %846 = vrot.lane.b32.xlu0 %v845, 114
        %v847 = vpop.permute.xlu0 %846
        %849 = vst.msk [vmem:[#allocation2 + $0x20] sm:$0xff] %vm826, %v847
        %v850 = vld [vmem:[%s180] sm:$0xff]
        %v851 = vld [vmem:[%s180 + $0xc] sm:$0xff]
        %v854 = vunpack.c.l.b16 %v850
        %v855 = vunpack.c.h.b16 %v850
        %v856 = vunpack.c.l.b16 %v851
        %v857 = vunpack.c.h.b16 %v851
        %v858 = vpack.c.b16 %v856, %v854
        %v859 = vpack.c.b16 %v857, %v855
        %860 = vrot.lane.b32.xlu0 %v858, 98
        %v861 = vpop.permute.xlu0 %860
        %862 = vrot.lane.b32.xlu0 %v859, 98
        %v863 = vpop.permute.xlu0 %862
        %vm864 = vcmask 801792
        %v865 = vsel %vm864, %v861, %v863
        %867 = vst.msk [vmem:[#allocation2 + $0x30] sm:$0xff] %vm826, %v865
        %v868 = vld [vmem:[%s180] sm:$0xff]
        %v869 = vld [vmem:[%s180 + $0xc] sm:$0xff]
        %v872 = vunpack.c.l.b16 %v868
        %v873 = vunpack.c.h.b16 %v868
        %v874 = vunpack.c.l.b16 %v869
        %v875 = vunpack.c.h.b16 %v869
        %v876 = vpack.c.b16 %v874, %v872
        %v877 = vpack.c.b16 %v875, %v873
        %878 = vrot.lane.b32.xlu0 %v876, 97
        %v879 = vpop.permute.xlu0 %878
        %880 = vrot.lane.b32.xlu0 %v877, 97
        %v881 = vpop.permute.xlu0 %880
        %vm882 = vcmask 793600
        %v883 = vsel %vm882, %v879, %v881
        %885 = vst.msk [vmem:[#allocation2 + $0x40] sm:$0xff] %vm826, %v883
        %v886 = vld [vmem:[%s180 + $0x4] sm:$0xf]
        %v887 = vld [vmem:[%s180 + $0x10] sm:$0xf]
        %v890 = vunpack.c.l.b16 %v886
        %v891 = vunpack.c.l.b16 %v887
        %v892 = vpack.c.b16 %v891, %v890
        %893 = vrot.lane.b32.xlu0 %v892, 96
        %v894 = vpop.permute.xlu0 %893
        %896 = vst.msk [vmem:[#allocation2 + $0x50] sm:$0xff] %vm826, %v894
        %v897 = vld [vmem:[%s180 + $0x4] sm:$0xf]
        %v898 = vld [vmem:[%s180 + $0x10] sm:$0xf]
        %v901 = vunpack.c.l.b16 %v897
        %v902 = vunpack.c.l.b16 %v898
        %v903 = vpack.c.b16 %v902, %v901
        %904 = vrot.lane.b32.xlu0 %v903, 80
        %v905 = vpop.permute.xlu0 %904
        %907 = vst.msk [vmem:[#allocation2 + $0x60] sm:$0xff] %vm826, %v905
        %v908 = vld [vmem:[%s180 + $0x4] sm:$0xf]
        %v909 = vld [vmem:[%s180 + $0x10] sm:$0xf]
        %v912 = vunpack.c.l.b16 %v908
        %v913 = vunpack.c.l.b16 %v909
        %v914 = vpack.c.b16 %v913, %v912
        %915 = vrot.lane.b32.xlu0 %v914, 79
        %v916 = vpop.permute.xlu0 %915
        %918 = vst.msk [vmem:[#allocation2 + $0x70] sm:$0xff] %vm826, %v916
        %v919 = vld [vmem:[%s180 + $0x4] sm:$0xf]
        %v920 = vld [vmem:[%s180 + $0x10] sm:$0xf]
        %v923 = vunpack.c.l.b16 %v919
        %v924 = vunpack.c.l.b16 %v920
        %v925 = vpack.c.b16 %v924, %v923
        %926 = vrot.lane.b32.xlu0 %v925, 78
        %v927 = vpop.permute.xlu0 %926
        %929 = vst.msk [vmem:[#allocation2 + $0x80] sm:$0xff] %vm826, %v927
        %v930 = vld [vmem:[%s180] sm:$0xff]
        %v931 = vld [vmem:[%s180 + $0xc] sm:$0xff]
        %v934 = vunpack.c.l.b16 %v930
        %v935 = vunpack.c.h.b16 %v930
        %v936 = vunpack.c.l.b16 %v931
        %v937 = vunpack.c.h.b16 %v931
        %v938 = vpack.c.b16 %v936, %v934
        %v939 = vpack.c.b16 %v937, %v935
        %940 = vrot.lane.b32.xlu0 %v938, 114
        %v941 = vpop.permute.xlu0 %940
        %942 = vrot.lane.b32.xlu0 %v939, 114
        %v943 = vpop.permute.xlu0 %942
        %vm944 = vcmask 932864
        %v945 = vsel %vm944, %v941, %v943
        %vm947 = vcmask 1048448
        %948 = vst.msk [vmem:[#allocation2] sm:$0xff] %vm947, %v945
        %v949 = vld [vmem:[%s180] sm:$0xff]
        %v950 = vld [vmem:[%s180 + $0xc] sm:$0xff]
        %v953 = vunpack.c.l.b16 %v949
        %v954 = vunpack.c.h.b16 %v949
        %v955 = vunpack.c.l.b16 %v950
        %v956 = vunpack.c.h.b16 %v950
        %v957 = vpack.c.b16 %v955, %v953
        %v958 = vpack.c.b16 %v956, %v954
        %959 = vrot.lane.b32.xlu0 %v957, 113
        %v960 = vpop.permute.xlu0 %959
        %961 = vrot.lane.b32.xlu0 %v958, 113
        %v962 = vpop.permute.xlu0 %961
        %vm963 = vcmask 924672
        %v964 = vsel %vm963, %v960, %v962
        %966 = vst.msk [vmem:[#allocation2 + $0x10] sm:$0xff] %vm947, %v964
        %v967 = vld [vmem:[%s180 + $0x4] sm:$0xf]
        %v968 = vld [vmem:[%s180 + $0x10] sm:$0xf]
        %v971 = vunpack.c.l.b16 %v967
        %v972 = vunpack.c.l.b16 %v968
        %v973 = vpack.c.b16 %v972, %v971
        %974 = vrot.lane.b32.xlu0 %v973, 112
        %v975 = vpop.permute.xlu0 %974
        %977 = vst.msk [vmem:[#allocation2 + $0x20] sm:$0xff] %vm947, %v975
        %v978 = vld [vmem:[%s180 + $0x4] sm:$0xf]
        %v979 = vld [vmem:[%s180 + $0x10] sm:$0xf]
        %v982 = vunpack.c.l.b16 %v978
        %v983 = vunpack.c.l.b16 %v979
        %v984 = vpack.c.b16 %v983, %v982
        %985 = vrot.lane.b32.xlu0 %v984, 96
        %v986 = vpop.permute.xlu0 %985
        %988 = vst.msk [vmem:[#allocation2 + $0x30] sm:$0xff] %vm947, %v986
        %v989 = vld [vmem:[%s180 + $0x4] sm:$0xf]
        %v990 = vld [vmem:[%s180 + $0x10] sm:$0xf]
        %v993 = vunpack.c.l.b16 %v989
        %v994 = vunpack.c.l.b16 %v990
        %v995 = vpack.c.b16 %v994, %v993
        %996 = vrot.lane.b32.xlu0 %v995, 95
        %v997 = vpop.permute.xlu0 %996
        %999 = vst.msk [vmem:[#allocation2 + $0x40] sm:$0xff] %vm947, %v997
        %v1000 = vld [vmem:[%s180 + $0x4] sm:$0xf]
        %v1001 = vld [vmem:[%s180 + $0x10] sm:$0xf]
        %v1004 = vunpack.c.l.b16 %v1000
        %v1005 = vunpack.c.l.b16 %v1001
        %v1006 = vpack.c.b16 %v1005, %v1004
        %1007 = vrot.lane.b32.xlu0 %v1006, 94
        %v1008 = vpop.permute.xlu0 %1007
        %1010 = vst.msk [vmem:[#allocation2 + $0x50] sm:$0xff] %vm947, %v1008
        %v1011 = vld [vmem:[%s180 + $0x4] sm:$0xf]
        %v1012 = vld [vmem:[%s180 + $0x10] sm:$0xf]
        %v1015 = vunpack.c.l.b16 %v1011
        %v1016 = vunpack.c.l.b16 %v1012
        %v1017 = vpack.c.b16 %v1016, %v1015
        %1018 = vrot.lane.b32.xlu0 %v1017, 78
        %v1019 = vpop.permute.xlu0 %1018
        %1021 = vst.msk [vmem:[#allocation2 + $0x60] sm:$0xff] %vm947, %v1019
        %v1022 = vld [vmem:[%s180 + $0x4] sm:$0xf]
        %v1023 = vld [vmem:[%s180 + $0x10] sm:$0xf]
        %v1026 = vunpack.c.l.b16 %v1022
        %v1027 = vunpack.c.l.b16 %v1023
        %v1028 = vpack.c.b16 %v1027, %v1026
        %1029 = vrot.lane.b32.xlu0 %v1028, 77
        %v1030 = vpop.permute.xlu0 %1029
        %1032 = vst.msk [vmem:[#allocation2 + $0x70] sm:$0xff] %vm947, %v1030
        %v1033 = vld [vmem:[%s180 + $0x4] sm:$0xf]
        %v1034 = vld [vmem:[%s180 + $0x10] sm:$0xf]
        %v1037 = vunpack.c.l.b16 %v1033
        %v1038 = vunpack.c.l.b16 %v1034
        %v1039 = vpack.c.b16 %v1038, %v1037
        %1040 = vrot.lane.b32.xlu0 %v1039, 76
        %v1041 = vpop.permute.xlu0 %1040
        %1043 = vst.msk [vmem:[#allocation2 + $0x80] sm:$0xff] %vm947, %v1041
        %v1044 = vld [vmem:[%s180 + $0x4] sm:$0xf]
        %v1045 = vld [vmem:[%s180 + $0x10] sm:$0xf]
        %v1048 = vunpack.c.l.b16 %v1044
        %v1049 = vunpack.c.l.b16 %v1045
        %v1050 = vpack.c.b16 %v1049, %v1048
        %1051 = vrot.lane.b32.xlu0 %v1050, 112
        %v1052 = vpop.permute.xlu0 %1051
        %1054 = vst.msk [vmem:[#allocation2 + $0x8] sm:$0xff] %vm212, %v1052
        %v1055 = vld [vmem:[%s180 + $0x4] sm:$0xf]
        %v1056 = vld [vmem:[%s180 + $0x10] sm:$0xf]
        %v1059 = vunpack.c.l.b16 %v1055
        %v1060 = vunpack.c.l.b16 %v1056
        %v1061 = vpack.c.b16 %v1060, %v1059
        %1062 = vrot.lane.b32.xlu0 %v1061, 111
        %v1063 = vpop.permute.xlu0 %1062
        %1065 = vst.msk [vmem:[#allocation2 + $0x18] sm:$0xff] %vm212, %v1063
        %v1066 = vld [vmem:[%s180 + $0x4] sm:$0xf]
        %v1067 = vld [vmem:[%s180 + $0x10] sm:$0xf]
        %v1070 = vunpack.c.l.b16 %v1066
        %v1071 = vunpack.c.l.b16 %v1067
        %v1072 = vpack.c.b16 %v1071, %v1070
        %1073 = vrot.lane.b32.xlu0 %v1072, 110
        %v1074 = vpop.permute.xlu0 %1073
        %1076 = vst.msk [vmem:[#allocation2 + $0x28] sm:$0xff] %vm212, %v1074
        %v1077 = vld [vmem:[%s180 + $0x4] sm:$0xf]
        %v1078 = vld [vmem:[%s180 + $0x10] sm:$0xf]
        %v1081 = vunpack.c.l.b16 %v1077
        %v1082 = vunpack.c.l.b16 %v1078
        %v1083 = vpack.c.b16 %v1082, %v1081
        %1084 = vrot.lane.b32.xlu0 %v1083, 94
        %v1085 = vpop.permute.xlu0 %1084
        %1087 = vst.msk [vmem:[#allocation2 + $0x38] sm:$0xff] %vm212, %v1085
        %v1088 = vld [vmem:[%s180 + $0x4] sm:$0xf]
        %v1089 = vld [vmem:[%s180 + $0x10] sm:$0xf]
        %v1092 = vunpack.c.l.b16 %v1088
        %v1093 = vunpack.c.l.b16 %v1089
        %v1094 = vpack.c.b16 %v1093, %v1092
        %1095 = vrot.lane.b32.xlu0 %v1094, 93
        %v1096 = vpop.permute.xlu0 %1095
        %1098 = vst.msk [vmem:[#allocation2 + $0x48] sm:$0xff] %vm212, %v1096
        %v1099 = vld [vmem:[%s180 + $0x4] sm:$0xf]
        %v1100 = vld [vmem:[%s180 + $0x10] sm:$0xf]
        %v1103 = vunpack.c.l.b16 %v1099
        %v1104 = vunpack.c.l.b16 %v1100
        %v1105 = vpack.c.b16 %v1104, %v1103
        %1106 = vrot.lane.b32.xlu0 %v1105, 92
        %v1107 = vpop.permute.xlu0 %1106
        %1109 = vst.msk [vmem:[#allocation2 + $0x58] sm:$0xff] %vm212, %v1107
        %v1110 = vld [vmem:[%s180 + $0x4] sm:$0xf]
        %v1111 = vld [vmem:[%s180 + $0x10] sm:$0xf]
        %v1114 = vunpack.c.l.b16 %v1110
        %v1115 = vunpack.c.l.b16 %v1111
        %v1116 = vpack.c.b16 %v1115, %v1114
        %1117 = vrot.lane.b32.xlu0 %v1116, 76
        %v1118 = vpop.permute.xlu0 %1117
        %1120 = vst.msk [vmem:[#allocation2 + $0x68] sm:$0xff] %vm212, %v1118
        %v1121 = vld [vmem:[%s180 + $0x4] sm:$0xf]
        %v1122 = vld [vmem:[%s180 + $0x10] sm:$0xf]
        %v1125 = vunpack.c.l.b16 %v1121
        %v1126 = vunpack.c.l.b16 %v1122
        %v1127 = vpack.c.b16 %v1126, %v1125
        %1128 = vrot.lane.b32.xlu0 %v1127, 75
        %v1129 = vpop.permute.xlu0 %1128
        %1131 = vst.msk [vmem:[#allocation2 + $0x78] sm:$0xff] %vm212, %v1129
        %v1132 = vld [vmem:[%s180 + $0x4] sm:$0xf]
        %v1133 = vld [vmem:[%s180 + $0x10] sm:$0xf]
        %v1136 = vunpack.c.l.b16 %v1132
        %v1137 = vunpack.c.l.b16 %v1133
        %v1138 = vpack.c.b16 %v1137, %v1136
        %1139 = vrot.lane.b32.xlu0 %v1138, 74
        %v1140 = vpop.permute.xlu0 %1139
        %1142 = vst.msk [vmem:[#allocation2 + $0x88] sm:$0xff] %vm212, %v1140
        %v1143 = vld [vmem:[%s180 + $0x4] sm:$0xf]
        %v1144 = vld [vmem:[%s180 + $0x10] sm:$0xf]
        %v1147 = vunpack.c.l.b16 %v1143
        %v1148 = vunpack.c.l.b16 %v1144
        %v1149 = vpack.c.b16 %v1148, %v1147
        %1150 = vrot.lane.b32.xlu0 %v1149, 110
        %v1151 = vpop.permute.xlu0 %1150
        %1153 = vst.msk [vmem:[#allocation2 + $0x8] sm:$0xff] %vm312, %v1151
        %v1154 = vld [vmem:[%s180 + $0x4] sm:$0xf]
        %v1155 = vld [vmem:[%s180 + $0x10] sm:$0xf]
        %v1158 = vunpack.c.l.b16 %v1154
        %v1159 = vunpack.c.l.b16 %v1155
        %v1160 = vpack.c.b16 %v1159, %v1158
        %1161 = vrot.lane.b32.xlu0 %v1160, 109
        %v1162 = vpop.permute.xlu0 %1161
        %1164 = vst.msk [vmem:[#allocation2 + $0x18] sm:$0xff] %vm312, %v1162
        %v1165 = vld [vmem:[%s180 + $0x4] sm:$0xf]
        %v1166 = vld [vmem:[%s180 + $0x10] sm:$0xf]
        %v1169 = vunpack.c.l.b16 %v1165
        %v1170 = vunpack.c.l.b16 %v1166
        %v1171 = vpack.c.b16 %v1170, %v1169
        %1172 = vrot.lane.b32.xlu0 %v1171, 108
        %v1173 = vpop.permute.xlu0 %1172
        %1175 = vst.msk [vmem:[#allocation2 + $0x28] sm:$0xff] %vm312, %v1173
        %v1176 = vld [vmem:[%s180 + $0x4] sm:$0xf]
        %v1177 = vld [vmem:[%s180 + $0x10] sm:$0xf]
        %v1180 = vunpack.c.l.b16 %v1176
        %v1181 = vunpack.c.l.b16 %v1177
        %v1182 = vpack.c.b16 %v1181, %v1180
        %1183 = vrot.lane.b32.xlu0 %v1182, 92
        %v1184 = vpop.permute.xlu0 %1183
        %1186 = vst.msk [vmem:[#allocation2 + $0x38] sm:$0xff] %vm312, %v1184
        %v1187 = vld [vmem:[%s180 + $0x4] sm:$0xf]
        %v1188 = vld [vmem:[%s180 + $0x10] sm:$0xf]
        %v1191 = vunpack.c.l.b16 %v1187
        %v1192 = vunpack.c.l.b16 %v1188
        %v1193 = vpack.c.b16 %v1192, %v1191
        %1194 = vrot.lane.b32.xlu0 %v1193, 91
        %v1195 = vpop.permute.xlu0 %1194
        %1197 = vst.msk [vmem:[#allocation2 + $0x48] sm:$0xff] %vm312, %v1195
        %v1198 = vld [vmem:[%s180 + $0x4] sm:$0xf]
        %v1199 = vld [vmem:[%s180 + $0x10] sm:$0xf]
        %v1202 = vunpack.c.l.b16 %v1198
        %v1203 = vunpack.c.l.b16 %v1199
        %v1204 = vpack.c.b16 %v1203, %v1202
        %1205 = vrot.lane.b32.xlu0 %v1204, 90
        %v1206 = vpop.permute.xlu0 %1205
        %1208 = vst.msk [vmem:[#allocation2 + $0x58] sm:$0xff] %vm312, %v1206
        %v1209 = vld [vmem:[%s180 + $0x4] sm:$0xf]
        %v1210 = vld [vmem:[%s180 + $0x10] sm:$0xf]
        %v1213 = vunpack.c.l.b16 %v1209
        %v1214 = vunpack.c.l.b16 %v1210
        %v1215 = vpack.c.b16 %v1214, %v1213
        %1216 = vrot.lane.b32.xlu0 %v1215, 74
        %v1217 = vpop.permute.xlu0 %1216
        %1219 = vst.msk [vmem:[#allocation2 + $0x68] sm:$0xff] %vm312, %v1217
        %v1220 = vld [vmem:[%s180 + $0x4] sm:$0xf]
        %v1221 = vld [vmem:[%s180 + $0x10] sm:$0xf]
        %v1224 = vunpack.c.l.b16 %v1220
        %v1225 = vunpack.c.l.b16 %v1221
        %v1226 = vpack.c.b16 %v1225, %v1224
        %1227 = vrot.lane.b32.xlu0 %v1226, 73
        %v1228 = vpop.permute.xlu0 %1227
        %1230 = vst.msk [vmem:[#allocation2 + $0x78] sm:$0xff] %vm312, %v1228
        %v1231 = vld [vmem:[%s180 + $0x4] sm:$0xf]
        %v1232 = vld [vmem:[%s180 + $0x10] sm:$0xf]
        %v1235 = vunpack.c.l.b16 %v1231
        %v1236 = vunpack.c.l.b16 %v1232
        %v1237 = vpack.c.b16 %v1236, %v1235
        %1238 = vrot.lane.b32.xlu0 %v1237, 72
        %v1239 = vpop.permute.xlu0 %1238
        %1241 = vst.msk [vmem:[#allocation2 + $0x88] sm:$0xff] %vm312, %v1239
        %v1242 = vld [vmem:[%s180 + $0x4] sm:$0xf]
        %v1243 = vld [vmem:[%s180 + $0x10] sm:$0xf]
        %v1246 = vunpack.c.l.b16 %v1242
        %v1247 = vunpack.c.l.b16 %v1243
        %v1248 = vpack.c.b16 %v1247, %v1246
        %1249 = vrot.lane.b32.xlu0 %v1248, 108
        %v1250 = vpop.permute.xlu0 %1249
        %1252 = vst.msk [vmem:[#allocation2 + $0x8] sm:$0xff] %vm412, %v1250
        %v1253 = vld [vmem:[%s180 + $0x4] sm:$0xf]
        %v1254 = vld [vmem:[%s180 + $0x10] sm:$0xf]
        %v1257 = vunpack.c.l.b16 %v1253
        %v1258 = vunpack.c.l.b16 %v1254
        %v1259 = vpack.c.b16 %v1258, %v1257
        %1260 = vrot.lane.b32.xlu0 %v1259, 107
        %v1261 = vpop.permute.xlu0 %1260
        %1263 = vst.msk [vmem:[#allocation2 + $0x18] sm:$0xff] %vm412, %v1261
        %v1264 = vld [vmem:[%s180 + $0x4] sm:$0xf]
        %v1265 = vld [vmem:[%s180 + $0x10] sm:$0xf]
        %v1268 = vunpack.c.l.b16 %v1264
        %v1269 = vunpack.c.l.b16 %v1265
        %v1270 = vpack.c.b16 %v1269, %v1268
        %1271 = vrot.lane.b32.xlu0 %v1270, 106
        %v1272 = vpop.permute.xlu0 %1271
        %1274 = vst.msk [vmem:[#allocation2 + $0x28] sm:$0xff] %vm412, %v1272
        %v1275 = vld [vmem:[%s180 + $0x4] sm:$0xf]
        %v1276 = vld [vmem:[%s180 + $0x10] sm:$0xf]
        %v1279 = vunpack.c.l.b16 %v1275
        %v1280 = vunpack.c.l.b16 %v1276
        %v1281 = vpack.c.b16 %v1280, %v1279
        %1282 = vrot.lane.b32.xlu0 %v1281, 90
        %v1283 = vpop.permute.xlu0 %1282
        %1285 = vst.msk [vmem:[#allocation2 + $0x38] sm:$0xff] %vm412, %v1283
        %v1286 = vld [vmem:[%s180 + $0x4] sm:$0xf]
        %v1287 = vld [vmem:[%s180 + $0x10] sm:$0xf]
        %v1290 = vunpack.c.l.b16 %v1286
        %v1291 = vunpack.c.l.b16 %v1287
        %v1292 = vpack.c.b16 %v1291, %v1290
        %1293 = vrot.lane.b32.xlu0 %v1292, 89
        %v1294 = vpop.permute.xlu0 %1293
        %1296 = vst.msk [vmem:[#allocation2 + $0x48] sm:$0xff] %vm412, %v1294
        %v1297 = vld [vmem:[%s180 + $0x4] sm:$0xf]
        %v1298 = vld [vmem:[%s180 + $0x10] sm:$0xf]
        %v1301 = vunpack.c.l.b16 %v1297
        %v1302 = vunpack.c.l.b16 %v1298
        %v1303 = vpack.c.b16 %v1302, %v1301
        %1304 = vrot.lane.b32.xlu0 %v1303, 88
        %v1305 = vpop.permute.xlu0 %1304
        %1307 = vst.msk [vmem:[#allocation2 + $0x58] sm:$0xff] %vm412, %v1305
        %v1308 = vld [vmem:[%s180 + $0x4] sm:$0xf]
        %v1309 = vld [vmem:[%s180 + $0x10] sm:$0xf]
        %v1312 = vunpack.c.l.b16 %v1308
        %v1313 = vunpack.c.l.b16 %v1309
        %v1314 = vpack.c.b16 %v1313, %v1312
        %1315 = vrot.lane.b32.xlu0 %v1314, 72
        %v1316 = vpop.permute.xlu0 %1315
        %1318 = vst.msk [vmem:[#allocation2 + $0x68] sm:$0xff] %vm412, %v1316
        %v1319 = vld [vmem:[%s180 + $0x4] sm:$0xf]
        %v1320 = vld [vmem:[%s180 + $0x10] sm:$0xf]
        %v1323 = vunpack.c.l.b16 %v1319
        %v1324 = vunpack.c.l.b16 %v1320
        %v1325 = vpack.c.b16 %v1324, %v1323
        %1326 = vrot.lane.b32.xlu0 %v1325, 71
        %v1327 = vpop.permute.xlu0 %1326
        %1329 = vst.msk [vmem:[#allocation2 + $0x78] sm:$0xff] %vm412, %v1327
        %v1330 = vld [vmem:[%s180 + $0x4] sm:$0xf]
        %v1331 = vld [vmem:[%s180 + $0x10] sm:$0xf]
        %v1334 = vunpack.c.l.b16 %v1330
        %v1335 = vunpack.c.l.b16 %v1331
        %v1336 = vpack.c.b16 %v1335, %v1334
        %1337 = vrot.lane.b32.xlu0 %v1336, 70
        %v1338 = vpop.permute.xlu0 %1337
        %1340 = vst.msk [vmem:[#allocation2 + $0x88] sm:$0xff] %vm412, %v1338
        %v1341 = vld [vmem:[%s180 + $0x4] sm:$0xf]
        %v1342 = vld [vmem:[%s180 + $0x10] sm:$0xf]
        %v1345 = vunpack.c.l.b16 %v1341
        %v1346 = vunpack.c.l.b16 %v1342
        %v1347 = vpack.c.b16 %v1346, %v1345
        %1348 = vrot.lane.b32.xlu0 %v1347, 106
        %v1349 = vpop.permute.xlu0 %1348
        %1351 = vst.msk [vmem:[#allocation2 + $0x8] sm:$0xff] %vm512, %v1349
        %v1352 = vld [vmem:[%s180 + $0x4] sm:$0xf]
        %v1353 = vld [vmem:[%s180 + $0x10] sm:$0xf]
        %v1356 = vunpack.c.l.b16 %v1352
        %v1357 = vunpack.c.l.b16 %v1353
        %v1358 = vpack.c.b16 %v1357, %v1356
        %1359 = vrot.lane.b32.xlu0 %v1358, 105
        %v1360 = vpop.permute.xlu0 %1359
        %1362 = vst.msk [vmem:[#allocation2 + $0x18] sm:$0xff] %vm512, %v1360
        %v1363 = vld [vmem:[%s180 + $0x4] sm:$0xf]
        %v1364 = vld [vmem:[%s180 + $0x10] sm:$0xf]
        %v1367 = vunpack.c.l.b16 %v1363
        %v1368 = vunpack.c.l.b16 %v1364
        %v1369 = vpack.c.b16 %v1368, %v1367
        %1370 = vrot.lane.b32.xlu0 %v1369, 104
        %v1371 = vpop.permute.xlu0 %1370
        %1373 = vst.msk [vmem:[#allocation2 + $0x28] sm:$0xff] %vm512, %v1371
        %v1374 = vld [vmem:[%s180 + $0x4] sm:$0xf]
        %v1375 = vld [vmem:[%s180 + $0x10] sm:$0xf]
        %v1378 = vunpack.c.l.b16 %v1374
        %v1379 = vunpack.c.l.b16 %v1375
        %v1380 = vpack.c.b16 %v1379, %v1378
        %1381 = vrot.lane.b32.xlu0 %v1380, 88
        %v1382 = vpop.permute.xlu0 %1381
        %1384 = vst.msk [vmem:[#allocation2 + $0x38] sm:$0xff] %vm512, %v1382
        %v1385 = vld [vmem:[%s180 + $0x4] sm:$0xf]
        %v1386 = vld [vmem:[%s180 + $0x10] sm:$0xf]
        %v1389 = vunpack.c.l.b16 %v1385
        %v1390 = vunpack.c.l.b16 %v1386
        %v1391 = vpack.c.b16 %v1390, %v1389
        %1392 = vrot.lane.b32.xlu0 %v1391, 87
        %v1393 = vpop.permute.xlu0 %1392
        %1395 = vst.msk [vmem:[#allocation2 + $0x48] sm:$0xff] %vm512, %v1393
        %v1396 = vld [vmem:[%s180 + $0x4] sm:$0xf]
        %v1397 = vld [vmem:[%s180 + $0x10] sm:$0xf]
        %v1400 = vunpack.c.l.b16 %v1396
        %v1401 = vunpack.c.l.b16 %v1397
        %v1402 = vpack.c.b16 %v1401, %v1400
        %1403 = vrot.lane.b32.xlu0 %v1402, 86
        %v1404 = vpop.permute.xlu0 %1403
        %1406 = vst.msk [vmem:[#allocation2 + $0x58] sm:$0xff] %vm512, %v1404
        %v1407 = vld [vmem:[%s180 + $0x4] sm:$0xf]
        %v1408 = vld [vmem:[%s180 + $0x10] sm:$0xf]
        %v1411 = vunpack.c.l.b16 %v1407
        %v1412 = vunpack.c.l.b16 %v1408
        %v1413 = vpack.c.b16 %v1412, %v1411
        %1414 = vrot.lane.b32.xlu0 %v1413, 70
        %v1415 = vpop.permute.xlu0 %1414
        %1417 = vst.msk [vmem:[#allocation2 + $0x68] sm:$0xff] %vm512, %v1415
        %v1418 = vld [vmem:[%s180 + $0x4] sm:$0xf]
        %v1419 = vld [vmem:[%s180 + $0x10] sm:$0xf]
        %v1422 = vunpack.c.l.b16 %v1418
        %v1423 = vunpack.c.l.b16 %v1419
        %v1424 = vpack.c.b16 %v1423, %v1422
        %1425 = vrot.lane.b32.xlu0 %v1424, 69
        %v1426 = vpop.permute.xlu0 %1425
        %1428 = vst.msk [vmem:[#allocation2 + $0x78] sm:$0xff] %vm512, %v1426
        %v1429 = vld [vmem:[%s180 + $0x4] sm:$0xf]
        %v1430 = vld [vmem:[%s180 + $0x10] sm:$0xf]
        %v1433 = vunpack.c.l.b16 %v1429
        %v1434 = vunpack.c.l.b16 %v1430
        %v1435 = vpack.c.b16 %v1434, %v1433
        %1436 = vrot.lane.b32.xlu0 %v1435, 68
        %v1437 = vpop.permute.xlu0 %1436
        %1439 = vst.msk [vmem:[#allocation2 + $0x88] sm:$0xff] %vm512, %v1437
        %v1440 = vld [vmem:[%s180 + $0x4] sm:$0xf]
        %v1441 = vld [vmem:[%s180 + $0x10] sm:$0xf]
        %v1444 = vunpack.c.l.b16 %v1440
        %v1445 = vunpack.c.l.b16 %v1441
        %v1446 = vpack.c.b16 %v1445, %v1444
        %1447 = vrot.lane.b32.xlu0 %v1446, 104
        %v1448 = vpop.permute.xlu0 %1447
        %1450 = vst.msk [vmem:[#allocation2 + $0x8] sm:$0xff] %vm612, %v1448
        %v1451 = vld [vmem:[%s180 + $0x4] sm:$0xf]
        %v1452 = vld [vmem:[%s180 + $0x10] sm:$0xf]
        %v1455 = vunpack.c.l.b16 %v1451
        %v1456 = vunpack.c.l.b16 %v1452
        %v1457 = vpack.c.b16 %v1456, %v1455
        %1458 = vrot.lane.b32.xlu0 %v1457, 103
        %v1459 = vpop.permute.xlu0 %1458
        %1461 = vst.msk [vmem:[#allocation2 + $0x18] sm:$0xff] %vm612, %v1459
        %v1462 = vld [vmem:[%s180 + $0x4] sm:$0xf]
        %v1463 = vld [vmem:[%s180 + $0x10] sm:$0xf]
        %v1466 = vunpack.c.l.b16 %v1462
        %v1467 = vunpack.c.l.b16 %v1463
        %v1468 = vpack.c.b16 %v1467, %v1466
        %1469 = vrot.lane.b32.xlu0 %v1468, 102
        %v1470 = vpop.permute.xlu0 %1469
        %1472 = vst.msk [vmem:[#allocation2 + $0x28] sm:$0xff] %vm612, %v1470
        %v1473 = vld [vmem:[%s180 + $0x4] sm:$0xf]
        %v1474 = vld [vmem:[%s180 + $0x10] sm:$0xf]
        %v1477 = vunpack.c.l.b16 %v1473
        %v1478 = vunpack.c.l.b16 %v1474
        %v1479 = vpack.c.b16 %v1478, %v1477
        %1480 = vrot.lane.b32.xlu0 %v1479, 86
        %v1481 = vpop.permute.xlu0 %1480
        %1483 = vst.msk [vmem:[#allocation2 + $0x38] sm:$0xff] %vm612, %v1481
        %v1484 = vld [vmem:[%s180 + $0x4] sm:$0xf]
        %v1485 = vld [vmem:[%s180 + $0x10] sm:$0xf]
        %v1488 = vunpack.c.l.b16 %v1484
        %v1489 = vunpack.c.l.b16 %v1485
        %v1490 = vpack.c.b16 %v1489, %v1488
        %1491 = vrot.lane.b32.xlu0 %v1490, 85
        %v1492 = vpop.permute.xlu0 %1491
        %1494 = vst.msk [vmem:[#allocation2 + $0x48] sm:$0xff] %vm612, %v1492
        %v1495 = vld [vmem:[%s180 + $0x4] sm:$0xf]
        %v1496 = vld [vmem:[%s180 + $0x10] sm:$0xf]
        %v1499 = vunpack.c.l.b16 %v1495
        %v1500 = vunpack.c.l.b16 %v1496
        %v1501 = vpack.c.b16 %v1500, %v1499
        %1502 = vrot.lane.b32.xlu0 %v1501, 84
        %v1503 = vpop.permute.xlu0 %1502
        %1505 = vst.msk [vmem:[#allocation2 + $0x58] sm:$0xff] %vm612, %v1503
        %v1506 = vld [vmem:[%s180 + $0x4] sm:$0xff]
        %v1507 = vld [vmem:[%s180 + $0x10] sm:$0xff]
        %v1510 = vunpack.c.l.b16 %v1506
        %v1511 = vunpack.c.h.b16 %v1506
        %v1512 = vunpack.c.l.b16 %v1507
        %v1513 = vunpack.c.h.b16 %v1507
        %v1514 = vpack.c.b16 %v1512, %v1510
        %v1515 = vpack.c.b16 %v1513, %v1511
        %1516 = vrot.lane.b32.xlu0 %v1514, 68
        %v1517 = vpop.permute.xlu0 %1516
        %1518 = vrot.lane.b32.xlu0 %v1515, 68
        %v1519 = vpop.permute.xlu0 %1518
        %vm1520 = vcmask 556032
        %v1521 = vsel %vm1520, %v1517, %v1519
        %1523 = vst.msk [vmem:[#allocation2 + $0x68] sm:$0xff] %vm612, %v1521
        %v1524 = vld [vmem:[%s180 + $0x4] sm:$0xff]
        %v1525 = vld [vmem:[%s180 + $0x10] sm:$0xff]
        %v1528 = vunpack.c.l.b16 %v1524
        %v1529 = vunpack.c.h.b16 %v1524
        %v1530 = vunpack.c.l.b16 %v1525
        %v1531 = vunpack.c.h.b16 %v1525
        %v1532 = vpack.c.b16 %v1530, %v1528
        %v1533 = vpack.c.b16 %v1531, %v1529
        %1534 = vrot.lane.b32.xlu0 %v1532, 67
        %v1535 = vpop.permute.xlu0 %1534
        %1536 = vrot.lane.b32.xlu0 %v1533, 67
        %v1537 = vpop.permute.xlu0 %1536
        %vm1538 = vcmask 547840
        %v1539 = vsel %vm1538, %v1535, %v1537
        %1541 = vst.msk [vmem:[#allocation2 + $0x78] sm:$0xff] %vm612, %v1539
        %v1542 = vld [vmem:[%s180 + $0x4] sm:$0xff]
        %v1543 = vld [vmem:[%s180 + $0x10] sm:$0xff]
        %v1546 = vunpack.c.l.b16 %v1542
        %v1547 = vunpack.c.h.b16 %v1542
        %v1548 = vunpack.c.l.b16 %v1543
        %v1549 = vunpack.c.h.b16 %v1543
        %v1550 = vpack.c.b16 %v1548, %v1546
        %v1551 = vpack.c.b16 %v1549, %v1547
        %1552 = vrot.lane.b32.xlu0 %v1550, 66
        %v1553 = vpop.permute.xlu0 %1552
        %1554 = vrot.lane.b32.xlu0 %v1551, 66
        %v1555 = vpop.permute.xlu0 %1554
        %vm1556 = vcmask 539648
        %v1557 = vsel %vm1556, %v1553, %v1555
        %1559 = vst.msk [vmem:[#allocation2 + $0x88] sm:$0xff] %vm612, %v1557
        %v1560 = vld [vmem:[%s180 + $0x4] sm:$0xf]
        %v1561 = vld [vmem:[%s180 + $0x10] sm:$0xf]
        %v1564 = vunpack.c.l.b16 %v1560
        %v1565 = vunpack.c.l.b16 %v1561
        %v1566 = vpack.c.b16 %v1565, %v1564
        %1567 = vrot.lane.b32.xlu0 %v1566, 102
        %v1568 = vpop.permute.xlu0 %1567
        %1570 = vst.msk [vmem:[#allocation2 + $0x8] sm:$0xff] %vm712, %v1568
        %v1571 = vld [vmem:[%s180 + $0x4] sm:$0xf]
        %v1572 = vld [vmem:[%s180 + $0x10] sm:$0xf]
        %v1575 = vunpack.c.l.b16 %v1571
        %v1576 = vunpack.c.l.b16 %v1572
        %v1577 = vpack.c.b16 %v1576, %v1575
        %1578 = vrot.lane.b32.xlu0 %v1577, 101
        %v1579 = vpop.permute.xlu0 %1578
        %1581 = vst.msk [vmem:[#allocation2 + $0x18] sm:$0xff] %vm712, %v1579
        %v1582 = vld [vmem:[%s180 + $0x4] sm:$0xf]
        %v1583 = vld [vmem:[%s180 + $0x10] sm:$0xf]
        %v1586 = vunpack.c.l.b16 %v1582
        %v1587 = vunpack.c.l.b16 %v1583
        %v1588 = vpack.c.b16 %v1587, %v1586
        %1589 = vrot.lane.b32.xlu0 %v1588, 100
        %v1590 = vpop.permute.xlu0 %1589
        %1592 = vst.msk [vmem:[#allocation2 + $0x28] sm:$0xff] %vm712, %v1590
        %v1593 = vld [vmem:[%s180 + $0x4] sm:$0xff]
        %v1594 = vld [vmem:[%s180 + $0x10] sm:$0xff]
        %v1597 = vunpack.c.l.b16 %v1593
        %v1598 = vunpack.c.h.b16 %v1593
        %v1599 = vunpack.c.l.b16 %v1594
        %v1600 = vunpack.c.h.b16 %v1594
        %v1601 = vpack.c.b16 %v1599, %v1597
        %v1602 = vpack.c.b16 %v1600, %v1598
        %1603 = vrot.lane.b32.xlu0 %v1601, 84
        %v1604 = vpop.permute.xlu0 %1603
        %1605 = vrot.lane.b32.xlu0 %v1602, 84
        %v1606 = vpop.permute.xlu0 %1605
        %vm1607 = vcmask 687104
        %v1608 = vsel %vm1607, %v1604, %v1606
        %1610 = vst.msk [vmem:[#allocation2 + $0x38] sm:$0xff] %vm712, %v1608
        %v1611 = vld [vmem:[%s180 + $0x4] sm:$0xff]
        %v1612 = vld [vmem:[%s180 + $0x10] sm:$0xff]
        %v1615 = vunpack.c.l.b16 %v1611
        %v1616 = vunpack.c.h.b16 %v1611
        %v1617 = vunpack.c.l.b16 %v1612
        %v1618 = vunpack.c.h.b16 %v1612
        %v1619 = vpack.c.b16 %v1617, %v1615
        %v1620 = vpack.c.b16 %v1618, %v1616
        %1621 = vrot.lane.b32.xlu0 %v1619, 83
        %v1622 = vpop.permute.xlu0 %1621
        %1623 = vrot.lane.b32.xlu0 %v1620, 83
        %v1624 = vpop.permute.xlu0 %1623
        %vm1625 = vcmask 678912
        %v1626 = vsel %vm1625, %v1622, %v1624
        %1628 = vst.msk [vmem:[#allocation2 + $0x48] sm:$0xff] %vm712, %v1626
        %v1629 = vld [vmem:[%s180 + $0x4] sm:$0xff]
        %v1630 = vld [vmem:[%s180 + $0x10] sm:$0xff]
        %v1633 = vunpack.c.l.b16 %v1629
        %v1634 = vunpack.c.h.b16 %v1629
        %v1635 = vunpack.c.l.b16 %v1630
        %v1636 = vunpack.c.h.b16 %v1630
        %v1637 = vpack.c.b16 %v1635, %v1633
        %v1638 = vpack.c.b16 %v1636, %v1634
        %1639 = vrot.lane.b32.xlu0 %v1637, 82
        %v1640 = vpop.permute.xlu0 %1639
        %1641 = vrot.lane.b32.xlu0 %v1638, 82
        %v1642 = vpop.permute.xlu0 %1641
        %v1643 = vsel %vm783, %v1640, %v1642
        %1645 = vst.msk [vmem:[#allocation2 + $0x58] sm:$0xff] %vm712, %v1643
        %v1646 = vld [vmem:[%s180 + $0x8] sm:$0xf]
        %v1647 = vld [vmem:[%s180 + $0x14] sm:$0xf]
        %v1650 = vunpack.c.l.b16 %v1646
        %v1651 = vunpack.c.l.b16 %v1647
        %v1652 = vpack.c.b16 %v1651, %v1650
        %1653 = vrot.lane.b32.xlu0 %v1652, 66
        %v1654 = vpop.permute.xlu0 %1653
        %1656 = vst.msk [vmem:[#allocation2 + $0x68] sm:$0xff] %vm712, %v1654
        %v1657 = vld [vmem:[%s180 + $0x8] sm:$0xf]
        %v1658 = vld [vmem:[%s180 + $0x14] sm:$0xf]
        %v1661 = vunpack.c.l.b16 %v1657
        %v1662 = vunpack.c.l.b16 %v1658
        %v1663 = vpack.c.b16 %v1662, %v1661
        %1664 = vrot.lane.b32.xlu0 %v1663, 65
        %v1665 = vpop.permute.xlu0 %1664
        %1667 = vst.msk [vmem:[#allocation2 + $0x78] sm:$0xff] %vm712, %v1665
        %v1668 = vld [vmem:[%s180 + $0x8] sm:$0xf]
        %v1669 = vld [vmem:[%s180 + $0x14] sm:$0xf]
        %v1672 = vunpack.c.l.b16 %v1668
        %v1673 = vunpack.c.l.b16 %v1669
        %v1674 = vpack.c.b16 %v1673, %v1672
        %1675 = vrot.lane.b32.xlu0 %v1674, 64
        %v1676 = vpop.permute.xlu0 %1675
        %1678 = vst.msk [vmem:[#allocation2 + $0x88] sm:$0xff] %vm712, %v1676
        %v1679 = vld [vmem:[%s180 + $0x4] sm:$0xff]
        %v1680 = vld [vmem:[%s180 + $0x10] sm:$0xff]
        %v1683 = vunpack.c.l.b16 %v1679
        %v1684 = vunpack.c.h.b16 %v1679
        %v1685 = vunpack.c.l.b16 %v1680
        %v1686 = vunpack.c.h.b16 %v1680
        %v1687 = vpack.c.b16 %v1685, %v1683
        %v1688 = vpack.c.b16 %v1686, %v1684
        %1689 = vrot.lane.b32.xlu0 %v1687, 100
        %v1690 = vpop.permute.xlu0 %1689
        %1691 = vrot.lane.b32.xlu0 %v1688, 100
        %v1692 = vpop.permute.xlu0 %1691
        %vm1693 = vcmask 818176
        %v1694 = vsel %vm1693, %v1690, %v1692
        %1696 = vst.msk [vmem:[#allocation2 + $0x8] sm:$0xff] %vm826, %v1694
        %v1697 = vld [vmem:[%s180 + $0x4] sm:$0xff]
        %v1698 = vld [vmem:[%s180 + $0x10] sm:$0xff]
        %v1701 = vunpack.c.l.b16 %v1697
        %v1702 = vunpack.c.h.b16 %v1697
        %v1703 = vunpack.c.l.b16 %v1698
        %v1704 = vunpack.c.h.b16 %v1698
        %v1705 = vpack.c.b16 %v1703, %v1701
        %v1706 = vpack.c.b16 %v1704, %v1702
        %1707 = vrot.lane.b32.xlu0 %v1705, 99
        %v1708 = vpop.permute.xlu0 %1707
        %1709 = vrot.lane.b32.xlu0 %v1706, 99
        %v1710 = vpop.permute.xlu0 %1709
        %vm1711 = vcmask 809984
        %v1712 = vsel %vm1711, %v1708, %v1710
        %1714 = vst.msk [vmem:[#allocation2 + $0x18] sm:$0xff] %vm826, %v1712
        %v1715 = vld [vmem:[%s180 + $0x4] sm:$0xff]
        %v1716 = vld [vmem:[%s180 + $0x10] sm:$0xff]
        %v1719 = vunpack.c.l.b16 %v1715
        %v1720 = vunpack.c.h.b16 %v1715
        %v1721 = vunpack.c.l.b16 %v1716
        %v1722 = vunpack.c.h.b16 %v1716
        %v1723 = vpack.c.b16 %v1721, %v1719
        %v1724 = vpack.c.b16 %v1722, %v1720
        %1725 = vrot.lane.b32.xlu0 %v1723, 98
        %v1726 = vpop.permute.xlu0 %1725
        %1727 = vrot.lane.b32.xlu0 %v1724, 98
        %v1728 = vpop.permute.xlu0 %1727
        %v1729 = vsel %vm864, %v1726, %v1728
        %1731 = vst.msk [vmem:[#allocation2 + $0x28] sm:$0xff] %vm826, %v1729
        %v1732 = vld [vmem:[%s180 + $0x8] sm:$0xf]
        %v1733 = vld [vmem:[%s180 + $0x14] sm:$0xf]
        %v1736 = vunpack.c.l.b16 %v1732
        %v1737 = vunpack.c.l.b16 %v1733
        %v1738 = vpack.c.b16 %v1737, %v1736
        %1739 = vrot.lane.b32.xlu0 %v1738, 82
        %v1740 = vpop.permute.xlu0 %1739
        %1742 = vst.msk [vmem:[#allocation2 + $0x38] sm:$0xff] %vm826, %v1740
        %v1743 = vld [vmem:[%s180 + $0x8] sm:$0xf]
        %v1744 = vld [vmem:[%s180 + $0x14] sm:$0xf]
        %v1747 = vunpack.c.l.b16 %v1743
        %v1748 = vunpack.c.l.b16 %v1744
        %v1749 = vpack.c.b16 %v1748, %v1747
        %1750 = vrot.lane.b32.xlu0 %v1749, 81
        %v1751 = vpop.permute.xlu0 %1750
        %1753 = vst.msk [vmem:[#allocation2 + $0x48] sm:$0xff] %vm826, %v1751
        %v1754 = vld [vmem:[%s180 + $0x8] sm:$0xf]
        %v1755 = vld [vmem:[%s180 + $0x14] sm:$0xf]
        %v1758 = vunpack.c.l.b16 %v1754
        %v1759 = vunpack.c.l.b16 %v1755
        %v1760 = vpack.c.b16 %v1759, %v1758
        %1761 = vrot.lane.b32.xlu0 %v1760, 80
        %v1762 = vpop.permute.xlu0 %1761
        %1764 = vst.msk [vmem:[#allocation2 + $0x58] sm:$0xff] %vm826, %v1762
        %v1765 = vld [vmem:[%s180 + $0x8] sm:$0xf]
        %v1766 = vld [vmem:[%s180 + $0x14] sm:$0xf]
        %v1769 = vunpack.c.l.b16 %v1765
        %v1770 = vunpack.c.l.b16 %v1766
        %v1771 = vpack.c.b16 %v1770, %v1769
        %1772 = vrot.lane.b32.xlu0 %v1771, 64
        %v1773 = vpop.permute.xlu0 %1772
        %1775 = vst.msk [vmem:[#allocation2 + $0x68] sm:$0xff] %vm826, %v1773
        %v1776 = vld [vmem:[%s180 + $0x8] sm:$0xf]
        %v1777 = vld [vmem:[%s180 + $0x14] sm:$0xf]
        %v1780 = vunpack.c.l.b16 %v1776
        %v1781 = vunpack.c.l.b16 %v1777
        %v1782 = vpack.c.b16 %v1781, %v1780
        %1783 = vrot.lane.b32.xlu0 %v1782, 63
        %v1784 = vpop.permute.xlu0 %1783
        %1786 = vst.msk [vmem:[#allocation2 + $0x78] sm:$0xff] %vm826, %v1784
        %v1787 = vld [vmem:[%s180 + $0x8] sm:$0xf]
        %v1788 = vld [vmem:[%s180 + $0x14] sm:$0xf]
        %v1791 = vunpack.c.l.b16 %v1787
        %v1792 = vunpack.c.l.b16 %v1788
        %v1793 = vpack.c.b16 %v1792, %v1791
        %1794 = vrot.lane.b32.xlu0 %v1793, 62
        %v1795 = vpop.permute.xlu0 %1794
        %1797 = vst.msk [vmem:[#allocation2 + $0x88] sm:$0xff] %vm826, %v1795
        %v1798 = vld [vmem:[%s180 + $0x8] sm:$0xf]
        %v1799 = vld [vmem:[%s180 + $0x14] sm:$0xf]
        %v1802 = vunpack.c.l.b16 %v1798
        %v1803 = vunpack.c.l.b16 %v1799
        %v1804 = vpack.c.b16 %v1803, %v1802
        %1805 = vrot.lane.b32.xlu0 %v1804, 98
        %v1806 = vpop.permute.xlu0 %1805
        %1808 = vst.msk [vmem:[#allocation2 + $0x8] sm:$0xff] %vm947, %v1806
        %v1809 = vld [vmem:[%s180 + $0x8] sm:$0xf]
        %v1810 = vld [vmem:[%s180 + $0x14] sm:$0xf]
        %v1813 = vunpack.c.l.b16 %v1809
        %v1814 = vunpack.c.l.b16 %v1810
        %v1815 = vpack.c.b16 %v1814, %v1813
        %1816 = vrot.lane.b32.xlu0 %v1815, 97
        %v1817 = vpop.permute.xlu0 %1816
        %1819 = vst.msk [vmem:[#allocation2 + $0x18] sm:$0xff] %vm947, %v1817
        %v1820 = vld [vmem:[%s180 + $0x8] sm:$0xf]
        %v1821 = vld [vmem:[%s180 + $0x14] sm:$0xf]
        %v1824 = vunpack.c.l.b16 %v1820
        %v1825 = vunpack.c.l.b16 %v1821
        %v1826 = vpack.c.b16 %v1825, %v1824
        %1827 = vrot.lane.b32.xlu0 %v1826, 96
        %v1828 = vpop.permute.xlu0 %1827
        %1830 = vst.msk [vmem:[#allocation2 + $0x28] sm:$0xff] %vm947, %v1828
        %v1831 = vld [vmem:[%s180 + $0x8] sm:$0xf]
        %v1832 = vld [vmem:[%s180 + $0x14] sm:$0xf]
        %v1835 = vunpack.c.l.b16 %v1831
        %v1836 = vunpack.c.l.b16 %v1832
        %v1837 = vpack.c.b16 %v1836, %v1835
        %1838 = vrot.lane.b32.xlu0 %v1837, 80
        %v1839 = vpop.permute.xlu0 %1838
        %1841 = vst.msk [vmem:[#allocation2 + $0x38] sm:$0xff] %vm947, %v1839
        %v1842 = vld [vmem:[%s180 + $0x8] sm:$0xf]
        %v1843 = vld [vmem:[%s180 + $0x14] sm:$0xf]
        %v1846 = vunpack.c.l.b16 %v1842
        %v1847 = vunpack.c.l.b16 %v1843
        %v1848 = vpack.c.b16 %v1847, %v1846
        %1849 = vrot.lane.b32.xlu0 %v1848, 79
        %v1850 = vpop.permute.xlu0 %1849
        %1852 = vst.msk [vmem:[#allocation2 + $0x48] sm:$0xff] %vm947, %v1850
        %v1853 = vld [vmem:[%s180 + $0x8] sm:$0xf]
        %v1854 = vld [vmem:[%s180 + $0x14] sm:$0xf]
        %v1857 = vunpack.c.l.b16 %v1853
        %v1858 = vunpack.c.l.b16 %v1854
        %v1859 = vpack.c.b16 %v1858, %v1857
        %1860 = vrot.lane.b32.xlu0 %v1859, 78
        %v1861 = vpop.permute.xlu0 %1860
        %1863 = vst.msk [vmem:[#allocation2 + $0x58] sm:$0xff] %vm947, %v1861
        %v1864 = vld [vmem:[%s180 + $0x8] sm:$0xf]
        %v1865 = vld [vmem:[%s180 + $0x14] sm:$0xf]
        %v1868 = vunpack.c.l.b16 %v1864
        %v1869 = vunpack.c.l.b16 %v1865
        %v1870 = vpack.c.b16 %v1869, %v1868
        %1871 = vrot.lane.b32.xlu0 %v1870, 62
        %v1872 = vpop.permute.xlu0 %1871
        %1874 = vst.msk [vmem:[#allocation2 + $0x68] sm:$0xff] %vm947, %v1872
        %v1875 = vld [vmem:[%s180 + $0x8] sm:$0xf]
        %v1876 = vld [vmem:[%s180 + $0x14] sm:$0xf]
        %v1879 = vunpack.c.l.b16 %v1875
        %v1880 = vunpack.c.l.b16 %v1876
        %v1881 = vpack.c.b16 %v1880, %v1879
        %1882 = vrot.lane.b32.xlu0 %v1881, 61
        %v1883 = vpop.permute.xlu0 %1882
        %1885 = vst.msk [vmem:[#allocation2 + $0x78] sm:$0xff] %vm947, %v1883
        %v1886 = vld [vmem:[%s180 + $0x8] sm:$0xf]
        %v1887 = vld [vmem:[%s180 + $0x14] sm:$0xf]
        %v1890 = vunpack.c.l.b16 %v1886
        %v1891 = vunpack.c.l.b16 %v1887
        %v1892 = vpack.c.b16 %v1891, %v1890
        %1893 = vrot.lane.b32.xlu0 %v1892, 60
        %v1894 = vpop.permute.xlu0 %1893
        %1896 = vst.msk [vmem:[#allocation2 + $0x88] sm:$0xff] %vm947, %v1894
        %v1897 = vld [vmem:[%s1] sm:$0xff]
        %v1898 = vld [vmem:[#allocation2] sm:$0xff]
        %v1899 = vld [vmem:[#allocation2 + $0x8] sm:$0xff]
        %v1900 = vld [vmem:[#allocation2 + $0x10] sm:$0xff]
        %v1901 = vld [vmem:[#allocation2 + $0x18] sm:$0xff]
        %v1902 = vld [vmem:[#allocation2 + $0x20] sm:$0xff]
        %v1903 = vld [vmem:[#allocation2 + $0x28] sm:$0xff]
        %v1904 = vld [vmem:[#allocation2 + $0x30] sm:$0xff]
        %v1905 = vld [vmem:[#allocation2 + $0x38] sm:$0xff]
        %v1906 = vld [vmem:[#allocation2 + $0x40] sm:$0xff]
        %v1907 = vld [vmem:[#allocation2 + $0x48] sm:$0xff]
        %v1908 = vld [vmem:[#allocation2 + $0x50] sm:$0xff]
        %v1909 = vld [vmem:[#allocation2 + $0x58] sm:$0xff]
        %v1910 = vld [vmem:[#allocation2 + $0x60] sm:$0xff]
        %v1911 = vld [vmem:[#allocation2 + $0x68] sm:$0xff]
        %v1912 = vld [vmem:[#allocation2 + $0x70] sm:$0xff]
        %v1913 = vld [vmem:[#allocation2 + $0x78] sm:$0xff]
        %v1914 = vld [vmem:[#allocation2 + $0x80] sm:$0xff]
        %v1915 = vld [vmem:[#allocation2 + $0x88] sm:$0xff]
        %v1916 = vld [vmem:[%s2] sm:$0xff]
        %1918 = vset.pattern.permute.xlu0 0
        %1919 = vperm.xlu0 %1918, %v1916
        %v1920 = vpop.permute.xlu0 %1919
        %v1923 = vunpack.c.l.b16 %v1897
        %v1924 = vunpack.c.h.b16 %v1897
        %v1925 = vpack.c.b16 %v1923, %v1923
        %v1926 = vpack.c.b16 %v1924, %v1924
        %v1929 = vsel %vm212, %v1926, 0
        %1931 = vmatprep.subr.bf16.mxu0 %v1899
        %1932 = vmatpush1.bf16.msra.mxu0 %v1898
        %1933 = vmatprep.subr.bf16.mxu0 %v1901
        %1934 = vmatpush1.bf16.msra.mxu0 %v1900
        %1935 = vmatprep.subr.bf16.mxu0 %v1903
        %1936 = vmatpush1.bf16.msra.mxu0 %v1902
        %1937 = vmatprep.subr.bf16.mxu0 %v1905
        %1938 = vmatpush1.bf16.msra.mxu0 %v1904
        %1939 = vmatprep.subr.bf16.mxu0 %v1907
        %1940 = vmatpush1.bf16.msra.mxu0 %v1906
        %1941 = vmatprep.subr.bf16.mxu0 %v1909
        %1942 = vmatpush1.bf16.msra.mxu0 %v1908
        %1943 = vmatprep.subr.bf16.mxu0 %v1911
        %1944 = vmatpush1.bf16.msra.mxu0 %v1910
        %1945 = vmatprep.subr.bf16.mxu0 %v1913
        %1946 = vmatpush1.bf16.msra.mxu0 %v1912
        %1947 = vmatprep.subr.bf16.mxu0 %v1915
        %1948 = vmatpush1.bf16.msra.mxu0 %v1914
        %1949 = vmatprep.subr.bf16.mxu0 0
        %1950 = vmatpush1.bf16.msra.mxu0 0
        %1951 = vmatprep.subr.bf16.mxu0 0
        %1952 = vmatpush1.bf16.msra.mxu0 0
        %1953 = vmatprep.subr.bf16.mxu0 0
        %1954 = vmatpush1.bf16.msra.mxu0 0
        %1955 = vmatprep.subr.bf16.mxu0 0
        %1956 = vmatpush1.bf16.msra.mxu0 0
        %1957 = vmatprep.subr.bf16.mxu0 0
        %1958 = vmatpush1.bf16.msra.mxu0 0
        %1959 = vmatprep.subr.bf16.mxu0 0
        %1960 = vmatpush1.bf16.msra.mxu0 0
        %1961 = vmatprep.subr.bf16.mxu0 0
        %1962 = vmatpush1.bf16.msra.mxu0 0
        %1963 = vmatprep.mubr.bf16.mxu0 %v1929
        %1964 = vmatmul.mubr.bf16.gmra.mrb[0].mxu0 %v1925
        %v1965 = vpop.f32.mrb[0].mxu0
        %v1966 = vadd.f32 %v1920, %v1965
        %v1967 = vpop.f32.mrb[0].mxu0
        %v1968 = vadd.f32 %v1920, %v1967
        %v1969 = vpop.f32.mrb[0].mxu0
        %v1970 = vpop.f32.mrb[0].mxu0
        %1971 = vdwg.mxu0
        %v1972 = vmax.f32 %v1966, 0.0
        %v1973 = vmax.f32 %v1968, 0.0
        %1974 = vst [vmem:[%s202] sm:$0xff] %v1972
        %1975 = vst [vmem:[%s202 + $0x8] sm:$0xff] %v1973
        %s1976 = sand.u32 %s110, 1
        %s1977 = scalar_lea.sflag [#allocation5], %s1976
        %s1978 = sand.u32 %s110, 1
        %s1979 = smul.addr %s1978, 16
        %s1980 = scalar_lea.vmem [#allocation6], %s1979
        // Predicated region
        $region37: #{tpu_custom_call.1} parent=31 // pred_check
          %p1981 = pneg %p120
        $region38: #{tpu_custom_call.1} parent=31 // pred_check_branch
          %1983 = sbr.rel (%p1981) target = $region40
        $region39: #{tpu_custom_call.1} parent=31 // pred_region
          %s1985 = ssub.s32 256, 256
          %1986 = vsyncadd %s1977, %s1985
          %s1987 = smul.addr %s25, 2
          %s1988 = smul.addr %s24, 2
          %s1989 = sadd.s32 %s1987, %s1988
          %s1990 = smul.addr %s1989, 128
          %s1991 = scalar_lea.hbm %s3, %s1990
          %s1993 = sshll.u32 %s1980, 4
          %s1994 = int_to_ptr.vmem [resolvable:$true] %s1993
          %1996 = dma.vmem_to_hbm [thread:$0]  %s1994, 256, %s1991, %s1977
        $region40: #{tpu_custom_call.1} parent=31 // pred_fallthru
          _
      $region32: #{tpu_custom_call.1} parent=5 // pred_fallthru
        _
      %p1997 = scmp.le.s32.totalorder 2, %s15
      // Predicated region
      $region41: #{tpu_custom_call.1} parent=5 // pred_check
        %p1998 = pneg %p1997
      $region42: #{tpu_custom_call.1} parent=5 // pred_check_branch
        %2000 = sbr.rel (%p1998) target = $region44
      $region43: #{tpu_custom_call.1} parent=5 // pred_region
        %s2001 = ssub.s32 %s15, 2
        // Predicated region
        $region45: #{tpu_custom_call.1} parent=43 // pred_check
          %p2002 = pneg %p126
        $region46: #{tpu_custom_call.1} parent=43 // pred_check_branch
          %2004 = sbr.rel (%p2002) target = $region48
        $region47: #{tpu_custom_call.1} parent=43 // pred_region
          %s2005 = sand.u32 %s111, 1
          %s2006 = scalar_lea.sflag [#allocation5], %s2005
          %s2007 = sand.u32 %s111, 1
          %s2008 = smul.addr %s2007, 16
          %s2009 = scalar_lea.vmem [#allocation6], %s2008
          %2010 = dma.done %s2006, 256
        $region48: #{tpu_custom_call.1} parent=43 // pred_fallthru
          _
      $region44: #{tpu_custom_call.1} parent=5 // pred_fallthru
        _
    $region6: #{tpu_custom_call.1} parent=1 // loop_footer
      %s19 = sadd.s32 1, %s15
    $region7: #{tpu_custom_call.1} parent=1 // loop_footer_branch
      %14 = sbr.rel target = $region3
    $region8: #{tpu_custom_call.1} parent=1 // loop_exit
      _
    %2011 = vsyncpa [#allocation4], 1
    %s2012 = scalar_lea.sflag [#allocation4], 1
    %2013 = vsyncpa %s2012, 1
    %2014 = vsyncpa [#allocation5], 1
    %s2015 = scalar_lea.sflag [#allocation5], 1
    %2016 = vsyncpa %s2015, 1

</llo_original>
